<compile_context>
chip_gen: v7x
topology: tpu7x:2x2x1
jax: 0.10.0
libtpu: 0.0.40
codegen_flags: <defaults>
</compile_context>

<pallas_src>
import functools

import jax
import jax.numpy as jnp
from jax.experimental import pallas as pl
from jax.experimental.pallas import tpu as pltpu


TILE_M = 512       # rows per grid step for the conv0 im2col GEMM
FC_TILE_K = 2048   # reduction tile for the fused fc1/fc2 GEMM


def _round_up(x, m):
    return (x + m - 1) // m * m


# ---------------------------------------------------------------------------
# Kernel 1: M-tiled GEMM   O[i] = relu?(A[i] @ W + bias)        (conv0)
# ---------------------------------------------------------------------------
def _gemm_bias_kernel(a_ref, w_ref, b_ref, o_ref, *, apply_relu):
    acc = jnp.dot(a_ref[...], w_ref[...], preferred_element_type=jnp.float32)
    acc = acc + b_ref[...]
    if apply_relu:
        acc = jnp.maximum(acc, 0.0)
    o_ref[...] = acc.astype(o_ref.dtype)


def gemm_bias(a, w, bias, *, apply_relu, tile_m=TILE_M, out_dtype=jnp.bfloat16):
    """a: (M, K) bf16, w: (K, N) bf16, bias: (N,) f32 -> (M, N) out_dtype."""
    M, K = a.shape
    K2, N = w.shape
    assert K == K2
    MP = _round_up(M, tile_m)
    if MP != M:
        a = jnp.pad(a, ((0, MP - M), (0, 0)))
    out = pl.pallas_call(
        functools.partial(_gemm_bias_kernel, apply_relu=apply_relu),
        out_shape=jax.ShapeDtypeStruct((MP, N), out_dtype),
        grid=(MP // tile_m,),
        in_specs=[
            pl.BlockSpec((tile_m, K), lambda i: (i, 0)),
            pl.BlockSpec((K, N), lambda i: (0, 0)),
            pl.BlockSpec((1, N), lambda i: (0, 0)),
        ],
        out_specs=pl.BlockSpec((tile_m, N), lambda i: (i, 0)),
        compiler_params=pltpu.CompilerParams(dimension_semantics=("parallel",)),
        cost_estimate=pl.CostEstimate(
            flops=2 * MP * N * K, transcendentals=0,
            bytes_accessed=MP * K * 2 + K * N * 2 + MP * N * 2),
    )(a, w, bias.reshape(1, N).astype(jnp.float32))
    return out[:M] if MP != M else out


# ---------------------------------------------------------------------------
# Kernel 2: stride-2 3x3 conv as a stride-1 2x2 "tap" conv on the
# space-to-depth image (flattened spatial dims; junk columns dropped outside).
# ---------------------------------------------------------------------------
def _s2d_conv_kernel(x_ref, w_ref, b_ref, o_ref, *, ws, apply_relu):
    # x_ref: (1, Ls, 4*Cin) flattened, zero-row-padded space-to-depth image (bf16)
    # w_ref: (4, 4*Cin, Cout) taps ordered t = dh*2 + dw (bf16)
    # b_ref: (1, Cout) f32 ;  o_ref: (1, Lo, Cout) with Lo = Ho*Ws
    lo = o_ref.shape[1]
    cout = o_ref.shape[2]
    acc = jnp.zeros((lo, cout), jnp.float32)
    for t, (dh, dw) in enumerate(((0, 0), (0, 1), (1, 0), (1, 1))):
        a = x_ref[0, pl.ds(dh * ws + dw, lo), :]           # static offset slice
        acc = acc + jnp.dot(a, w_ref[t], preferred_element_type=jnp.float32)
    acc = acc + b_ref[...]
    if apply_relu:
        acc = jnp.maximum(acc, 0.0)
    o_ref[0, :, :] = acc.astype(o_ref.dtype)


def s2d_conv(x, w_tap, bias, *, apply_relu):
    """3x3 / stride-2 / pad-1 conv, NHWC in/out, via space-to-depth + 4 tap matmuls.

    x: (B, Hi, Wi, C) bf16 (Hi, Wi even); w_tap: (4, 4*C, Cout) bf16; bias: (Cout,) f32.
    Returns (B, Hi//2, Wi//2, Cout) bf16.
    """
    B, Hi, Wi, C = x.shape
    Cout = w_tap.shape[-1]
    Ho, Wo = Hi // 2, Wi // 2
    Hs, Ws = Ho + 1, Wo + 1
    xp = jnp.pad(x, ((0, 0), (1, 1), (1, 1), (0, 0)))
    # 4 spatial phases stacked on channels -> lane-dense 4*C channels
    phases = [xp[:, ph::2, pw::2, :] for ph in (0, 1) for pw in (0, 1)]
    s = jnp.concatenate(phases, axis=-1)                  # (B, Hs, Ws, 4C)
    s = jnp.pad(s, ((0, 0), (0, 1), (0, 0), (0, 0)))      # one extra zero row
    Ls, Lo = (Hs + 1) * Ws, Ho * Ws
    s = s.reshape(B, Ls, 4 * C)
    out_flat = pl.pallas_call(
        functools.partial(_s2d_conv_kernel, ws=Ws, apply_relu=apply_relu),
        out_shape=jax.ShapeDtypeStruct((B, Lo, Cout), jnp.bfloat16),
        grid=(B,),
        in_specs=[
            pl.BlockSpec((1, Ls, 4 * C), lambda b: (b, 0, 0)),
            pl.BlockSpec((4, 4 * C, Cout), lambda b: (0, 0, 0)),
            pl.BlockSpec((1, Cout), lambda b: (0, 0)),
        ],
        out_specs=pl.BlockSpec((1, Lo, Cout), lambda b: (b, 0, 0)),
        compiler_params=pltpu.CompilerParams(dimension_semantics=("parallel",)),
        cost_estimate=pl.CostEstimate(
            flops=2 * B * Lo * (4 * C) * Cout * 4, transcendentals=0,
            bytes_accessed=B * (Ls * 4 * C * 2 + Lo * Cout * 2) + 16 * C * Cout * 2),
    )(s, w_tap, bias.reshape(1, Cout).astype(jnp.float32))
    # drop the single junk column per row produced by the flattened-row trick
    return out_flat.reshape(B, Ho, Ws, Cout)[:, :, :Wo, :]


# ---------------------------------------------------------------------------
# Kernel 3: K-tiled GEMM with f32 VMEM accumulator (fused fc1 + fc2)
# ---------------------------------------------------------------------------
def _fc_kernel(a_ref, w_ref, b_ref, o_ref, acc_ref):
    @pl.when(pl.program_id(0) == 0)
    def _():
        acc_ref[...] = jnp.zeros_like(acc_ref)

    acc_ref[...] += jnp.dot(a_ref[...], w_ref[...],
                            preferred_element_type=jnp.float32)

    @pl.when(pl.program_id(0) == pl.num_programs(0) - 1)
    def _():
        o_ref[...] = (acc_ref[...] + b_ref[...]).astype(o_ref.dtype)


def fc_fused(a, w, bias, *, tile_k=FC_TILE_K):
    """a: (B, KP) bf16, w: (KP, N) bf16, bias: (1, N) f32; KP % tile_k == 0."""
    Bm, KP = a.shape
    _, N = w.shape
    assert KP % tile_k == 0
    return pl.pallas_call(
        _fc_kernel,
        out_shape=jax.ShapeDtypeStruct((Bm, N), jnp.float32),
        grid=(KP // tile_k,),
        in_specs=[
            pl.BlockSpec((Bm, tile_k), lambda k: (0, k)),
            pl.BlockSpec((tile_k, N), lambda k: (k, 0)),
            pl.BlockSpec((1, N), lambda k: (0, 0)),
        ],
        out_specs=pl.BlockSpec((Bm, N), lambda k: (0, 0)),
        scratch_shapes=[pltpu.VMEM((Bm, N), jnp.float32)],
        compiler_params=pltpu.CompilerParams(dimension_semantics=("arbitrary",)),
        cost_estimate=pl.CostEstimate(
            flops=2 * Bm * N * KP, transcendentals=0,
            bytes_accessed=Bm * KP * 2 + KP * N * 2 + Bm * N * 4),
    )(a, w, bias)


# ---------------------------------------------------------------------------
# Parameters: PyTorch layout -> one-time kernel-friendly preparation
# ---------------------------------------------------------------------------
def init_vae_encoder_params(key, input_shape, latent_dim):
    """PyTorch-layout params (Conv2d: (Cout,Cin,3,3); Linear: (out,in))."""
    H8, W8 = input_shape[-2] // 8, input_shape[-1] // 8
    convs_out_dim = 256 * H8 * W8
    chans = [(3, 32), (32, 64), (64, 128), (128, 256)]
    params = {}
    for i, (cin, cout) in enumerate(chans):
        kw_, kb_ = jax.random.split(jax.random.fold_in(key, i))
        params[f"conv{i}_w"] = 0.05 * jax.random.normal(kw_, (cout, cin, 3, 3), jnp.float32)
        params[f"conv{i}_b"] = 0.05 * jax.random.normal(kb_, (cout,), jnp.float32)
    for j, name in enumerate(("fc1", "fc2")):
        kw_, kb_ = jax.random.split(jax.random.fold_in(key, 100 + j))
        params[f"{name}_w"] = 0.02 * jax.random.normal(
            kw_, (latent_dim, convs_out_dim), jnp.float32)
        params[f"{name}_b"] = 0.02 * jax.random.normal(kb_, (latent_dim,), jnp.float32)
    return params


def _s2d_weight(w):
    """(Cout, Cin, 3, 3) conv weight -> (4, 4*Cin, Cout) space-to-depth tap weights."""
    cout, cin = w.shape[0], w.shape[1]
    wk = jnp.pad(w.transpose(2, 3, 1, 0), ((0, 1), (0, 1), (0, 0), (0, 0)))  # (4,4,Ci,Co)
    wk = wk.reshape(2, 2, 2, 2, cin, cout).transpose(0, 2, 1, 3, 4, 5)       # dh,dw,ph,pw,ci,co
    return wk.reshape(4, 4 * cin, cout)


def _fc_weight_nhwc(w, h8, w8, c=256):
    """(L, c*h8*w8) NCHW-flatten Linear weight -> (h8*w8*c, L) NHWC-flatten columns."""
    latent = w.shape[0]
    return w.reshape(latent, c, h8, w8).transpose(2, 3, 1, 0).reshape(h8 * w8 * c, latent)


def prepare_params(params, input_shape):
    """One-time rearrangement of the PyTorch-layout params for the kernels."""
    H, W = input_shape[-2], input_shape[-1]
    H8, W8 = H // 8, W // 8
    prep = {
        # conv0 as an im2col GEMM: column order (kh, kw, ci)
        "w0": params["conv0_w"].transpose(2, 3, 1, 0).reshape(27, -1).astype(jnp.bfloat16),
        "b0": params["conv0_b"].astype(jnp.float32),
    }
    for i in (1, 2, 3):
        prep[f"w{i}"] = _s2d_weight(params[f"conv{i}_w"]).astype(jnp.bfloat16)
        prep[f"b{i}"] = params[f"conv{i}_b"].astype(jnp.float32)
    # fused fc1/fc2: pre-transpose to (K, 2L), permute columns NCHW->NHWC, pad K
    wfc = jnp.concatenate([_fc_weight_nhwc(params["fc1_w"], H8, W8),
                           _fc_weight_nhwc(params["fc2_w"], H8, W8)], axis=1)
    K = wfc.shape[0]
    KP = _round_up(K, FC_TILE_K)
    if KP != K:
        wfc = jnp.pad(wfc, ((0, KP - K), (0, 0)))
    prep["wfc"] = wfc.astype(jnp.bfloat16)
    prep["bfc"] = jnp.concatenate(
        [params["fc1_b"], params["fc2_b"]]).reshape(1, -1).astype(jnp.float32)
    return prep


# ---------------------------------------------------------------------------
# Forward
# ---------------------------------------------------------------------------
def vae_encoder_forward(prep, x):
    """x: (B, 3, H, W) f32 NCHW -> (mu, log_std), each (B, latent) f32."""
    B, _, H, W = x.shape
    # single layout change at the boundary: NCHW -> NHWC, bf16 activations
    h = jnp.transpose(x, (0, 2, 3, 1)).astype(jnp.bfloat16)
    # conv0 (3->32, stride 1) + ReLU : im2col (K=27) + M-tiled GEMM
    hp = jnp.pad(h, ((0, 0), (1, 1), (1, 1), (0, 0)))
    taps = [hp[:, kh:kh + H, kw:kw + W, :] for kh in range(3) for kw in range(3)]
    patches = jnp.concatenate(taps, axis=-1).reshape(B * H * W, 27)
    h = gemm_bias(patches, prep["w0"], prep["b0"], apply_relu=True).reshape(B, H, W, -1)
    # conv1..3 (stride 2) via space-to-depth tap kernels
    h = s2d_conv(h, prep["w1"], prep["b1"], apply_relu=True)    # (B, H/2, W/2, 64)
    h = s2d_conv(h, prep["w2"], prep["b2"], apply_relu=True)    # (B, H/4, W/4, 128)
    h = s2d_conv(h, prep["w3"], prep["b3"], apply_relu=False)   # (B, H/8, W/8, 256)
    # flatten in NHWC order (fc columns were permuted at prep time so this
    # matches PyTorch's NCHW x.view(B, -1)) and run the fused fc1/fc2 GEMM
    flat = h.reshape(B, -1)
    KP = prep["wfc"].shape[0]
    if KP != flat.shape[1]:
        flat = jnp.pad(flat, ((0, 0), (0, KP - flat.shape[1])))
    out = fc_fused(flat, prep["wfc"], prep["bfc"])
    latent = out.shape[1] // 2
    return out[:, :latent], out[:, latent:]


# ---------------------------------------------------------------------------
# Pure-JAX f32 reference (exactly the PyTorch module) for a sanity check
# ---------------------------------------------------------------------------
def reference_forward(params, x):
    def conv(h, w, b, stride):
        y = jax.lax.conv_general_dilated(
            h, w, window_strides=(stride, stride), padding=((1, 1), (1, 1)),
            dimension_numbers=("NCHW", "OIHW", "NCHW"))
        return y + b.reshape(1, -1, 1, 1)

    h = jax.nn.relu(conv(x, params["conv0_w"], params["conv0_b"], 1))
    h = jax.nn.relu(conv(h, params["conv1_w"], params["conv1_b"], 2))
    h = jax.nn.relu(conv(h, params["conv2_w"], params["conv2_b"], 2))
    h = conv(h, params["conv3_w"], params["conv3_b"], 2)
    flat = h.reshape(h.shape[0], -1)
    mu = flat @ params["fc1_w"].T + params["fc1_b"]
    log_std = flat @ params["fc2_w"].T + params["fc2_b"]
    return mu, log_std


if __name__ == "__main__":
    B, C, H, W = 2, 3, 16, 16            # small test shapes (H, W multiples of 8)
    latent_dim = 32
    key = jax.random.PRNGKey(0)
    k_param, k_x = jax.random.split(key)

    params = init_vae_encoder_params(k_param, (C, H, W), latent_dim)
    prep = prepare_params(params, (C, H, W))
    x = jax.random.normal(k_x, (B, C, H, W), jnp.float32)

    mu, log_std = jax.jit(vae_encoder_forward)(prep, x)
    jax.block_until_ready((mu, log_std))

    assert mu.shape == (B, latent_dim) and log_std.shape == (B, latent_dim)
    assert mu.dtype == jnp.float32 and log_std.dtype == jnp.float32

    # numerical sanity check vs the f32 reference (bf16 MXU operands -> loose tol)
    mu_ref, ls_ref = reference_forward(params, x)
    scale = float(jnp.maximum(jnp.max(jnp.abs(mu_ref)), jnp.max(jnp.abs(ls_ref))))
    err = float(jnp.maximum(jnp.max(jnp.abs(mu - mu_ref)),
                            jnp.max(jnp.abs(log_std - ls_ref))))
    assert err <= 0.1 * scale + 5e-3, f"mismatch: max|err|={err:.4g} scale={scale:.4g}"

    print("KERNEL_OK")
</pallas_src>

<mosaic_0001>
module attributes {stable_mosaic.version = 11 : i64} {
  func.func @_gemm_bias_kernel(%arg0: i32, %arg1: memref<512x27xbf16, #tpu.memory_space<vmem>>, %arg2: memref<27x32xbf16, #tpu.memory_space<vmem>>, %arg3: memref<1x32xf32, #tpu.memory_space<vmem>>, %arg4: memref<512x32xbf16, #tpu.memory_space<vmem>>) attributes {dimension_semantics = [#tpu.dimension_semantics<parallel>], iteration_bounds = array<i64: 1>, scalar_prefetch = 0 : i64, scratch_operands = 0 : i64, tpu.core_type = #tpu.core_type<tc>, window_params = [{transform_indices = @transform_0, window_bounds = array<i64: 512, 27>}, {pipeline_mode = #tpu.pipeline_mode<synchronous>, transform_indices = @transform_1, window_bounds = array<i64: 27, 32>}, {pipeline_mode = #tpu.pipeline_mode<synchronous>, transform_indices = @transform_2, window_bounds = array<i64: 1, 32>}, {transform_indices = @transform_3, window_bounds = array<i64: 512, 32>}]} {
    %c0 = arith.constant 0 : index
    %c0_0 = arith.constant 0 : index
    %0 = vector.load %arg1[%c0, %c0_0] : memref<512x27xbf16, #tpu.memory_space<vmem>>, vector<512x27xbf16>
    %c0_1 = arith.constant 0 : index
    %c0_2 = arith.constant 0 : index
    %1 = vector.load %arg2[%c0_1, %c0_2] : memref<27x32xbf16, #tpu.memory_space<vmem>>, vector<27x32xbf16>
    %cst = arith.constant dense<0.000000e+00> : vector<512x32xf32>
    %2 = tpu.matmul %0, %1, %cst {dimension_numbers = #tpu.dot_dimension_numbers<[1], [0], [0], [1], [0, 0, 1, 1], [], []>} : vector<512x27xbf16>, vector<27x32xbf16>, vector<512x32xf32> -> vector<512x32xf32>
    %c0_3 = arith.constant 0 : index
    %c0_4 = arith.constant 0 : index
    %3 = vector.load %arg3[%c0_3, %c0_4] : memref<1x32xf32, #tpu.memory_space<vmem>>, vector<1x32xf32>
    %4 = vector.broadcast %3 : vector<1x32xf32> to vector<512x32xf32>
    %5 = arith.addf %2, %4 : vector<512x32xf32>
    %cst_5 = arith.constant 0.000000e+00 : f32
    %6 = vector.broadcast %cst_5 : f32 to vector<512x32xf32>
    %7 = arith.maximumf %5, %6 : vector<512x32xf32>
    %8 = arith.truncf %7 : vector<512x32xf32> to vector<512x32xbf16>
    %c0_6 = arith.constant 0 : index
    %c0_7 = arith.constant 0 : index
    %9 = vector.load %arg4[%c0_6, %c0_7] : memref<512x32xbf16, #tpu.memory_space<vmem>>, vector<512x32xbf16>
    tpu.vector_store %arg4[%c0_6, %c0_7], %8 {strides = array<i32>} : memref<512x32xbf16, #tpu.memory_space<vmem>>, vector<512x32xbf16>,
    return
  }
  func.func @transform_0(%arg0: i32) -> (i32, i32) {
    %c0_i32 = arith.constant 0 : i32
    %c0_i32_0 = arith.constant 0 : i32
    return %arg0, %c0_i32 : i32, i32
  }
  func.func @transform_1(%arg0: i32) -> (i32, i32) {
    %c0_i32 = arith.constant 0 : i32
    %c0_i32_0 = arith.constant 0 : i32
    %c0_i32_1 = arith.constant 0 : i32
    return %c0_i32, %c0_i32_0 : i32, i32
  }
  func.func @transform_2(%arg0: i32) -> (i32, i32) {
    %c0_i32 = arith.constant 0 : i32
    %c0_i32_0 = arith.constant 0 : i32
    %c0_i32_1 = arith.constant 0 : i32
    return %c0_i32, %c0_i32_0 : i32, i32
  }
  func.func @transform_3(%arg0: i32) -> (i32, i32) {
    %c0_i32 = arith.constant 0 : i32
    %c0_i32_0 = arith.constant 0 : i32
    return %arg0, %c0_i32 : i32, i32
  }
}

module attributes {stable_mosaic.version = 11 : i64} {
  func.func @_s2d_conv_kernel(%arg0: i32, %arg1: memref<1x90x128xbf16, #tpu.memory_space<vmem>>, %arg2: memref<4x128x64xbf16, #tpu.memory_space<vmem>>, %arg3: memref<1x64xf32, #tpu.memory_space<vmem>>, %arg4: memref<1x72x64xbf16, #tpu.memory_space<vmem>>) attributes {dimension_semantics = [#tpu.dimension_semantics<parallel>], iteration_bounds = array<i64: 2>, scalar_prefetch = 0 : i64, scratch_operands = 0 : i64, tpu.core_type = #tpu.core_type<tc>, window_params = [{transform_indices = @transform_0, window_bounds = array<i64: 1, 90, 128>}, {pipeline_mode = #tpu.pipeline_mode<synchronous>, transform_indices = @transform_1, window_bounds = array<i64: 4, 128, 64>}, {pipeline_mode = #tpu.pipeline_mode<synchronous>, transform_indices = @transform_2, window_bounds = array<i64: 1, 64>}, {transform_indices = @transform_3, window_bounds = array<i64: 1, 72, 64>}]} {
    %cst = arith.constant 0.000000e+00 : f32
    %0 = vector.broadcast %cst : f32 to vector<72x64xf32>
    %c0 = arith.constant 0 : index
    %c0_0 = arith.constant 0 : index
    %c0_1 = arith.constant 0 : index
    %1 = vector.load %arg1[%c0, %c0_0, %c0_1] : memref<1x90x128xbf16, #tpu.memory_space<vmem>>, vector<1x72x128xbf16>
    %2 = vector.shape_cast %1 : vector<1x72x128xbf16> to vector<72x128xbf16>
    %c0_2 = arith.constant 0 : index
    %c0_3 = arith.constant 0 : index
    %c0_4 = arith.constant 0 : index
    %3 = vector.load %arg2[%c0_2, %c0_3, %c0_4] : memref<4x128x64xbf16, #tpu.memory_space<vmem>>, vector<1x128x64xbf16>
    %4 = vector.shape_cast %3 : vector<1x128x64xbf16> to vector<128x64xbf16>
    %cst_5 = arith.constant dense<0.000000e+00> : vector<72x64xf32>
    %5 = tpu.matmul %2, %4, %cst_5 {dimension_numbers = #tpu.dot_dimension_numbers<[1], [0], [0], [1], [0, 0, 1, 1], [], []>} : vector<72x128xbf16>, vector<128x64xbf16>, vector<72x64xf32> -> vector<72x64xf32>
    %6 = arith.addf %0, %5 : vector<72x64xf32>
    %c0_6 = arith.constant 0 : index
    %c1 = arith.constant 1 : index
    %c0_7 = arith.constant 0 : index
    %7 = vector.load %arg1[%c0_6, %c1, %c0_7] : memref<1x90x128xbf16, #tpu.memory_space<vmem>>, vector<1x72x128xbf16>
    %8 = vector.shape_cast %7 : vector<1x72x128xbf16> to vector<72x128xbf16>
    %c1_8 = arith.constant 1 : index
    %c0_9 = arith.constant 0 : index
    %c0_10 = arith.constant 0 : index
    %9 = vector.load %arg2[%c1_8, %c0_9, %c0_10] : memref<4x128x64xbf16, #tpu.memory_space<vmem>>, vector<1x128x64xbf16>
    %10 = vector.shape_cast %9 : vector<1x128x64xbf16> to vector<128x64xbf16>
    %cst_11 = arith.constant dense<0.000000e+00> : vector<72x64xf32>
    %11 = tpu.matmul %8, %10, %cst_11 {dimension_numbers = #tpu.dot_dimension_numbers<[1], [0], [0], [1], [0, 0, 1, 1], [], []>} : vector<72x128xbf16>, vector<128x64xbf16>, vector<72x64xf32> -> vector<72x64xf32>
    %12 = arith.addf %6, %11 : vector<72x64xf32>
    %c0_12 = arith.constant 0 : index
    %c9 = arith.constant 9 : index
    %c0_13 = arith.constant 0 : index
    %13 = vector.load %arg1[%c0_12, %c9, %c0_13] : memref<1x90x128xbf16, #tpu.memory_space<vmem>>, vector<1x72x128xbf16>
    %14 = vector.shape_cast %13 : vector<1x72x128xbf16> to vector<72x128xbf16>
    %c2 = arith.constant 2 : index
    %c0_14 = arith.constant 0 : index
    %c0_15 = arith.constant 0 : index
    %15 = vector.load %arg2[%c2, %c0_14, %c0_15] : memref<4x128x64xbf16, #tpu.memory_space<vmem>>, vector<1x128x64xbf16>
    %16 = vector.shape_cast %15 : vector<1x128x64xbf16> to vector<128x64xbf16>
    %cst_16 = arith.constant dense<0.000000e+00> : vector<72x64xf32>
    %17 = tpu.matmul %14, %16, %cst_16 {dimension_numbers = #tpu.dot_dimension_numbers<[1], [0], [0], [1], [0, 0, 1, 1], [], []>} : vector<72x128xbf16>, vector<128x64xbf16>, vector<72x64xf32> -> vector<72x64xf32>
    %18 = arith.addf %12, %17 : vector<72x64xf32>
    %c0_17 = arith.constant 0 : index
    %c10 = arith.constant 10 : index
    %c0_18 = arith.constant 0 : index
    %19 = vector.load %arg1[%c0_17, %c10, %c0_18] : memref<1x90x128xbf16, #tpu.memory_space<vmem>>, vector<1x72x128xbf16>
    %20 = vector.shape_cast %19 : vector<1x72x128xbf16> to vector<72x128xbf16>
    %c3 = arith.constant 3 : index
    %c0_19 = arith.constant 0 : index
    %c0_20 = arith.constant 0 : index
    %21 = vector.load %arg2[%c3, %c0_19, %c0_20] : memref<4x128x64xbf16, #tpu.memory_space<vmem>>, vector<1x128x64xbf16>
    %22 = vector.shape_cast %21 : vector<1x128x64xbf16> to vector<128x64xbf16>
    %cst_21 = arith.constant dense<0.000000e+00> : vector<72x64xf32>
    %23 = tpu.matmul %20, %22, %cst_21 {dimension_numbers = #tpu.dot_dimension_numbers<[1], [0], [0], [1], [0, 0, 1, 1], [], []>} : vector<72x128xbf16>, vector<128x64xbf16>, vector<72x64xf32> -> vector<72x64xf32>
    %24 = arith.addf %18, %23 : vector<72x64xf32>
    %c0_22 = arith.constant 0 : index
    %c0_23 = arith.constant 0 : index
    %25 = vector.load %arg3[%c0_22, %c0_23] : memref<1x64xf32, #tpu.memory_space<vmem>>, vector<1x64xf32>
    %26 = vector.broadcast %25 : vector<1x64xf32> to vector<72x64xf32>
    %27 = arith.addf %24, %26 : vector<72x64xf32>
    %cst_24 = arith.constant 0.000000e+00 : f32
    %28 = vector.broadcast %cst_24 : f32 to vector<72x64xf32>
    %29 = arith.maximumf %27, %28 : vector<72x64xf32>
    %30 = arith.truncf %29 : vector<72x64xf32> to vector<72x64xbf16>
    %c0_25 = arith.constant 0 : index
    %c0_26 = arith.constant 0 : index
    %c0_27 = arith.constant 0 : index
    %31 = vector.load %arg4[%c0_25, %c0_26, %c0_27] : memref<1x72x64xbf16, #tpu.memory_space<vmem>>, vector<1x72x64xbf16>
    %32 = vector.shape_cast %31 : vector<1x72x64xbf16> to vector<72x64xbf16>
    %33 = vector.shape_cast %30 : vector<72x64xbf16> to vector<1x72x64xbf16>
    tpu.vector_store %arg4[%c0_25, %c0_26, %c0_27], %33 {strides = array<i32>} : memref<1x72x64xbf16, #tpu.memory_space<vmem>>, vector<1x72x64xbf16>,
    return
  }
  func.func @transform_0(%arg0: i32) -> (i32, i32, i32) {
    %c0_i32 = arith.constant 0 : i32
    %c0_i32_0 = arith.constant 0 : i32
    %c0_i32_1 = arith.constant 0 : i32
    return %arg0, %c0_i32, %c0_i32_0 : i32, i32, i32
  }
  func.func @transform_1(%arg0: i32) -> (i32, i32, i32) {
    %c0_i32 = arith.constant 0 : i32
    %c0_i32_0 = arith.constant 0 : i32
    %c0_i32_1 = arith.constant 0 : i32
    %c0_i32_2 = arith.constant 0 : i32
    return %c0_i32, %c0_i32_0, %c0_i32_1 : i32, i32, i32
  }
  func.func @transform_2(%arg0: i32) -> (i32, i32) {
    %c0_i32 = arith.constant 0 : i32
    %c0_i32_0 = arith.constant 0 : i32
    %c0_i32_1 = arith.constant 0 : i32
    return %c0_i32, %c0_i32_0 : i32, i32
  }
  func.func @transform_3(%arg0: i32) -> (i32, i32, i32) {
    %c0_i32 = arith.constant 0 : i32
    %c0_i32_0 = arith.constant 0 : i32
    %c0_i32_1 = arith.constant 0 : i32
    return %arg0, %c0_i32, %c0_i32_0 : i32, i32, i32
  }
}

module attributes {stable_mosaic.version = 11 : i64} {
  func.func @_s2d_conv_kernel(%arg0: i32, %arg1: memref<1x30x256xbf16, #tpu.memory_space<vmem>>, %arg2: memref<4x256x128xbf16, #tpu.memory_space<vmem>>, %arg3: memref<1x128xf32, #tpu.memory_space<vmem>>, %arg4: memref<1x20x128xbf16, #tpu.memory_space<vmem>>) attributes {dimension_semantics = [#tpu.dimension_semantics<parallel>], iteration_bounds = array<i64: 2>, scalar_prefetch = 0 : i64, scratch_operands = 0 : i64, tpu.core_type = #tpu.core_type<tc>, window_params = [{transform_indices = @transform_0, window_bounds = array<i64: 1, 30, 256>}, {pipeline_mode = #tpu.pipeline_mode<synchronous>, transform_indices = @transform_1, window_bounds = array<i64: 4, 256, 128>}, {pipeline_mode = #tpu.pipeline_mode<synchronous>, transform_indices = @transform_2, window_bounds = array<i64: 1, 128>}, {transform_indices = @transform_3, window_bounds = array<i64: 1, 20, 128>}]} {
    %cst = arith.constant 0.000000e+00 : f32
    %0 = vector.broadcast %cst : f32 to vector<20x128xf32>
    %c0 = arith.constant 0 : index
    %c0_0 = arith.constant 0 : index
    %c0_1 = arith.constant 0 : index
    %1 = vector.load %arg1[%c0, %c0_0, %c0_1] : memref<1x30x256xbf16, #tpu.memory_space<vmem>>, vector<1x20x256xbf16>
    %2 = vector.shape_cast %1 : vector<1x20x256xbf16> to vector<20x256xbf16>
    %c0_2 = arith.constant 0 : index
    %c0_3 = arith.constant 0 : index
    %c0_4 = arith.constant 0 : index
    %3 = vector.load %arg2[%c0_2, %c0_3, %c0_4] : memref<4x256x128xbf16, #tpu.memory_space<vmem>>, vector<1x256x128xbf16>
    %4 = vector.shape_cast %3 : vector<1x256x128xbf16> to vector<256x128xbf16>
    %cst_5 = arith.constant dense<0.000000e+00> : vector<20x128xf32>
    %5 = tpu.matmul %2, %4, %cst_5 {dimension_numbers = #tpu.dot_dimension_numbers<[1], [0], [0], [1], [0, 0, 1, 1], [], []>} : vector<20x256xbf16>, vector<256x128xbf16>, vector<20x128xf32> -> vector<20x128xf32>
    %6 = arith.addf %0, %5 : vector<20x128xf32>
    %c0_6 = arith.constant 0 : index
    %c1 = arith.constant 1 : index
    %c0_7 = arith.constant 0 : index
    %7 = vector.load %arg1[%c0_6, %c1, %c0_7] : memref<1x30x256xbf16, #tpu.memory_space<vmem>>, vector<1x20x256xbf16>
    %8 = vector.shape_cast %7 : vector<1x20x256xbf16> to vector<20x256xbf16>
    %c1_8 = arith.constant 1 : index
    %c0_9 = arith.constant 0 : index
    %c0_10 = arith.constant 0 : index
    %9 = vector.load %arg2[%c1_8, %c0_9, %c0_10] : memref<4x256x128xbf16, #tpu.memory_space<vmem>>, vector<1x256x128xbf16>
    %10 = vector.shape_cast %9 : vector<1x256x128xbf16> to vector<256x128xbf16>
    %cst_11 = arith.constant dense<0.000000e+00> : vector<20x128xf32>
    %11 = tpu.matmul %8, %10, %cst_11 {dimension_numbers = #tpu.dot_dimension_numbers<[1], [0], [0], [1], [0, 0, 1, 1], [], []>} : vector<20x256xbf16>, vector<256x128xbf16>, vector<20x128xf32> -> vector<20x128xf32>
    %12 = arith.addf %6, %11 : vector<20x128xf32>
    %c0_12 = arith.constant 0 : index
    %c5 = arith.constant 5 : index
    %c0_13 = arith.constant 0 : index
    %13 = vector.load %arg1[%c0_12, %c5, %c0_13] : memref<1x30x256xbf16, #tpu.memory_space<vmem>>, vector<1x20x256xbf16>
    %14 = vector.shape_cast %13 : vector<1x20x256xbf16> to vector<20x256xbf16>
    %c2 = arith.constant 2 : index
    %c0_14 = arith.constant 0 : index
    %c0_15 = arith.constant 0 : index
    %15 = vector.load %arg2[%c2, %c0_14, %c0_15] : memref<4x256x128xbf16, #tpu.memory_space<vmem>>, vector<1x256x128xbf16>
    %16 = vector.shape_cast %15 : vector<1x256x128xbf16> to vector<256x128xbf16>
    %cst_16 = arith.constant dense<0.000000e+00> : vector<20x128xf32>
    %17 = tpu.matmul %14, %16, %cst_16 {dimension_numbers = #tpu.dot_dimension_numbers<[1], [0], [0], [1], [0, 0, 1, 1], [], []>} : vector<20x256xbf16>, vector<256x128xbf16>, vector<20x128xf32> -> vector<20x128xf32>
    %18 = arith.addf %12, %17 : vector<20x128xf32>
    %c0_17 = arith.constant 0 : index
    %c6 = arith.constant 6 : index
    %c0_18 = arith.constant 0 : index
    %19 = vector.load %arg1[%c0_17, %c6, %c0_18] : memref<1x30x256xbf16, #tpu.memory_space<vmem>>, vector<1x20x256xbf16>
    %20 = vector.shape_cast %19 : vector<1x20x256xbf16> to vector<20x256xbf16>
    %c3 = arith.constant 3 : index
    %c0_19 = arith.constant 0 : index
    %c0_20 = arith.constant 0 : index
    %21 = vector.load %arg2[%c3, %c0_19, %c0_20] : memref<4x256x128xbf16, #tpu.memory_space<vmem>>, vector<1x256x128xbf16>
    %22 = vector.shape_cast %21 : vector<1x256x128xbf16> to vector<256x128xbf16>
    %cst_21 = arith.constant dense<0.000000e+00> : vector<20x128xf32>
    %23 = tpu.matmul %20, %22, %cst_21 {dimension_numbers = #tpu.dot_dimension_numbers<[1], [0], [0], [1], [0, 0, 1, 1], [], []>} : vector<20x256xbf16>, vector<256x128xbf16>, vector<20x128xf32> -> vector<20x128xf32>
    %24 = arith.addf %18, %23 : vector<20x128xf32>
    %c0_22 = arith.constant 0 : index
    %c0_23 = arith.constant 0 : index
    %25 = vector.load %arg3[%c0_22, %c0_23] : memref<1x128xf32, #tpu.memory_space<vmem>>, vector<1x128xf32>
    %26 = vector.broadcast %25 : vector<1x128xf32> to vector<20x128xf32>
    %27 = arith.addf %24, %26 : vector<20x128xf32>
    %cst_24 = arith.constant 0.000000e+00 : f32
    %28 = vector.broadcast %cst_24 : f32 to vector<20x128xf32>
    %29 = arith.maximumf %27, %28 : vector<20x128xf32>
    %30 = arith.truncf %29 : vector<20x128xf32> to vector<20x128xbf16>
    %c0_25 = arith.constant 0 : index
    %c0_26 = arith.constant 0 : index
    %c0_27 = arith.constant 0 : index
    %31 = vector.load %arg4[%c0_25, %c0_26, %c0_27] : memref<1x20x128xbf16, #tpu.memory_space<vmem>>, vector<1x20x128xbf16>
    %32 = vector.shape_cast %31 : vector<1x20x128xbf16> to vector<20x128xbf16>
    %33 = vector.shape_cast %30 : vector<20x128xbf16> to vector<1x20x128xbf16>
    tpu.vector_store %arg4[%c0_25, %c0_26, %c0_27], %33 {strides = array<i32>} : memref<1x20x128xbf16, #tpu.memory_space<vmem>>, vector<1x20x128xbf16>,
    return
  }
  func.func @transform_0(%arg0: i32) -> (i32, i32, i32) {
    %c0_i32 = arith.constant 0 : i32
    %c0_i32_0 = arith.constant 0 : i32
    %c0_i32_1 = arith.constant 0 : i32
    return %arg0, %c0_i32, %c0_i32_0 : i32, i32, i32
  }
  func.func @transform_1(%arg0: i32) -> (i32, i32, i32) {
    %c0_i32 = arith.constant 0 : i32
    %c0_i32_0 = arith.constant 0 : i32
    %c0_i32_1 = arith.constant 0 : i32
    %c0_i32_2 = arith.constant 0 : i32
    return %c0_i32, %c0_i32_0, %c0_i32_1 : i32, i32, i32
  }
  func.func @transform_2(%arg0: i32) -> (i32, i32) {
    %c0_i32 = arith.constant 0 : i32
    %c0_i32_0 = arith.constant 0 : i32
    %c0_i32_1 = arith.constant 0 : i32
    return %c0_i32, %c0_i32_0 : i32, i32
  }
  func.func @transform_3(%arg0: i32) -> (i32, i32, i32) {
    %c0_i32 = arith.constant 0 : i32
    %c0_i32_0 = arith.constant 0 : i32
    %c0_i32_1 = arith.constant 0 : i32
    return %arg0, %c0_i32, %c0_i32_0 : i32, i32, i32
  }
}

module attributes {stable_mosaic.version = 11 : i64} {
  func.func @_s2d_conv_kernel(%arg0: i32, %arg1: memref<1x12x512xbf16, #tpu.memory_space<vmem>>, %arg2: memref<4x512x256xbf16, #tpu.memory_space<vmem>>, %arg3: memref<1x256xf32, #tpu.memory_space<vmem>>, %arg4: memref<1x6x256xbf16, #tpu.memory_space<vmem>>) attributes {dimension_semantics = [#tpu.dimension_semantics<parallel>], iteration_bounds = array<i64: 2>, scalar_prefetch = 0 : i64, scratch_operands = 0 : i64, tpu.core_type = #tpu.core_type<tc>, window_params = [{transform_indices = @transform_0, window_bounds = array<i64: 1, 12, 512>}, {pipeline_mode = #tpu.pipeline_mode<synchronous>, transform_indices = @transform_1, window_bounds = array<i64: 4, 512, 256>}, {pipeline_mode = #tpu.pipeline_mode<synchronous>, transform_indices = @transform_2, window_bounds = array<i64: 1, 256>}, {transform_indices = @transform_3, window_bounds = array<i64: 1, 6, 256>}]} {
    %cst = arith.constant 0.000000e+00 : f32
    %0 = vector.broadcast %cst : f32 to vector<6x256xf32>
    %c0 = arith.constant 0 : index
    %c0_0 = arith.constant 0 : index
    %c0_1 = arith.constant 0 : index
    %1 = vector.load %arg1[%c0, %c0_0, %c0_1] : memref<1x12x512xbf16, #tpu.memory_space<vmem>>, vector<1x6x512xbf16>
    %2 = vector.shape_cast %1 : vector<1x6x512xbf16> to vector<6x512xbf16>
    %c0_2 = arith.constant 0 : index
    %c0_3 = arith.constant 0 : index
    %c0_4 = arith.constant 0 : index
    %3 = vector.load %arg2[%c0_2, %c0_3, %c0_4] : memref<4x512x256xbf16, #tpu.memory_space<vmem>>, vector<1x512x256xbf16>
    %4 = vector.shape_cast %3 : vector<1x512x256xbf16> to vector<512x256xbf16>
    %cst_5 = arith.constant dense<0.000000e+00> : vector<6x256xf32>
    %5 = tpu.matmul %2, %4, %cst_5 {dimension_numbers = #tpu.dot_dimension_numbers<[1], [0], [0], [1], [0, 0, 1, 1], [], []>} : vector<6x512xbf16>, vector<512x256xbf16>, vector<6x256xf32> -> vector<6x256xf32>
    %6 = arith.addf %0, %5 : vector<6x256xf32>
    %c0_6 = arith.constant 0 : index
    %c1 = arith.constant 1 : index
    %c0_7 = arith.constant 0 : index
    %7 = vector.load %arg1[%c0_6, %c1, %c0_7] : memref<1x12x512xbf16, #tpu.memory_space<vmem>>, vector<1x6x512xbf16>
    %8 = vector.shape_cast %7 : vector<1x6x512xbf16> to vector<6x512xbf16>
    %c1_8 = arith.constant 1 : index
    %c0_9 = arith.constant 0 : index
    %c0_10 = arith.constant 0 : index
    %9 = vector.load %arg2[%c1_8, %c0_9, %c0_10] : memref<4x512x256xbf16, #tpu.memory_space<vmem>>, vector<1x512x256xbf16>
    %10 = vector.shape_cast %9 : vector<1x512x256xbf16> to vector<512x256xbf16>
    %cst_11 = arith.constant dense<0.000000e+00> : vector<6x256xf32>
    %11 = tpu.matmul %8, %10, %cst_11 {dimension_numbers = #tpu.dot_dimension_numbers<[1], [0], [0], [1], [0, 0, 1, 1], [], []>} : vector<6x512xbf16>, vector<512x256xbf16>, vector<6x256xf32> -> vector<6x256xf32>
    %12 = arith.addf %6, %11 : vector<6x256xf32>
    %c0_12 = arith.constant 0 : index
    %c3 = arith.constant 3 : index
    %c0_13 = arith.constant 0 : index
    %13 = vector.load %arg1[%c0_12, %c3, %c0_13] : memref<1x12x512xbf16, #tpu.memory_space<vmem>>, vector<1x6x512xbf16>
    %14 = vector.shape_cast %13 : vector<1x6x512xbf16> to vector<6x512xbf16>
    %c2 = arith.constant 2 : index
    %c0_14 = arith.constant 0 : index
    %c0_15 = arith.constant 0 : index
    %15 = vector.load %arg2[%c2, %c0_14, %c0_15] : memref<4x512x256xbf16, #tpu.memory_space<vmem>>, vector<1x512x256xbf16>
    %16 = vector.shape_cast %15 : vector<1x512x256xbf16> to vector<512x256xbf16>
    %cst_16 = arith.constant dense<0.000000e+00> : vector<6x256xf32>
    %17 = tpu.matmul %14, %16, %cst_16 {dimension_numbers = #tpu.dot_dimension_numbers<[1], [0], [0], [1], [0, 0, 1, 1], [], []>} : vector<6x512xbf16>, vector<512x256xbf16>, vector<6x256xf32> -> vector<6x256xf32>
    %18 = arith.addf %12, %17 : vector<6x256xf32>
    %c0_17 = arith.constant 0 : index
    %c4 = arith.constant 4 : index
    %c0_18 = arith.constant 0 : index
    %19 = vector.load %arg1[%c0_17, %c4, %c0_18] : memref<1x12x512xbf16, #tpu.memory_space<vmem>>, vector<1x6x512xbf16>
    %20 = vector.shape_cast %19 : vector<1x6x512xbf16> to vector<6x512xbf16>
    %c3_19 = arith.constant 3 : index
    %c0_20 = arith.constant 0 : index
    %c0_21 = arith.constant 0 : index
    %21 = vector.load %arg2[%c3_19, %c0_20, %c0_21] : memref<4x512x256xbf16, #tpu.memory_space<vmem>>, vector<1x512x256xbf16>
    %22 = vector.shape_cast %21 : vector<1x512x256xbf16> to vector<512x256xbf16>
    %cst_22 = arith.constant dense<0.000000e+00> : vector<6x256xf32>
    %23 = tpu.matmul %20, %22, %cst_22 {dimension_numbers = #tpu.dot_dimension_numbers<[1], [0], [0], [1], [0, 0, 1, 1], [], []>} : vector<6x512xbf16>, vector<512x256xbf16>, vector<6x256xf32> -> vector<6x256xf32>
    %24 = arith.addf %18, %23 : vector<6x256xf32>
    %c0_23 = arith.constant 0 : index
    %c0_24 = arith.constant 0 : index
    %25 = vector.load %arg3[%c0_23, %c0_24] : memref<1x256xf32, #tpu.memory_space<vmem>>, vector<1x256xf32>
    %26 = vector.broadcast %25 : vector<1x256xf32> to vector<6x256xf32>
    %27 = arith.addf %24, %26 : vector<6x256xf32>
    %28 = arith.truncf %27 : vector<6x256xf32> to vector<6x256xbf16>
    %c0_25 = arith.constant 0 : index
    %c0_26 = arith.constant 0 : index
    %c0_27 = arith.constant 0 : index
    %29 = vector.load %arg4[%c0_25, %c0_26, %c0_27] : memref<1x6x256xbf16, #tpu.memory_space<vmem>>, vector<1x6x256xbf16>
    %30 = vector.shape_cast %29 : vector<1x6x256xbf16> to vector<6x256xbf16>
    %31 = vector.shape_cast %28 : vector<6x256xbf16> to vector<1x6x256xbf16>
    tpu.vector_store %arg4[%c0_25, %c0_26, %c0_27], %31 {strides = array<i32>} : memref<1x6x256xbf16, #tpu.memory_space<vmem>>, vector<1x6x256xbf16>,
    return
  }
  func.func @transform_0(%arg0: i32) -> (i32, i32, i32) {
    %c0_i32 = arith.constant 0 : i32
    %c0_i32_0 = arith.constant 0 : i32
    %c0_i32_1 = arith.constant 0 : i32
    return %arg0, %c0_i32, %c0_i32_0 : i32, i32, i32
  }
  func.func @transform_1(%arg0: i32) -> (i32, i32, i32) {
    %c0_i32 = arith.constant 0 : i32
    %c0_i32_0 = arith.constant 0 : i32
    %c0_i32_1 = arith.constant 0 : i32
    %c0_i32_2 = arith.constant 0 : i32
    return %c0_i32, %c0_i32_0, %c0_i32_1 : i32, i32, i32
  }
  func.func @transform_2(%arg0: i32) -> (i32, i32) {
    %c0_i32 = arith.constant 0 : i32
    %c0_i32_0 = arith.constant 0 : i32
    %c0_i32_1 = arith.constant 0 : i32
    return %c0_i32, %c0_i32_0 : i32, i32
  }
  func.func @transform_3(%arg0: i32) -> (i32, i32, i32) {
    %c0_i32 = arith.constant 0 : i32
    %c0_i32_0 = arith.constant 0 : i32
    %c0_i32_1 = arith.constant 0 : i32
    return %arg0, %c0_i32, %c0_i32_0 : i32, i32, i32
  }
}

module attributes {stable_mosaic.version = 11 : i64} {
  func.func @_fc_kernel(%arg0: i32, %arg1: memref<2x2048xbf16, #tpu.memory_space<vmem>>, %arg2: memref<2048x64xbf16, #tpu.memory_space<vmem>>, %arg3: memref<1x64xf32, #tpu.memory_space<vmem>>, %arg4: memref<2x64xf32, #tpu.memory_space<vmem>>, %arg5: memref<2x64xf32, #tpu.memory_space<vmem>>) attributes {dimension_semantics = [#tpu.dimension_semantics<arbitrary>], iteration_bounds = array<i64: 1>, scalar_prefetch = 0 : i64, scratch_operands = 1 : i64, tpu.core_type = #tpu.core_type<tc>, window_params = [{transform_indices = @transform_0, window_bounds = array<i64: 2, 2048>}, {transform_indices = @transform_1, window_bounds = array<i64: 2048, 64>}, {pipeline_mode = #tpu.pipeline_mode<synchronous>, transform_indices = @transform_2, window_bounds = array<i64: 1, 64>}, {pipeline_mode = #tpu.pipeline_mode<synchronous>, transform_indices = @transform_3, window_bounds = array<i64: 2, 64>}]} {
    %c0_i32 = arith.constant 0 : i32
    %0 = arith.cmpi eq, %arg0, %c0_i32 : i32
    %1 = arith.extui %0 : i1 to i32
    %c0_i32_0 = arith.constant 0 : i32
    %2 = arith.cmpi ne, %1, %c0_i32_0 : i32
    scf.if %2 {
      %cst_10 = arith.constant 0.000000e+00 : f32
      %12 = vector.broadcast %cst_10 : f32 to vector<2x64xf32>
      %c0_11 = arith.constant 0 : index
      %c0_12 = arith.constant 0 : index
      %13 = vector.load %arg5[%c0_11, %c0_12] : memref<2x64xf32, #tpu.memory_space<vmem>>, vector<2x64xf32>
      tpu.vector_store %arg5[%c0_11, %c0_12], %12 {strides = array<i32>} : memref<2x64xf32, #tpu.memory_space<vmem>>, vector<2x64xf32>,
    } else {
    }
    %c0 = arith.constant 0 : index
    %c0_1 = arith.constant 0 : index
    %3 = vector.load %arg5[%c0, %c0_1] : memref<2x64xf32, #tpu.memory_space<vmem>>, vector<2x64xf32>
    %c0_2 = arith.constant 0 : index
    %c0_3 = arith.constant 0 : index
    %4 = vector.load %arg1[%c0_2, %c0_3] : memref<2x2048xbf16, #tpu.memory_space<vmem>>, vector<2x2048xbf16>
    %c0_4 = arith.constant 0 : index
    %c0_5 = arith.constant 0 : index
    %5 = vector.load %arg2[%c0_4, %c0_5] : memref<2048x64xbf16, #tpu.memory_space<vmem>>, vector<2048x64xbf16>
    %cst = arith.constant dense<0.000000e+00> : vector<2x64xf32>
    %6 = tpu.matmul %4, %5, %cst {dimension_numbers = #tpu.dot_dimension_numbers<[1], [0], [0], [1], [0, 0, 1, 1], [], []>} : vector<2x2048xbf16>, vector<2048x64xbf16>, vector<2x64xf32> -> vector<2x64xf32>
    %7 = arith.addf %3, %6 : vector<2x64xf32>
    %c0_6 = arith.constant 0 : index
    %c0_7 = arith.constant 0 : index
    %8 = vector.load %arg5[%c0_6, %c0_7] : memref<2x64xf32, #tpu.memory_space<vmem>>, vector<2x64xf32>
    tpu.vector_store %arg5[%c0_6, %c0_7], %7 {strides = array<i32>} : memref<2x64xf32, #tpu.memory_space<vmem>>, vector<2x64xf32>,
    %c0_i32_8 = arith.constant 0 : i32
    %9 = arith.cmpi eq, %arg0, %c0_i32_8 : i32
    %10 = arith.extui %9 : i1 to i32
    %c0_i32_9 = arith.constant 0 : i32
    %11 = arith.cmpi ne, %10, %c0_i32_9 : i32
    scf.if %11 {
      %c0_10 = arith.constant 0 : index
      %c0_11 = arith.constant 0 : index
      %12 = vector.load %arg5[%c0_10, %c0_11] : memref<2x64xf32, #tpu.memory_space<vmem>>, vector<2x64xf32>
      %c0_12 = arith.constant 0 : index
      %c0_13 = arith.constant 0 : index
      %13 = vector.load %arg3[%c0_12, %c0_13] : memref<1x64xf32, #tpu.memory_space<vmem>>, vector<1x64xf32>
      %14 = vector.broadcast %13 : vector<1x64xf32> to vector<2x64xf32>
      %15 = arith.addf %12, %14 : vector<2x64xf32>
      %c0_14 = arith.constant 0 : index
      %c0_15 = arith.constant 0 : index
      %16 = vector.load %arg4[%c0_14, %c0_15] : memref<2x64xf32, #tpu.memory_space<vmem>>, vector<2x64xf32>
      tpu.vector_store %arg4[%c0_14, %c0_15], %15 {strides = array<i32>} : memref<2x64xf32, #tpu.memory_space<vmem>>, vector<2x64xf32>,
    } else {
    }
    return
  }
  func.func @transform_0(%arg0: i32) -> (i32, i32) {
    %c0_i32 = arith.constant 0 : i32
    %c0_i32_0 = arith.constant 0 : i32
    return %c0_i32, %arg0 : i32, i32
  }
  func.func @transform_1(%arg0: i32) -> (i32, i32) {
    %c0_i32 = arith.constant 0 : i32
    %c0_i32_0 = arith.constant 0 : i32
    return %arg0, %c0_i32 : i32, i32
  }
  func.func @transform_2(%arg0: i32) -> (i32, i32) {
    %c0_i32 = arith.constant 0 : i32
    %c0_i32_0 = arith.constant 0 : i32
    %c0_i32_1 = arith.constant 0 : i32
    return %c0_i32, %c0_i32_0 : i32, i32
  }
  func.func @transform_3(%arg0: i32) -> (i32, i32) {
    %c0_i32 = arith.constant 0 : i32
    %c0_i32_0 = arith.constant 0 : i32
    %c0_i32_1 = arith.constant 0 : i32
    return %c0_i32, %c0_i32_0 : i32, i32
  }
}

</mosaic_0001>

<llo_original>
// kernel: vae_encoder_forward.5
$region0: #{vae_encoder_forward.5}
  #allocation0 [shape = 'u32[]', space=smem, size = 0x4, offset = 0x4, fixed_abs, tag = 'smem constant byte address 0x4 - core index']
  #allocation1 [shape = 'u32[144,128]{1,0:T(1,128)}', space=vmem, size = 0x12000, scoped, tag = 'internal scratch']
  %s0 = inlined_call_operand.vmem [shape: bf16[512,27], index: 0, kind: input, shape index: {}]
  %s1 = inlined_call_operand.vmem [shape: bf16[27,32], index: 1, kind: input, shape index: {}]
  %s2 = inlined_call_operand.vmem [shape: f32[1,32], index: 2, kind: input, shape index: {}]
  %s3 = inlined_call_operand.vmem [shape: bf16[512,32], index: 3, kind: output, shape index: {}]
  %s4 = sld [smem:[#allocation0]]
  $region22: #{vae_encoder_forward.5} parent=0
    _
  %s6 = ssub.s32 1, %s4
  %s7 = scalar_select 0, %s6, %s4
  // Predicated region
  $region2: #{vae_encoder_forward.5} parent=0 // pred_check
    _
  $region3: #{vae_encoder_forward.5} parent=0 // pred_check_branch
    %9 = sbr.rel (0) target = $region5
  $region4: #{vae_encoder_forward.5} parent=0 // pred_region
    _
  $region5: #{vae_encoder_forward.5} parent=0 // pred_fallthru
    _
  // Predicated region
  $region6: #{vae_encoder_forward.5} parent=0 // pred_check
    _
  $region7: #{vae_encoder_forward.5} parent=0 // pred_check_branch
    %11 = sbr.rel (0) target = $region9
  $region8: #{vae_encoder_forward.5} parent=0 // pred_region
    _
  $region9: #{vae_encoder_forward.5} parent=0 // pred_fallthru
    _
  // Predicated region
  $region10: #{vae_encoder_forward.5} parent=0 // pred_check
    _
  $region11: #{vae_encoder_forward.5} parent=0 // pred_check_branch
    %13 = sbr.rel (0) target = $region13
  $region12: #{vae_encoder_forward.5} parent=0 // pred_region
    _
  $region13: #{vae_encoder_forward.5} parent=0 // pred_fallthru
    _
  %v15 = vld [vmem:[%s0] sm:$0xf]
  %v16 = vld [vmem:[%s0 + $0x4] sm:$0xf]
  %v17 = vld [vmem:[%s0 + $0x8] sm:$0xf]
  %v18 = vld [vmem:[%s0 + $0xc] sm:$0xf]
  %v19 = vld [vmem:[%s0 + $0x10] sm:$0xf]
  %v20 = vld [vmem:[%s0 + $0x14] sm:$0xf]
  %v21 = vld [vmem:[%s0 + $0x18] sm:$0xf]
  %v22 = vld [vmem:[%s0 + $0x1c] sm:$0xf]
  %v23 = vld [vmem:[%s0 + $0x20] sm:$0xf]
  %v24 = vld [vmem:[%s0 + $0x24] sm:$0xf]
  %v25 = vld [vmem:[%s0 + $0x28] sm:$0xf]
  %v26 = vld [vmem:[%s0 + $0x2c] sm:$0xf]
  %v27 = vld [vmem:[%s0 + $0x30] sm:$0xf]
  %v28 = vld [vmem:[%s0 + $0x34] sm:$0xf]
  %v29 = vld [vmem:[%s0 + $0x38] sm:$0xf]
  %v30 = vld [vmem:[%s0 + $0x3c] sm:$0xf]
  %v31 = vld [vmem:[%s0 + $0x40] sm:$0xf]
  %v32 = vld [vmem:[%s0 + $0x44] sm:$0xf]
  %v33 = vld [vmem:[%s0 + $0x48] sm:$0xf]
  %v34 = vld [vmem:[%s0 + $0x4c] sm:$0xf]
  %v35 = vld [vmem:[%s0 + $0x50] sm:$0xf]
  %v36 = vld [vmem:[%s0 + $0x54] sm:$0xf]
  %v37 = vld [vmem:[%s0 + $0x58] sm:$0xf]
  %v38 = vld [vmem:[%s0 + $0x5c] sm:$0xf]
  %v39 = vld [vmem:[%s0 + $0x60] sm:$0xf]
  %v40 = vld [vmem:[%s0 + $0x64] sm:$0xf]
  %v41 = vld [vmem:[%s0 + $0x68] sm:$0xf]
  %v42 = vld [vmem:[%s0 + $0x6c] sm:$0xf]
  %v43 = vld [vmem:[%s0 + $0x70] sm:$0xf]
  %v44 = vld [vmem:[%s0 + $0x74] sm:$0xf]
  %v45 = vld [vmem:[%s0 + $0x78] sm:$0xf]
  %v46 = vld [vmem:[%s0 + $0x7c] sm:$0xf]
  %v47 = vld [vmem:[%s0 + $0x80] sm:$0xf]
  %v48 = vld [vmem:[%s0 + $0x84] sm:$0xf]
  %v49 = vld [vmem:[%s0 + $0x88] sm:$0xf]
  %v50 = vld [vmem:[%s0 + $0x8c] sm:$0xf]
  %v51 = vld [vmem:[%s0 + $0x90] sm:$0xf]
  %v52 = vld [vmem:[%s0 + $0x94] sm:$0xf]
  %v53 = vld [vmem:[%s0 + $0x98] sm:$0xf]
  %v54 = vld [vmem:[%s0 + $0x9c] sm:$0xf]
  %v55 = vld [vmem:[%s0 + $0xa0] sm:$0xf]
  %v56 = vld [vmem:[%s0 + $0xa4] sm:$0xf]
  %v57 = vld [vmem:[%s0 + $0xa8] sm:$0xf]
  %v58 = vld [vmem:[%s0 + $0xac] sm:$0xf]
  %v59 = vld [vmem:[%s0 + $0xb0] sm:$0xf]
  %v60 = vld [vmem:[%s0 + $0xb4] sm:$0xf]
  %v61 = vld [vmem:[%s0 + $0xb8] sm:$0xf]
  %v62 = vld [vmem:[%s0 + $0xbc] sm:$0xf]
  %v63 = vld [vmem:[%s0 + $0xc0] sm:$0xf]
  %v64 = vld [vmem:[%s0 + $0xc4] sm:$0xf]
  %v65 = vld [vmem:[%s0 + $0xc8] sm:$0xf]
  %v66 = vld [vmem:[%s0 + $0xcc] sm:$0xf]
  %v67 = vld [vmem:[%s0 + $0xd0] sm:$0xf]
  %v68 = vld [vmem:[%s0 + $0xd4] sm:$0xf]
  %v69 = vld [vmem:[%s0 + $0xd8] sm:$0xf]
  %v70 = vld [vmem:[%s0 + $0xdc] sm:$0xf]
  %v71 = vld [vmem:[%s0 + $0xe0] sm:$0xf]
  %v72 = vld [vmem:[%s0 + $0xe4] sm:$0xf]
  %v73 = vld [vmem:[%s0 + $0xe8] sm:$0xf]
  %v74 = vld [vmem:[%s0 + $0xec] sm:$0xf]
  %v75 = vld [vmem:[%s0 + $0xf0] sm:$0xf]
  %v76 = vld [vmem:[%s0 + $0xf4] sm:$0xf]
  %v77 = vld [vmem:[%s0 + $0xf8] sm:$0xf]
  %v78 = vld [vmem:[%s0 + $0xfc] sm:$0xf]
  %v79 = vld [vmem:[%s1] sm:$0xf]
  %v80 = vld [vmem:[%s1 + $0x4] sm:$0xf]
  %v81 = vld [vmem:[%s1 + $0x8] sm:$0xf]
  %v82 = vld [vmem:[%s1 + $0xc] sm:$0x3]
  %v83 = vld [vmem:[%s2] sm:$0x1]
  %v85 = vlaneseq
  %v86 = vshrl.u32 %v85, 7
  %v87 = vsub.s32 0, %v86
  %v88 = vrot.slane %v83, %v87
  %v154 = vunpack.c.l.b16 %v15
  %v155 = vunpack.c.l.b16 %v16
  %v156 = vunpack.c.l.b16 %v17
  %v157 = vunpack.c.l.b16 %v18
  %v158 = vunpack.c.l.b16 %v19
  %v159 = vunpack.c.l.b16 %v20
  %v160 = vunpack.c.l.b16 %v21
  %v161 = vunpack.c.l.b16 %v22
  %v162 = vunpack.c.l.b16 %v23
  %v163 = vunpack.c.l.b16 %v24
  %v164 = vunpack.c.l.b16 %v25
  %v165 = vunpack.c.l.b16 %v26
  %v166 = vunpack.c.l.b16 %v27
  %v167 = vunpack.c.l.b16 %v28
  %v168 = vunpack.c.l.b16 %v29
  %v169 = vunpack.c.l.b16 %v30
  %v170 = vunpack.c.l.b16 %v31
  %v171 = vunpack.c.l.b16 %v32
  %v172 = vunpack.c.l.b16 %v33
  %v173 = vunpack.c.l.b16 %v34
  %v174 = vunpack.c.l.b16 %v35
  %v175 = vunpack.c.l.b16 %v36
  %v176 = vunpack.c.l.b16 %v37
  %v177 = vunpack.c.l.b16 %v38
  %v178 = vunpack.c.l.b16 %v39
  %v179 = vunpack.c.l.b16 %v40
  %v180 = vunpack.c.l.b16 %v41
  %v181 = vunpack.c.l.b16 %v42
  %v182 = vunpack.c.l.b16 %v43
  %v183 = vunpack.c.l.b16 %v44
  %v184 = vunpack.c.l.b16 %v45
  %v185 = vunpack.c.l.b16 %v46
  %v186 = vunpack.c.l.b16 %v47
  %v187 = vunpack.c.l.b16 %v48
  %v188 = vunpack.c.l.b16 %v49
  %v189 = vunpack.c.l.b16 %v50
  %v190 = vunpack.c.l.b16 %v51
  %v191 = vunpack.c.l.b16 %v52
  %v192 = vunpack.c.l.b16 %v53
  %v193 = vunpack.c.l.b16 %v54
  %v194 = vunpack.c.l.b16 %v55
  %v195 = vunpack.c.l.b16 %v56
  %v196 = vunpack.c.l.b16 %v57
  %v197 = vunpack.c.l.b16 %v58
  %v198 = vunpack.c.l.b16 %v59
  %v199 = vunpack.c.l.b16 %v60
  %v200 = vunpack.c.l.b16 %v61
  %v201 = vunpack.c.l.b16 %v62
  %v202 = vunpack.c.l.b16 %v63
  %v203 = vunpack.c.l.b16 %v64
  %v204 = vunpack.c.l.b16 %v65
  %v205 = vunpack.c.l.b16 %v66
  %v206 = vunpack.c.l.b16 %v67
  %v207 = vunpack.c.l.b16 %v68
  %v208 = vunpack.c.l.b16 %v69
  %v209 = vunpack.c.l.b16 %v70
  %v210 = vunpack.c.l.b16 %v71
  %v211 = vunpack.c.l.b16 %v72
  %v212 = vunpack.c.l.b16 %v73
  %v213 = vunpack.c.l.b16 %v74
  %v214 = vunpack.c.l.b16 %v75
  %v215 = vunpack.c.l.b16 %v76
  %v216 = vunpack.c.l.b16 %v77
  %v217 = vunpack.c.l.b16 %v78
  %v218 = vpack.c.b16 %v155, %v154
  %v219 = vpack.c.b16 %v157, %v156
  %v220 = vpack.c.b16 %v159, %v158
  %v221 = vpack.c.b16 %v161, %v160
  %v222 = vpack.c.b16 %v163, %v162
  %v223 = vpack.c.b16 %v165, %v164
  %v224 = vpack.c.b16 %v167, %v166
  %v225 = vpack.c.b16 %v169, %v168
  %v226 = vpack.c.b16 %v171, %v170
  %v227 = vpack.c.b16 %v173, %v172
  %v228 = vpack.c.b16 %v175, %v174
  %v229 = vpack.c.b16 %v177, %v176
  %v230 = vpack.c.b16 %v179, %v178
  %v231 = vpack.c.b16 %v181, %v180
  %v232 = vpack.c.b16 %v183, %v182
  %v233 = vpack.c.b16 %v185, %v184
  %v234 = vpack.c.b16 %v187, %v186
  %v235 = vpack.c.b16 %v189, %v188
  %v236 = vpack.c.b16 %v191, %v190
  %v237 = vpack.c.b16 %v193, %v192
  %v238 = vpack.c.b16 %v195, %v194
  %v239 = vpack.c.b16 %v197, %v196
  %v240 = vpack.c.b16 %v199, %v198
  %v241 = vpack.c.b16 %v201, %v200
  %v242 = vpack.c.b16 %v203, %v202
  %v243 = vpack.c.b16 %v205, %v204
  %v244 = vpack.c.b16 %v207, %v206
  %v245 = vpack.c.b16 %v209, %v208
  %v246 = vpack.c.b16 %v211, %v210
  %v247 = vpack.c.b16 %v213, %v212
  %v248 = vpack.c.b16 %v215, %v214
  %v249 = vpack.c.b16 %v217, %v216
  %v254 = vunpack.c.l.b16 %v79
  %v255 = vunpack.c.l.b16 %v80
  %v256 = vunpack.c.l.b16 %v81
  %v257 = vunpack.c.l.b16 %v82
  %v258 = vpack.c.b16 %v255, %v254
  %v259 = vpack.c.b16 %v257, %v256
  %vm261 = vcmask 220160
  %v263 = vsel %vm261, %v218, 0
  %v266 = vsel %vm261, %v219, 0
  %v269 = vsel %vm261, %v220, 0
  %v272 = vsel %vm261, %v221, 0
  %v275 = vsel %vm261, %v222, 0
  %v278 = vsel %vm261, %v223, 0
  %v281 = vsel %vm261, %v224, 0
  %v284 = vsel %vm261, %v225, 0
  %v287 = vsel %vm261, %v226, 0
  %v290 = vsel %vm261, %v227, 0
  %v293 = vsel %vm261, %v228, 0
  %v296 = vsel %vm261, %v229, 0
  %v299 = vsel %vm261, %v230, 0
  %v302 = vsel %vm261, %v231, 0
  %v305 = vsel %vm261, %v232, 0
  %v308 = vsel %vm261, %v233, 0
  %v311 = vsel %vm261, %v234, 0
  %v314 = vsel %vm261, %v235, 0
  %v317 = vsel %vm261, %v236, 0
  %v320 = vsel %vm261, %v237, 0
  %v323 = vsel %vm261, %v238, 0
  %v326 = vsel %vm261, %v239, 0
  %v329 = vsel %vm261, %v240, 0
  %v332 = vsel %vm261, %v241, 0
  %v335 = vsel %vm261, %v242, 0
  %v338 = vsel %vm261, %v243, 0
  %v341 = vsel %vm261, %v244, 0
  %v344 = vsel %vm261, %v245, 0
  %v347 = vsel %vm261, %v246, 0
  %v350 = vsel %vm261, %v247, 0
  %v353 = vsel %vm261, %v248, 0
  %v356 = vsel %vm261, %v249, 0
  %vm358 = vcmask 1044480
  %vm359 = vcmask 1045504
  %v360 = vsel %vm358, 4294967295, 65535
  %v361 = vsel %vm359, %v360, 0
  %v363 = vand.u32 %v259, %v361
  %365 = vmatprep.subr.bf16.mxu0 0
  %366 = vmatpush1.bf16.msra.mxu0 %v258
  %367 = vmatprep.subr.bf16.mxu0 0
  %368 = vmatpush1.bf16.msra.mxu0 %v363
  %369 = vmatprep.subr.bf16.mxu0 0
  %370 = vmatpush1.bf16.msra.mxu0 0
  %371 = vmatprep.subr.bf16.mxu0 0
  %372 = vmatpush1.bf16.msra.mxu0 0
  %373 = vmatprep.subr.bf16.mxu0 0
  %374 = vmatpush1.bf16.msra.mxu0 0
  %375 = vmatprep.subr.bf16.mxu0 0
  %376 = vmatpush1.bf16.msra.mxu0 0
  %377 = vmatprep.subr.bf16.mxu0 0
  %378 = vmatpush1.bf16.msra.mxu0 0
  %379 = vmatprep.subr.bf16.mxu0 0
  %380 = vmatpush1.bf16.msra.mxu0 0
  %381 = vmatprep.subr.bf16.mxu0 0
  %382 = vmatpush1.bf16.msra.mxu0 0
  %383 = vmatprep.subr.bf16.mxu0 0
  %384 = vmatpush1.bf16.msra.mxu0 0
  %385 = vmatprep.subr.bf16.mxu0 0
  %386 = vmatpush1.bf16.msra.mxu0 0
  %387 = vmatprep.subr.bf16.mxu0 0
  %388 = vmatpush1.bf16.msra.mxu0 0
  %389 = vmatprep.subr.bf16.mxu0 0
  %390 = vmatpush1.bf16.msra.mxu0 0
  %391 = vmatprep.subr.bf16.mxu0 0
  %392 = vmatpush1.bf16.msra.mxu0 0
  %393 = vmatprep.subr.bf16.mxu0 0
  %394 = vmatpush1.bf16.msra.mxu0 0
  %395 = vmatprep.subr.bf16.mxu0 0
  %396 = vmatpush1.bf16.msra.mxu0 0
  %397 = vmatprep.mubr.bf16.mxu0 0
  %398 = vmatmul.mubr.bf16.gmra.mrb[0].mxu0 %v263
  %v399 = vpop.f32.mrb[0].mxu0
  %v400 = vadd.f32 %v88, %v399
  %v401 = vpop.f32.mrb[0].mxu0
  %v402 = vpop.f32.mrb[0].mxu0
  %v403 = vadd.f32 %v88, %v402
  %v404 = vpop.f32.mrb[0].mxu0
  %405 = vmatprep.mubr.bf16.mxu0 0
  %406 = vmatmul.mubr.bf16.gmra.mrb[0].mxu0 %v266
  %v407 = vpop.f32.mrb[0].mxu0
  %v408 = vadd.f32 %v88, %v407
  %v409 = vpop.f32.mrb[0].mxu0
  %v410 = vpop.f32.mrb[0].mxu0
  %v411 = vadd.f32 %v88, %v410
  %v412 = vpop.f32.mrb[0].mxu0
  %413 = vmatprep.mubr.bf16.mxu0 0
  %414 = vmatmul.mubr.bf16.gmra.mrb[0].mxu0 %v269
  %v415 = vpop.f32.mrb[0].mxu0
  %v416 = vadd.f32 %v88, %v415
  %v417 = vpop.f32.mrb[0].mxu0
  %v418 = vpop.f32.mrb[0].mxu0
  %v419 = vadd.f32 %v88, %v418
  %v420 = vpop.f32.mrb[0].mxu0
  %421 = vmatprep.mubr.bf16.mxu0 0
  %422 = vmatmul.mubr.bf16.gmra.mrb[0].mxu0 %v272
  %v423 = vpop.f32.mrb[0].mxu0
  %v424 = vadd.f32 %v88, %v423
  %v425 = vpop.f32.mrb[0].mxu0
  %v426 = vpop.f32.mrb[0].mxu0
  %v427 = vadd.f32 %v88, %v426
  %v428 = vpop.f32.mrb[0].mxu0
  %429 = vmatprep.mubr.bf16.mxu0 0
  %430 = vmatmul.mubr.bf16.gmra.mrb[0].mxu0 %v275
  %v431 = vpop.f32.mrb[0].mxu0
  %v432 = vadd.f32 %v88, %v431
  %v433 = vpop.f32.mrb[0].mxu0
  %v434 = vpop.f32.mrb[0].mxu0
  %v435 = vadd.f32 %v88, %v434
  %v436 = vpop.f32.mrb[0].mxu0
  %437 = vmatprep.mubr.bf16.mxu0 0
  %438 = vmatmul.mubr.bf16.gmra.mrb[0].mxu0 %v278
  %v439 = vpop.f32.mrb[0].mxu0
  %v440 = vadd.f32 %v88, %v439
  %v441 = vpop.f32.mrb[0].mxu0
  %v442 = vpop.f32.mrb[0].mxu0
  %v443 = vadd.f32 %v88, %v442
  %v444 = vpop.f32.mrb[0].mxu0
  %445 = vmatprep.mubr.bf16.mxu0 0
  %446 = vmatmul.mubr.bf16.gmra.mrb[0].mxu0 %v281
  %v447 = vpop.f32.mrb[0].mxu0
  %v448 = vadd.f32 %v88, %v447
  %v449 = vpop.f32.mrb[0].mxu0
  %v450 = vpop.f32.mrb[0].mxu0
  %v451 = vadd.f32 %v88, %v450
  %v452 = vpop.f32.mrb[0].mxu0
  %453 = vmatprep.mubr.bf16.mxu0 0
  %454 = vmatmul.mubr.bf16.gmra.mrb[0].mxu0 %v284
  %v455 = vpop.f32.mrb[0].mxu0
  %v456 = vadd.f32 %v88, %v455
  %v457 = vpop.f32.mrb[0].mxu0
  %v458 = vpop.f32.mrb[0].mxu0
  %v459 = vadd.f32 %v88, %v458
  %v460 = vpop.f32.mrb[0].mxu0
  %461 = vmatprep.mubr.bf16.mxu0 0
  %462 = vmatmul.mubr.bf16.gmra.mrb[0].mxu0 %v287
  %v463 = vpop.f32.mrb[0].mxu0
  %v464 = vadd.f32 %v88, %v463
  %v465 = vpop.f32.mrb[0].mxu0
  %v466 = vpop.f32.mrb[0].mxu0
  %v467 = vadd.f32 %v88, %v466
  %v468 = vpop.f32.mrb[0].mxu0
  %469 = vmatprep.mubr.bf16.mxu0 0
  %470 = vmatmul.mubr.bf16.gmra.mrb[0].mxu0 %v290
  %v471 = vpop.f32.mrb[0].mxu0
  %v472 = vadd.f32 %v88, %v471
  %v473 = vpop.f32.mrb[0].mxu0
  %v474 = vpop.f32.mrb[0].mxu0
  %v475 = vadd.f32 %v88, %v474
  %v476 = vpop.f32.mrb[0].mxu0
  %477 = vmatprep.mubr.bf16.mxu0 0
  %478 = vmatmul.mubr.bf16.gmra.mrb[0].mxu0 %v293
  %v479 = vpop.f32.mrb[0].mxu0
  %v480 = vadd.f32 %v88, %v479
  %v481 = vpop.f32.mrb[0].mxu0
  %v482 = vpop.f32.mrb[0].mxu0
  %v483 = vadd.f32 %v88, %v482
  %v484 = vpop.f32.mrb[0].mxu0
  %485 = vmatprep.mubr.bf16.mxu0 0
  %486 = vmatmul.mubr.bf16.gmra.mrb[0].mxu0 %v296
  %v487 = vpop.f32.mrb[0].mxu0
  %v488 = vadd.f32 %v88, %v487
  %v489 = vpop.f32.mrb[0].mxu0
  %v490 = vpop.f32.mrb[0].mxu0
  %v491 = vadd.f32 %v88, %v490
  %v492 = vpop.f32.mrb[0].mxu0
  %493 = vmatprep.mubr.bf16.mxu0 0
  %494 = vmatmul.mubr.bf16.gmra.mrb[0].mxu0 %v299
  %v495 = vpop.f32.mrb[0].mxu0
  %v496 = vadd.f32 %v88, %v495
  %v497 = vpop.f32.mrb[0].mxu0
  %v498 = vpop.f32.mrb[0].mxu0
  %v499 = vadd.f32 %v88, %v498
  %v500 = vpop.f32.mrb[0].mxu0
  %501 = vmatprep.mubr.bf16.mxu0 0
  %502 = vmatmul.mubr.bf16.gmra.mrb[0].mxu0 %v302
  %v503 = vpop.f32.mrb[0].mxu0
  %v504 = vadd.f32 %v88, %v503
  %v505 = vpop.f32.mrb[0].mxu0
  %v506 = vpop.f32.mrb[0].mxu0
  %v507 = vadd.f32 %v88, %v506
  %v508 = vpop.f32.mrb[0].mxu0
  %509 = vmatprep.mubr.bf16.mxu0 0
  %510 = vmatmul.mubr.bf16.gmra.mrb[0].mxu0 %v305
  %v511 = vpop.f32.mrb[0].mxu0
  %v512 = vadd.f32 %v88, %v511
  %v513 = vpop.f32.mrb[0].mxu0
  %v514 = vpop.f32.mrb[0].mxu0
  %v515 = vadd.f32 %v88, %v514
  %v516 = vpop.f32.mrb[0].mxu0
  %517 = vmatprep.mubr.bf16.mxu0 0
  %518 = vmatmul.mubr.bf16.gmra.mrb[0].mxu0 %v308
  %v519 = vpop.f32.mrb[0].mxu0
  %v520 = vadd.f32 %v88, %v519
  %v521 = vpop.f32.mrb[0].mxu0
  %v522 = vpop.f32.mrb[0].mxu0
  %v523 = vadd.f32 %v88, %v522
  %v524 = vpop.f32.mrb[0].mxu0
  %525 = vmatprep.mubr.bf16.mxu0 0
  %526 = vmatmul.mubr.bf16.gmra.mrb[0].mxu0 %v311
  %v527 = vpop.f32.mrb[0].mxu0
  %v528 = vadd.f32 %v88, %v527
  %v529 = vpop.f32.mrb[0].mxu0
  %v530 = vpop.f32.mrb[0].mxu0
  %v531 = vadd.f32 %v88, %v530
  %v532 = vpop.f32.mrb[0].mxu0
  %533 = vmatprep.mubr.bf16.mxu0 0
  %534 = vmatmul.mubr.bf16.gmra.mrb[0].mxu0 %v314
  %v535 = vpop.f32.mrb[0].mxu0
  %v536 = vadd.f32 %v88, %v535
  %v537 = vpop.f32.mrb[0].mxu0
  %v538 = vpop.f32.mrb[0].mxu0
  %v539 = vadd.f32 %v88, %v538
  %v540 = vpop.f32.mrb[0].mxu0
  %541 = vmatprep.mubr.bf16.mxu0 0
  %542 = vmatmul.mubr.bf16.gmra.mrb[0].mxu0 %v317
  %v543 = vpop.f32.mrb[0].mxu0
  %v544 = vadd.f32 %v88, %v543
  %v545 = vpop.f32.mrb[0].mxu0
  %v546 = vpop.f32.mrb[0].mxu0
  %v547 = vadd.f32 %v88, %v546
  %v548 = vpop.f32.mrb[0].mxu0
  %549 = vmatprep.mubr.bf16.mxu0 0
  %550 = vmatmul.mubr.bf16.gmra.mrb[0].mxu0 %v320
  %v551 = vpop.f32.mrb[0].mxu0
  %v552 = vadd.f32 %v88, %v551
  %v553 = vpop.f32.mrb[0].mxu0
  %v554 = vpop.f32.mrb[0].mxu0
  %v555 = vadd.f32 %v88, %v554
  %v556 = vpop.f32.mrb[0].mxu0
  %557 = vmatprep.mubr.bf16.mxu0 0
  %558 = vmatmul.mubr.bf16.gmra.mrb[0].mxu0 %v323
  %v559 = vpop.f32.mrb[0].mxu0
  %v560 = vadd.f32 %v88, %v559
  %v561 = vpop.f32.mrb[0].mxu0
  %v562 = vpop.f32.mrb[0].mxu0
  %v563 = vadd.f32 %v88, %v562
  %v564 = vpop.f32.mrb[0].mxu0
  %565 = vmatprep.mubr.bf16.mxu0 0
  %566 = vmatmul.mubr.bf16.gmra.mrb[0].mxu0 %v326
  %v567 = vpop.f32.mrb[0].mxu0
  %v568 = vadd.f32 %v88, %v567
  %v569 = vpop.f32.mrb[0].mxu0
  %v570 = vpop.f32.mrb[0].mxu0
  %v571 = vadd.f32 %v88, %v570
  %v572 = vpop.f32.mrb[0].mxu0
  %573 = vmatprep.mubr.bf16.mxu0 0
  %574 = vmatmul.mubr.bf16.gmra.mrb[0].mxu0 %v329
  %v575 = vpop.f32.mrb[0].mxu0
  %v576 = vadd.f32 %v88, %v575
  %v577 = vpop.f32.mrb[0].mxu0
  %v578 = vpop.f32.mrb[0].mxu0
  %v579 = vadd.f32 %v88, %v578
  %v580 = vpop.f32.mrb[0].mxu0
  %581 = vmatprep.mubr.bf16.mxu0 0
  %582 = vmatmul.mubr.bf16.gmra.mrb[0].mxu0 %v332
  %v583 = vpop.f32.mrb[0].mxu0
  %v584 = vadd.f32 %v88, %v583
  %v585 = vpop.f32.mrb[0].mxu0
  %v586 = vpop.f32.mrb[0].mxu0
  %v587 = vadd.f32 %v88, %v586
  %v588 = vpop.f32.mrb[0].mxu0
  %589 = vmatprep.mubr.bf16.mxu0 0
  %590 = vmatmul.mubr.bf16.gmra.mrb[0].mxu0 %v335
  %v591 = vpop.f32.mrb[0].mxu0
  %v592 = vadd.f32 %v88, %v591
  %v593 = vpop.f32.mrb[0].mxu0
  %v594 = vpop.f32.mrb[0].mxu0
  %v595 = vadd.f32 %v88, %v594
  %v596 = vpop.f32.mrb[0].mxu0
  %597 = vmatprep.mubr.bf16.mxu0 0
  %598 = vmatmul.mubr.bf16.gmra.mrb[0].mxu0 %v338
  %v599 = vpop.f32.mrb[0].mxu0
  %v600 = vadd.f32 %v88, %v599
  %v601 = vpop.f32.mrb[0].mxu0
  %v602 = vpop.f32.mrb[0].mxu0
  %v603 = vadd.f32 %v88, %v602
  %v604 = vpop.f32.mrb[0].mxu0
  %605 = vmatprep.mubr.bf16.mxu0 0
  %606 = vmatmul.mubr.bf16.gmra.mrb[0].mxu0 %v341
  %v607 = vpop.f32.mrb[0].mxu0
  %v608 = vadd.f32 %v88, %v607
  %v609 = vpop.f32.mrb[0].mxu0
  %v610 = vpop.f32.mrb[0].mxu0
  %v611 = vadd.f32 %v88, %v610
  %v612 = vpop.f32.mrb[0].mxu0
  %613 = vmatprep.mubr.bf16.mxu0 0
  %614 = vmatmul.mubr.bf16.gmra.mrb[0].mxu0 %v344
  %v615 = vpop.f32.mrb[0].mxu0
  %v616 = vadd.f32 %v88, %v615
  %v617 = vpop.f32.mrb[0].mxu0
  %v618 = vpop.f32.mrb[0].mxu0
  %v619 = vadd.f32 %v88, %v618
  %v620 = vpop.f32.mrb[0].mxu0
  %621 = vmatprep.mubr.bf16.mxu0 0
  %622 = vmatmul.mubr.bf16.gmra.mrb[0].mxu0 %v347
  %v623 = vpop.f32.mrb[0].mxu0
  %v624 = vadd.f32 %v88, %v623
  %v625 = vpop.f32.mrb[0].mxu0
  %v626 = vpop.f32.mrb[0].mxu0
  %v627 = vadd.f32 %v88, %v626
  %v628 = vpop.f32.mrb[0].mxu0
  %629 = vmatprep.mubr.bf16.mxu0 0
  %630 = vmatmul.mubr.bf16.gmra.mrb[0].mxu0 %v350
  %v631 = vpop.f32.mrb[0].mxu0
  %v632 = vadd.f32 %v88, %v631
  %v633 = vpop.f32.mrb[0].mxu0
  %v634 = vpop.f32.mrb[0].mxu0
  %v635 = vadd.f32 %v88, %v634
  %v636 = vpop.f32.mrb[0].mxu0
  %637 = vmatprep.mubr.bf16.mxu0 0
  %638 = vmatmul.mubr.bf16.gmra.mrb[0].mxu0 %v353
  %v639 = vpop.f32.mrb[0].mxu0
  %v640 = vadd.f32 %v88, %v639
  %v641 = vpop.f32.mrb[0].mxu0
  %v642 = vpop.f32.mrb[0].mxu0
  %v643 = vadd.f32 %v88, %v642
  %v644 = vpop.f32.mrb[0].mxu0
  %645 = vmatprep.mubr.bf16.mxu0 0
  %646 = vmatmul.mubr.bf16.gmra.mrb[0].mxu0 %v356
  %v647 = vpop.f32.mrb[0].mxu0
  %v648 = vadd.f32 %v88, %v647
  %v649 = vpop.f32.mrb[0].mxu0
  %v650 = vpop.f32.mrb[0].mxu0
  %v651 = vadd.f32 %v88, %v650
  %v652 = vpop.f32.mrb[0].mxu0
  %653 = vdwg.mxu0
  %v654 = vmax.f32 %v400, 0.0
  %v655 = vmax.f32 %v403, 0.0
  %v656 = vmax.f32 %v408, 0.0
  %v657 = vmax.f32 %v411, 0.0
  %v658 = vmax.f32 %v416, 0.0
  %v659 = vmax.f32 %v419, 0.0
  %v660 = vmax.f32 %v424, 0.0
  %v661 = vmax.f32 %v427, 0.0
  %v662 = vmax.f32 %v432, 0.0
  %v663 = vmax.f32 %v435, 0.0
  %v664 = vmax.f32 %v440, 0.0
  %v665 = vmax.f32 %v443, 0.0
  %v666 = vmax.f32 %v448, 0.0
  %v667 = vmax.f32 %v451, 0.0
  %v668 = vmax.f32 %v456, 0.0
  %v669 = vmax.f32 %v459, 0.0
  %v670 = vmax.f32 %v464, 0.0
  %v671 = vmax.f32 %v467, 0.0
  %v672 = vmax.f32 %v472, 0.0
  %v673 = vmax.f32 %v475, 0.0
  %v674 = vmax.f32 %v480, 0.0
  %v675 = vmax.f32 %v483, 0.0
  %v676 = vmax.f32 %v488, 0.0
  %v677 = vmax.f32 %v491, 0.0
  %v678 = vmax.f32 %v496, 0.0
  %v679 = vmax.f32 %v499, 0.0
  %v680 = vmax.f32 %v504, 0.0
  %v681 = vmax.f32 %v507, 0.0
  %v682 = vmax.f32 %v512, 0.0
  %v683 = vmax.f32 %v515, 0.0
  %v684 = vmax.f32 %v520, 0.0
  %v685 = vmax.f32 %v523, 0.0
  %v686 = vmax.f32 %v528, 0.0
  %v687 = vmax.f32 %v531, 0.0
  %v688 = vmax.f32 %v536, 0.0
  %v689 = vmax.f32 %v539, 0.0
  %v690 = vmax.f32 %v544, 0.0
  %v691 = vmax.f32 %v547, 0.0
  %v692 = vmax.f32 %v552, 0.0
  %v693 = vmax.f32 %v555, 0.0
  %v694 = vmax.f32 %v560, 0.0
  %v695 = vmax.f32 %v563, 0.0
  %v696 = vmax.f32 %v568, 0.0
  %v697 = vmax.f32 %v571, 0.0
  %v698 = vmax.f32 %v576, 0.0
  %v699 = vmax.f32 %v579, 0.0
  %v700 = vmax.f32 %v584, 0.0
  %v701 = vmax.f32 %v587, 0.0
  %v702 = vmax.f32 %v592, 0.0
  %v703 = vmax.f32 %v595, 0.0
  %v704 = vmax.f32 %v600, 0.0
  %v705 = vmax.f32 %v603, 0.0
  %v706 = vmax.f32 %v608, 0.0
  %v707 = vmax.f32 %v611, 0.0
  %v708 = vmax.f32 %v616, 0.0
  %v709 = vmax.f32 %v619, 0.0
  %v710 = vmax.f32 %v624, 0.0
  %v711 = vmax.f32 %v627, 0.0
  %v712 = vmax.f32 %v632, 0.0
  %v713 = vmax.f32 %v635, 0.0
  %v714 = vmax.f32 %v640, 0.0
  %v715 = vmax.f32 %v643, 0.0
  %v716 = vmax.f32 %v648, 0.0
  %v717 = vmax.f32 %v651, 0.0
  %v718 = vpack.c.bf16 %v655, %v654
  %v719 = vpack.c.bf16 %v657, %v656
  %v720 = vpack.c.bf16 %v659, %v658
  %v721 = vpack.c.bf16 %v661, %v660
  %v722 = vpack.c.bf16 %v663, %v662
  %v723 = vpack.c.bf16 %v665, %v664
  %v724 = vpack.c.bf16 %v667, %v666
  %v725 = vpack.c.bf16 %v669, %v668
  %v726 = vpack.c.bf16 %v671, %v670
  %v727 = vpack.c.bf16 %v673, %v672
  %v728 = vpack.c.bf16 %v675, %v674
  %v729 = vpack.c.bf16 %v677, %v676
  %v730 = vpack.c.bf16 %v679, %v678
  %v731 = vpack.c.bf16 %v681, %v680
  %v732 = vpack.c.bf16 %v683, %v682
  %v733 = vpack.c.bf16 %v685, %v684
  %v734 = vpack.c.bf16 %v687, %v686
  %v735 = vpack.c.bf16 %v689, %v688
  %v736 = vpack.c.bf16 %v691, %v690
  %v737 = vpack.c.bf16 %v693, %v692
  %v738 = vpack.c.bf16 %v695, %v694
  %v739 = vpack.c.bf16 %v697, %v696
  %v740 = vpack.c.bf16 %v699, %v698
  %v741 = vpack.c.bf16 %v701, %v700
  %v742 = vpack.c.bf16 %v703, %v702
  %v743 = vpack.c.bf16 %v705, %v704
  %v744 = vpack.c.bf16 %v707, %v706
  %v745 = vpack.c.bf16 %v709, %v708
  %v746 = vpack.c.bf16 %v711, %v710
  %v747 = vpack.c.bf16 %v713, %v712
  %v748 = vpack.c.bf16 %v715, %v714
  %v749 = vpack.c.bf16 %v717, %v716
  %v782 = vunpack.c.l.b16 %v718
  %v783 = vunpack.c.h.b16 %v718
  %v784 = vunpack.c.l.b16 %v719
  %v785 = vunpack.c.h.b16 %v719
  %v786 = vunpack.c.l.b16 %v720
  %v787 = vunpack.c.h.b16 %v720
  %v788 = vunpack.c.l.b16 %v721
  %v789 = vunpack.c.h.b16 %v721
  %v790 = vunpack.c.l.b16 %v722
  %v791 = vunpack.c.h.b16 %v722
  %v792 = vunpack.c.l.b16 %v723
  %v793 = vunpack.c.h.b16 %v723
  %v794 = vunpack.c.l.b16 %v724
  %v795 = vunpack.c.h.b16 %v724
  %v796 = vunpack.c.l.b16 %v725
  %v797 = vunpack.c.h.b16 %v725
  %v798 = vunpack.c.l.b16 %v726
  %v799 = vunpack.c.h.b16 %v726
  %v800 = vunpack.c.l.b16 %v727
  %v801 = vunpack.c.h.b16 %v727
  %v802 = vunpack.c.l.b16 %v728
  %v803 = vunpack.c.h.b16 %v728
  %v804 = vunpack.c.l.b16 %v729
  %v805 = vunpack.c.h.b16 %v729
  %v806 = vunpack.c.l.b16 %v730
  %v807 = vunpack.c.h.b16 %v730
  %v808 = vunpack.c.l.b16 %v731
  %v809 = vunpack.c.h.b16 %v731
  %v810 = vunpack.c.l.b16 %v732
  %v811 = vunpack.c.h.b16 %v732
  %v812 = vunpack.c.l.b16 %v733
  %v813 = vunpack.c.h.b16 %v733
  %v814 = vunpack.c.l.b16 %v734
  %v815 = vunpack.c.h.b16 %v734
  %v816 = vunpack.c.l.b16 %v735
  %v817 = vunpack.c.h.b16 %v735
  %v818 = vunpack.c.l.b16 %v736
  %v819 = vunpack.c.h.b16 %v736
  %v820 = vunpack.c.l.b16 %v737
  %v821 = vunpack.c.h.b16 %v737
  %v822 = vunpack.c.l.b16 %v738
  %v823 = vunpack.c.h.b16 %v738
  %v824 = vunpack.c.l.b16 %v739
  %v825 = vunpack.c.h.b16 %v739
  %v826 = vunpack.c.l.b16 %v740
  %v827 = vunpack.c.h.b16 %v740
  %v828 = vunpack.c.l.b16 %v741
  %v829 = vunpack.c.h.b16 %v741
  %v830 = vunpack.c.l.b16 %v742
  %v831 = vunpack.c.h.b16 %v742
  %v832 = vunpack.c.l.b16 %v743
  %v833 = vunpack.c.h.b16 %v743
  %v834 = vunpack.c.l.b16 %v744
  %v835 = vunpack.c.h.b16 %v744
  %v836 = vunpack.c.l.b16 %v745
  %v837 = vunpack.c.h.b16 %v745
  %v838 = vunpack.c.l.b16 %v746
  %v839 = vunpack.c.h.b16 %v746
  %v840 = vunpack.c.l.b16 %v747
  %v841 = vunpack.c.h.b16 %v747
  %v842 = vunpack.c.l.b16 %v748
  %v843 = vunpack.c.h.b16 %v748
  %v844 = vunpack.c.l.b16 %v749
  %v845 = vunpack.c.h.b16 %v749
  %v846 = vpack.c.b16 %v782, %v782
  %v847 = vpack.c.b16 %v783, %v783
  %v848 = vpack.c.b16 %v784, %v784
  %v849 = vpack.c.b16 %v785, %v785
  %v850 = vpack.c.b16 %v786, %v786
  %v851 = vpack.c.b16 %v787, %v787
  %v852 = vpack.c.b16 %v788, %v788
  %v853 = vpack.c.b16 %v789, %v789
  %v854 = vpack.c.b16 %v790, %v790
  %v855 = vpack.c.b16 %v791, %v791
  %v856 = vpack.c.b16 %v792, %v792
  %v857 = vpack.c.b16 %v793, %v793
  %v858 = vpack.c.b16 %v794, %v794
  %v859 = vpack.c.b16 %v795, %v795
  %v860 = vpack.c.b16 %v796, %v796
  %v861 = vpack.c.b16 %v797, %v797
  %v862 = vpack.c.b16 %v798, %v798
  %v863 = vpack.c.b16 %v799, %v799
  %v864 = vpack.c.b16 %v800, %v800
  %v865 = vpack.c.b16 %v801, %v801
  %v866 = vpack.c.b16 %v802, %v802
  %v867 = vpack.c.b16 %v803, %v803
  %v868 = vpack.c.b16 %v804, %v804
  %v869 = vpack.c.b16 %v805, %v805
  %v870 = vpack.c.b16 %v806, %v806
  %v871 = vpack.c.b16 %v807, %v807
  %v872 = vpack.c.b16 %v808, %v808
  %v873 = vpack.c.b16 %v809, %v809
  %v874 = vpack.c.b16 %v810, %v810
  %v875 = vpack.c.b16 %v811, %v811
  %v876 = vpack.c.b16 %v812, %v812
  %v877 = vpack.c.b16 %v813, %v813
  %v878 = vpack.c.b16 %v814, %v814
  %v879 = vpack.c.b16 %v815, %v815
  %v880 = vpack.c.b16 %v816, %v816
  %v881 = vpack.c.b16 %v817, %v817
  %v882 = vpack.c.b16 %v818, %v818
  %v883 = vpack.c.b16 %v819, %v819
  %v884 = vpack.c.b16 %v820, %v820
  %v885 = vpack.c.b16 %v821, %v821
  %v886 = vpack.c.b16 %v822, %v822
  %v887 = vpack.c.b16 %v823, %v823
  %v888 = vpack.c.b16 %v824, %v824
  %v889 = vpack.c.b16 %v825, %v825
  %v890 = vpack.c.b16 %v826, %v826
  %v891 = vpack.c.b16 %v827, %v827
  %v892 = vpack.c.b16 %v828, %v828
  %v893 = vpack.c.b16 %v829, %v829
  %v894 = vpack.c.b16 %v830, %v830
  %v895 = vpack.c.b16 %v831, %v831
  %v896 = vpack.c.b16 %v832, %v832
  %v897 = vpack.c.b16 %v833, %v833
  %v898 = vpack.c.b16 %v834, %v834
  %v899 = vpack.c.b16 %v835, %v835
  %v900 = vpack.c.b16 %v836, %v836
  %v901 = vpack.c.b16 %v837, %v837
  %v902 = vpack.c.b16 %v838, %v838
  %v903 = vpack.c.b16 %v839, %v839
  %v904 = vpack.c.b16 %v840, %v840
  %v905 = vpack.c.b16 %v841, %v841
  %v906 = vpack.c.b16 %v842, %v842
  %v907 = vpack.c.b16 %v843, %v843
  %v908 = vpack.c.b16 %v844, %v844
  %v909 = vpack.c.b16 %v845, %v845
  %vm974 = vcmask 257024
  %975 = vst.msk [vmem:[%s3] sm:$0xf] %vm974, %v846
  %976 = vst.msk [vmem:[%s3 + $0x4] sm:$0xf] %vm974, %v847
  %977 = vst.msk [vmem:[%s3 + $0x8] sm:$0xf] %vm974, %v848
  %978 = vst.msk [vmem:[%s3 + $0xc] sm:$0xf] %vm974, %v849
  %979 = vst.msk [vmem:[%s3 + $0x10] sm:$0xf] %vm974, %v850
  %980 = vst.msk [vmem:[%s3 + $0x14] sm:$0xf] %vm974, %v851
  %981 = vst.msk [vmem:[%s3 + $0x18] sm:$0xf] %vm974, %v852
  %982 = vst.msk [vmem:[%s3 + $0x1c] sm:$0xf] %vm974, %v853
  %983 = vst.msk [vmem:[%s3 + $0x20] sm:$0xf] %vm974, %v854
  %984 = vst.msk [vmem:[%s3 + $0x24] sm:$0xf] %vm974, %v855
  %985 = vst.msk [vmem:[%s3 + $0x28] sm:$0xf] %vm974, %v856
  %986 = vst.msk [vmem:[%s3 + $0x2c] sm:$0xf] %vm974, %v857
  %987 = vst.msk [vmem:[%s3 + $0x30] sm:$0xf] %vm974, %v858
  %988 = vst.msk [vmem:[%s3 + $0x34] sm:$0xf] %vm974, %v859
  %989 = vst.msk [vmem:[%s3 + $0x38] sm:$0xf] %vm974, %v860
  %990 = vst.msk [vmem:[%s3 + $0x3c] sm:$0xf] %vm974, %v861
  %991 = vst.msk [vmem:[%s3 + $0x40] sm:$0xf] %vm974, %v862
  %992 = vst.msk [vmem:[%s3 + $0x44] sm:$0xf] %vm974, %v863
  %993 = vst.msk [vmem:[%s3 + $0x48] sm:$0xf] %vm974, %v864
  %994 = vst.msk [vmem:[%s3 + $0x4c] sm:$0xf] %vm974, %v865
  %995 = vst.msk [vmem:[%s3 + $0x50] sm:$0xf] %vm974, %v866
  %996 = vst.msk [vmem:[%s3 + $0x54] sm:$0xf] %vm974, %v867
  %997 = vst.msk [vmem:[%s3 + $0x58] sm:$0xf] %vm974, %v868
  %998 = vst.msk [vmem:[%s3 + $0x5c] sm:$0xf] %vm974, %v869
  %999 = vst.msk [vmem:[%s3 + $0x60] sm:$0xf] %vm974, %v870
  %1000 = vst.msk [vmem:[%s3 + $0x64] sm:$0xf] %vm974, %v871
  %1001 = vst.msk [vmem:[%s3 + $0x68] sm:$0xf] %vm974, %v872
  %1002 = vst.msk [vmem:[%s3 + $0x6c] sm:$0xf] %vm974, %v873
  %1003 = vst.msk [vmem:[%s3 + $0x70] sm:$0xf] %vm974, %v874
  %1004 = vst.msk [vmem:[%s3 + $0x74] sm:$0xf] %vm974, %v875
  %1005 = vst.msk [vmem:[%s3 + $0x78] sm:$0xf] %vm974, %v876
  %1006 = vst.msk [vmem:[%s3 + $0x7c] sm:$0xf] %vm974, %v877
  %1007 = vst.msk [vmem:[%s3 + $0x80] sm:$0xf] %vm974, %v878
  %1008 = vst.msk [vmem:[%s3 + $0x84] sm:$0xf] %vm974, %v879
  %1009 = vst.msk [vmem:[%s3 + $0x88] sm:$0xf] %vm974, %v880
  %1010 = vst.msk [vmem:[%s3 + $0x8c] sm:$0xf] %vm974, %v881
  %1011 = vst.msk [vmem:[%s3 + $0x90] sm:$0xf] %vm974, %v882
  %1012 = vst.msk [vmem:[%s3 + $0x94] sm:$0xf] %vm974, %v883
  %1013 = vst.msk [vmem:[%s3 + $0x98] sm:$0xf] %vm974, %v884
  %1014 = vst.msk [vmem:[%s3 + $0x9c] sm:$0xf] %vm974, %v885
  %1015 = vst.msk [vmem:[%s3 + $0xa0] sm:$0xf] %vm974, %v886
  %1016 = vst.msk [vmem:[%s3 + $0xa4] sm:$0xf] %vm974, %v887
  %1017 = vst.msk [vmem:[%s3 + $0xa8] sm:$0xf] %vm974, %v888
  %1018 = vst.msk [vmem:[%s3 + $0xac] sm:$0xf] %vm974, %v889
  %1019 = vst.msk [vmem:[%s3 + $0xb0] sm:$0xf] %vm974, %v890
  %1020 = vst.msk [vmem:[%s3 + $0xb4] sm:$0xf] %vm974, %v891
  %1021 = vst.msk [vmem:[%s3 + $0xb8] sm:$0xf] %vm974, %v892
  %1022 = vst.msk [vmem:[%s3 + $0xbc] sm:$0xf] %vm974, %v893
  %1023 = vst.msk [vmem:[%s3 + $0xc0] sm:$0xf] %vm974, %v894
  %1024 = vst.msk [vmem:[%s3 + $0xc4] sm:$0xf] %vm974, %v895
  %1025 = vst.msk [vmem:[%s3 + $0xc8] sm:$0xf] %vm974, %v896
  %1026 = vst.msk [vmem:[%s3 + $0xcc] sm:$0xf] %vm974, %v897
  %1027 = vst.msk [vmem:[%s3 + $0xd0] sm:$0xf] %vm974, %v898
  %1028 = vst.msk [vmem:[%s3 + $0xd4] sm:$0xf] %vm974, %v899
  %1029 = vst.msk [vmem:[%s3 + $0xd8] sm:$0xf] %vm974, %v900
  %1030 = vst.msk [vmem:[%s3 + $0xdc] sm:$0xf] %vm974, %v901
  %1031 = vst.msk [vmem:[%s3 + $0xe0] sm:$0xf] %vm974, %v902
  %1032 = vst.msk [vmem:[%s3 + $0xe4] sm:$0xf] %vm974, %v903
  %1033 = vst.msk [vmem:[%s3 + $0xe8] sm:$0xf] %vm974, %v904
  %1034 = vst.msk [vmem:[%s3 + $0xec] sm:$0xf] %vm974, %v905
  %1035 = vst.msk [vmem:[%s3 + $0xf0] sm:$0xf] %vm974, %v906
  %1036 = vst.msk [vmem:[%s3 + $0xf4] sm:$0xf] %vm974, %v907
  %1037 = vst.msk [vmem:[%s3 + $0xf8] sm:$0xf] %vm974, %v908
  %1038 = vst.msk [vmem:[%s3 + $0xfc] sm:$0xf] %vm974, %v909
  // Predicated region
  $region14: #{vae_encoder_forward.5} parent=0 // pred_check
    _
  $region15: #{vae_encoder_forward.5} parent=0 // pred_check_branch
    %1040 = sbr.rel (0) target = $region17
  $region16: #{vae_encoder_forward.5} parent=0 // pred_region
    _
  $region17: #{vae_encoder_forward.5} parent=0 // pred_fallthru
    _
  // Predicated region
  $region18: #{vae_encoder_forward.5} parent=0 // pred_check
    _
  $region19: #{vae_encoder_forward.5} parent=0 // pred_check_branch
    %1042 = sbr.rel (0) target = $region21
  $region20: #{vae_encoder_forward.5} parent=0 // pred_region
    _
  $region21: #{vae_encoder_forward.5} parent=0 // pred_fallthru
    _

// kernel: vae_encoder_forward.6
$region0: #{vae_encoder_forward.6}
  #allocation0 [shape = 'u32[]', space=smem, size = 0x4, offset = 0x4, fixed_abs, tag = 'smem constant byte address 0x4 - core index']
  #allocation1 [shape = 'u32[144,128]{1,0:T(1,128)}', space=vmem, size = 0x12000, scoped, tag = 'internal scratch']
  %s0 = inlined_call_operand.vmem [shape: bf16[2,90,128], index: 0, kind: input, shape index: {}]
  %s1 = inlined_call_operand.vmem [shape: bf16[4,128,64], index: 1, kind: input, shape index: {}]
  %s2 = inlined_call_operand.vmem [shape: f32[1,64], index: 2, kind: input, shape index: {}]
  %s3 = inlined_call_operand.vmem [shape: bf16[2,72,64], index: 3, kind: output, shape index: {}]
  %s4 = sld [smem:[#allocation0]]
  $region45: #{vae_encoder_forward.6} parent=0
    _
  %s6 = ssub.s32 1, %s4
  %s7 = scalar_select 0, %s6, %s4
  loop: start=0, step=1, limit=4
  $region2: #{vae_encoder_forward.6} parent=0 // loop_pre_header
    _
  $region3: #{vae_encoder_forward.6} parent=0 // loop_header
    %s9 = sphi 0, %s13
    %p10 = scmp.ge.s32.totalorder %s9, 4
    %s19 = sphi 0, %s21
    %s22 = sphi 0, %s19
    %s23 = sphi 0, %s22
    %s39 = sphi 0, %s23
    %s43 = sphi 0, %s43
    %s45 = sphi 0, %s43
    %s46 = sphi 0, %s45
    %s60 = sphi 0, %s46
    %s64 = sphi 0, %s64
    %s66 = sphi 0, %s64
    %s67 = sphi 0, %s66
    %s81 = sphi 0, %s67
    %s87 = sphi 0, %s89
    %s90 = sphi 0, %s87
    %s91 = sphi 0, %s90
    %s107 = sphi 0, %s91
  $region4: #{vae_encoder_forward.6} parent=0 // loop_header_branch
    %12 = sbr.rel (%p10) target = $region8
  $region5: #{vae_encoder_forward.6} parent=0 // loop_body
    %s14 = ssub.s32 %s9, 1
    %s15 = ssub.s32 %s9, 2
    %s16 = sadd.s32 %s9, 1
    %s17 = ssub.s32 %s9, %s16
    %p18 = scmp.eq.s32.totalorder %s17, 0
    %s20 = sadd.s32 %s19, 1
    %s21 = scalar_select %p18, %s19, %s20
    %p24 = pneg %p18
    %p25 = scmp.eq.s32.totalorder %s9, 1
    %p26 = por %p24, %p25
    %p27 = scmp.ne.s32.totalorder %s19, %s22
    %p28 = scmp.eq.s32.totalorder %s9, 0
    %p29 = por %p27, %p28
    %p30 = scmp.ne.s32.totalorder %s19, %s22
    %p31 = scmp.eq.s32.totalorder %s14, 1
    %p32 = por %p30, %p31
    %p33 = scmp.ne.s32.totalorder %s22, %s23
    %p34 = scmp.eq.s32.totalorder %s14, 0
    %p35 = por %p33, %p34
    %p36 = scmp.ne.s32.totalorder %s22, %s23
    %p37 = scmp.eq.s32.totalorder %s15, 1
    %p38 = por %p36, %p37
    %p40 = scmp.ne.s32.totalorder %s23, %s39
    %p41 = scmp.eq.s32.totalorder %s15, 0
    %p42 = por %p40, %p41
    %s44 = sadd.s32 %s43, 1
    %p47 = scmp.eq.s32.totalorder %s9, 1
    %p48 = scmp.ne.s32.totalorder %s43, %s45
    %p49 = scmp.eq.s32.totalorder %s9, 0
    %p50 = por %p48, %p49
    %p51 = scmp.ne.s32.totalorder %s43, %s45
    %p52 = scmp.eq.s32.totalorder %s14, 1
    %p53 = por %p51, %p52
    %p54 = scmp.ne.s32.totalorder %s45, %s46
    %p55 = scmp.eq.s32.totalorder %s14, 0
    %p56 = por %p54, %p55
    %p57 = scmp.ne.s32.totalorder %s45, %s46
    %p58 = scmp.eq.s32.totalorder %s15, 1
    %p59 = por %p57, %p58
    %p61 = scmp.ne.s32.totalorder %s46, %s60
    %p62 = scmp.eq.s32.totalorder %s15, 0
    %p63 = por %p61, %p62
    %s65 = sadd.s32 %s64, 1
    %p68 = scmp.eq.s32.totalorder %s9, 1
    %p69 = scmp.ne.s32.totalorder %s64, %s66
    %p70 = scmp.eq.s32.totalorder %s9, 0
    %p71 = por %p69, %p70
    %p72 = scmp.ne.s32.totalorder %s64, %s66
    %p73 = scmp.eq.s32.totalorder %s14, 1
    %p74 = por %p72, %p73
    %p75 = scmp.ne.s32.totalorder %s66, %s67
    %p76 = scmp.eq.s32.totalorder %s14, 0
    %p77 = por %p75, %p76
    %p78 = scmp.ne.s32.totalorder %s66, %s67
    %p79 = scmp.eq.s32.totalorder %s15, 1
    %p80 = por %p78, %p79
    %p82 = scmp.ne.s32.totalorder %s67, %s81
    %p83 = scmp.eq.s32.totalorder %s15, 0
    %p84 = por %p82, %p83
    %s85 = ssub.s32 %s9, %s16
    %p86 = scmp.eq.s32.totalorder %s85, 0
    %s88 = sadd.s32 %s87, 1
    %s89 = scalar_select %p86, %s87, %s88
    %p92 = pneg %p86
    %p93 = scmp.eq.s32.totalorder %s9, 1
    %p94 = por %p92, %p93
    %p95 = scmp.ne.s32.totalorder %s87, %s90
    %p96 = scmp.eq.s32.totalorder %s9, 0
    %p97 = por %p95, %p96
    %p98 = scmp.ne.s32.totalorder %s87, %s90
    %p99 = scmp.eq.s32.totalorder %s14, 1
    %p100 = por %p98, %p99
    %p101 = scmp.ne.s32.totalorder %s90, %s91
    %p102 = scmp.eq.s32.totalorder %s14, 0
    %p103 = por %p101, %p102
    %p104 = scmp.ne.s32.totalorder %s90, %s91
    %p105 = scmp.eq.s32.totalorder %s15, 1
    %p106 = por %p104, %p105
    %p108 = scmp.ne.s32.totalorder %s91, %s107
    %p109 = scmp.eq.s32.totalorder %s15, 0
    %p110 = por %p108, %p109
    %p111 = scmp.le.s32.totalorder 1, %s9
    %p112 = scmp.lt.s32.totalorder %s9, 3
    %p113 = pnand %p111, %p112
    %p114 = pneg %p113
    // Predicated region
    $region9: #{vae_encoder_forward.6} parent=5 // pred_check
      _
    $region10: #{vae_encoder_forward.6} parent=5 // pred_check_branch
      %116 = sbr.rel (%p113) target = $region12
    $region11: #{vae_encoder_forward.6} parent=5 // pred_region
      %s117 = ssub.s32 %s9, 1
      // Predicated region
      $region13: #{vae_encoder_forward.6} parent=11 // pred_check
        %p118 = pneg %p56
      $region14: #{vae_encoder_forward.6} parent=11 // pred_check_branch
        %120 = sbr.rel (%p118) target = $region16
      $region15: #{vae_encoder_forward.6} parent=11 // pred_region
        _
      $region16: #{vae_encoder_forward.6} parent=11 // pred_fallthru
        _
      // Predicated region
      $region17: #{vae_encoder_forward.6} parent=11 // pred_check
        %p121 = pneg %p77
      $region18: #{vae_encoder_forward.6} parent=11 // pred_check_branch
        %123 = sbr.rel (%p121) target = $region20
      $region19: #{vae_encoder_forward.6} parent=11 // pred_region
        _
      $region20: #{vae_encoder_forward.6} parent=11 // pred_fallthru
        _
    $region12: #{vae_encoder_forward.6} parent=5 // pred_fallthru
      _
    %p124 = scmp.lt.s32.totalorder %s9, 2
    // Predicated region
    $region21: #{vae_encoder_forward.6} parent=5 // pred_check
      %p125 = pneg %p124
    $region22: #{vae_encoder_forward.6} parent=5 // pred_check_branch
      %127 = sbr.rel (%p125) target = $region24
    $region23: #{vae_encoder_forward.6} parent=5 // pred_region
      // Predicated region
      $region25: #{vae_encoder_forward.6} parent=23 // pred_check
        %p128 = pneg %p29
      $region26: #{vae_encoder_forward.6} parent=23 // pred_check_branch
        %130 = sbr.rel (%p128) target = $region28
      $region27: #{vae_encoder_forward.6} parent=23 // pred_region
        %p131 = scmp.lt.s32.totalorder %s9, 1
        %s132 = scalar_select %p131, %s9, 1
        %s133 = smul.addr %s132, 12
        %s134 = smul.addr %s133, 4
        %s135 = scalar_lea.vmem %s0, %s134
      $region28: #{vae_encoder_forward.6} parent=23 // pred_fallthru
        _
    $region24: #{vae_encoder_forward.6} parent=5 // pred_fallthru
      _
    %p136 = scmp.le.s32.totalorder 1, %s9
    %p137 = scmp.lt.s32.totalorder %s9, 3
    %p138 = pnand %p136, %p137
    %p139 = pneg %p138
    // Predicated region
    $region29: #{vae_encoder_forward.6} parent=5 // pred_check
      _
    $region30: #{vae_encoder_forward.6} parent=5 // pred_check_branch
      %141 = sbr.rel (%p138) target = $region32
    $region31: #{vae_encoder_forward.6} parent=5 // pred_region
      %s142 = ssub.s32 %s9, 1
      %p143 = scmp.lt.s32.totalorder %s14, 1
      %s144 = scalar_select %p143, %s14, 1
      %s145 = smul.addr %s144, 12
      %s146 = smul.addr %s145, 4
      %s147 = scalar_lea.vmem %s0, %s146
      %p148 = pneg %p35
      %p149 = pneg %p32
      %p150 = pneg %p56
      %p151 = pneg %p53
      %p152 = pneg %p77
      %p153 = pneg %p74
      %p154 = pneg %p103
      %p155 = pneg %p100
      %p156 = scmp.lt.s32.totalorder %s14, 1
      %s157 = scalar_select %p156, %s14, 1
      %s158 = smul.addr %s157, 9
      %s159 = smul.addr %s158, 4
      %s160 = scalar_lea.vmem %s3, %s159
      %p161 = scmp.lt.s32.totalorder %s14, 1
      %s162 = scalar_select %p161, %s14, 1
      %s163 = smul.addr %s162, 12
      %s164 = smul.addr %s163, 4
      %s165 = scalar_lea.vmem %s0, %s164
      %p166 = scmp.lt.s32.totalorder %s14, 1
      %s167 = scalar_select %p166, %s14, 1
      %s168 = smul.addr %s167, 9
      %s169 = smul.addr %s168, 4
      %s170 = scalar_lea.vmem %s3, %s169
      %v172 = vld [vmem:[%s165] sm:$0xf]
      %v173 = vld [vmem:[%s165 + $0x4] sm:$0xf]
      %v174 = vld [vmem:[%s165 + $0x8] sm:$0xf]
      %v175 = vld [vmem:[%s165 + $0xc] sm:$0xf]
      %v176 = vld [vmem:[%s165 + $0x10] sm:$0xf]
      %v177 = vld [vmem:[%s165 + $0x14] sm:$0xf]
      %v178 = vld [vmem:[%s165 + $0x18] sm:$0xf]
      %v179 = vld [vmem:[%s165 + $0x1c] sm:$0xf]
      %v180 = vld [vmem:[%s165 + $0x20] sm:$0xf]
      %v181 = vld [vmem:[%s1] sm:$0xf]
      %v182 = vld [vmem:[%s1 + $0x4] sm:$0xf]
      %v183 = vld [vmem:[%s1 + $0x8] sm:$0xf]
      %v184 = vld [vmem:[%s1 + $0xc] sm:$0xf]
      %v185 = vld [vmem:[%s1 + $0x10] sm:$0xf]
      %v186 = vld [vmem:[%s1 + $0x14] sm:$0xf]
      %v187 = vld [vmem:[%s1 + $0x18] sm:$0xf]
      %v188 = vld [vmem:[%s1 + $0x1c] sm:$0xf]
      %v189 = vld [vmem:[%s1 + $0x20] sm:$0xf]
      %v190 = vld [vmem:[%s1 + $0x24] sm:$0xf]
      %v191 = vld [vmem:[%s1 + $0x28] sm:$0xf]
      %v192 = vld [vmem:[%s1 + $0x2c] sm:$0xf]
      %v193 = vld [vmem:[%s1 + $0x30] sm:$0xf]
      %v194 = vld [vmem:[%s1 + $0x34] sm:$0xf]
      %v195 = vld [vmem:[%s1 + $0x38] sm:$0xf]
      %v196 = vld [vmem:[%s1 + $0x3c] sm:$0xf]
      %v197 = vld [vmem:[%s165 + $0x24] sm:$0x1]
      %s198 = scalar_lea.vmem %s1, 64
      %v199 = vld [vmem:[%s198] sm:$0xf]
      %v200 = vld [vmem:[%s198 + $0x4] sm:$0xf]
      %v201 = vld [vmem:[%s198 + $0x8] sm:$0xf]
      %v202 = vld [vmem:[%s198 + $0xc] sm:$0xf]
      %v203 = vld [vmem:[%s198 + $0x10] sm:$0xf]
      %v204 = vld [vmem:[%s198 + $0x14] sm:$0xf]
      %v205 = vld [vmem:[%s198 + $0x18] sm:$0xf]
      %v206 = vld [vmem:[%s198 + $0x1c] sm:$0xf]
      %v207 = vld [vmem:[%s198 + $0x20] sm:$0xf]
      %v208 = vld [vmem:[%s198 + $0x24] sm:$0xf]
      %v209 = vld [vmem:[%s198 + $0x28] sm:$0xf]
      %v210 = vld [vmem:[%s198 + $0x2c] sm:$0xf]
      %v211 = vld [vmem:[%s198 + $0x30] sm:$0xf]
      %v212 = vld [vmem:[%s198 + $0x34] sm:$0xf]
      %v213 = vld [vmem:[%s198 + $0x38] sm:$0xf]
      %v214 = vld [vmem:[%s198 + $0x3c] sm:$0xf]
      %v225 = vunpack.c.l.b16 %v172
      %v226 = vunpack.c.l.b16 %v173
      %v227 = vunpack.c.l.b16 %v174
      %v228 = vunpack.c.l.b16 %v175
      %v229 = vunpack.c.l.b16 %v176
      %v230 = vunpack.c.l.b16 %v177
      %v231 = vunpack.c.l.b16 %v178
      %v232 = vunpack.c.l.b16 %v179
      %v233 = vunpack.c.l.b16 %v180
      %v234 = vunpack.c.l.b16 %v197
      %v235 = vpack.c.b16 %v226, %v225
      %v236 = vpack.c.b16 %v228, %v227
      %v237 = vpack.c.b16 %v230, %v229
      %v238 = vpack.c.b16 %v232, %v231
      %v239 = vpack.c.b16 %v234, %v233
      %vm240 = vsmask.f32 7424
      %v242 = vshrl.u32 %v235, 16
      %v244 = vshll.u32 %v235, 16
      %v246 = vrot.slane %v244, 1
      %v247 = vor.u32 %v242, %v246
      %v249 = vshll.u32 %v236, 16
      %v251 = vrot.slane %v249, 1
      %v252 = vsel %vm240, %v247, %v251
      %v253 = vshrl.u32 %v236, 16
      %v255 = vor.u32 %v253, %v251
      %v257 = vshll.u32 %v237, 16
      %v259 = vrot.slane %v257, 1
      %v260 = vsel %vm240, %v255, %v259
      %v261 = vshrl.u32 %v237, 16
      %v263 = vor.u32 %v261, %v259
      %v265 = vshll.u32 %v238, 16
      %v267 = vrot.slane %v265, 1
      %v268 = vsel %vm240, %v263, %v267
      %v269 = vshrl.u32 %v238, 16
      %v271 = vor.u32 %v269, %v267
      %v273 = vshll.u32 %v239, 16
      %v275 = vrot.slane %v273, 1
      %v276 = vsel %vm240, %v271, %v275
      %v277 = vshrl.u32 %v239, 16
      %v279 = vor.u32 %v277, %v275
      %v301 = vunpack.c.l.b16 %v199
      %v302 = vunpack.c.l.b16 %v200
      %v303 = vunpack.c.l.b16 %v201
      %v304 = vunpack.c.l.b16 %v202
      %v305 = vunpack.c.l.b16 %v203
      %v306 = vunpack.c.l.b16 %v204
      %v307 = vunpack.c.l.b16 %v205
      %v308 = vunpack.c.l.b16 %v206
      %v309 = vunpack.c.l.b16 %v207
      %v310 = vunpack.c.l.b16 %v208
      %v311 = vunpack.c.l.b16 %v209
      %v312 = vunpack.c.l.b16 %v210
      %v313 = vunpack.c.l.b16 %v211
      %v314 = vunpack.c.l.b16 %v212
      %v315 = vunpack.c.l.b16 %v213
      %v316 = vunpack.c.l.b16 %v214
      %v317 = vpack.c.b16 %v302, %v301
      %v318 = vpack.c.b16 %v304, %v303
      %v319 = vpack.c.b16 %v306, %v305
      %v320 = vpack.c.b16 %v308, %v307
      %v321 = vpack.c.b16 %v310, %v309
      %v322 = vpack.c.b16 %v312, %v311
      %v323 = vpack.c.b16 %v314, %v313
      %v324 = vpack.c.b16 %v316, %v315
      %333 = vmatprep.subr.bf16.mxu0 0
      %334 = vmatpush1.bf16.msra.mxu0 %v317
      %335 = vmatprep.subr.bf16.mxu0 0
      %336 = vmatpush1.bf16.msra.mxu0 %v318
      %337 = vmatprep.subr.bf16.mxu0 0
      %338 = vmatpush1.bf16.msra.mxu0 %v319
      %339 = vmatprep.subr.bf16.mxu0 0
      %340 = vmatpush1.bf16.msra.mxu0 %v320
      %341 = vmatprep.subr.bf16.mxu0 0
      %342 = vmatpush1.bf16.msra.mxu0 %v321
      %343 = vmatprep.subr.bf16.mxu0 0
      %344 = vmatpush1.bf16.msra.mxu0 %v322
      %345 = vmatprep.subr.bf16.mxu0 0
      %346 = vmatpush1.bf16.msra.mxu0 %v323
      %347 = vmatprep.subr.bf16.mxu0 0
      %348 = vmatpush1.bf16.msra.mxu0 %v324
      %349 = vmatprep.subr.bf16.mxu0 0
      %350 = vmatpush1.bf16.msra.mxu0 0
      %351 = vmatprep.subr.bf16.mxu0 0
      %352 = vmatpush1.bf16.msra.mxu0 0
      %353 = vmatprep.subr.bf16.mxu0 0
      %354 = vmatpush1.bf16.msra.mxu0 0
      %355 = vmatprep.subr.bf16.mxu0 0
      %356 = vmatpush1.bf16.msra.mxu0 0
      %357 = vmatprep.subr.bf16.mxu0 0
      %358 = vmatpush1.bf16.msra.mxu0 0
      %359 = vmatprep.subr.bf16.mxu0 0
      %360 = vmatpush1.bf16.msra.mxu0 0
      %361 = vmatprep.subr.bf16.mxu0 0
      %362 = vmatpush1.bf16.msra.mxu0 0
      %363 = vmatprep.subr.bf16.mxu0 0
      %364 = vmatpush1.bf16.msra.mxu0 0
      %365 = vmatprep.mubr.bf16.mxu0 0
      %366 = vmatmul.mubr.bf16.gmra.mrb[0].mxu0 %v252
      %v367 = vpop.f32.mrb[0].mxu0
      %v368 = vadd.f32 0.0, %v367
      %v369 = vpop.f32.mrb[0].mxu0
      %v370 = vpop.f32.mrb[0].mxu0
      %v371 = vadd.f32 0.0, %v370
      %v372 = vpop.f32.mrb[0].mxu0
      %373 = vmatprep.mubr.bf16.mxu0 0
      %374 = vmatmul.mubr.bf16.gmra.mrb[0].mxu0 %v260
      %v375 = vpop.f32.mrb[0].mxu0
      %v376 = vadd.f32 0.0, %v375
      %v377 = vpop.f32.mrb[0].mxu0
      %v378 = vpop.f32.mrb[0].mxu0
      %v379 = vadd.f32 0.0, %v378
      %v380 = vpop.f32.mrb[0].mxu0
      %381 = vmatprep.mubr.bf16.mxu0 0
      %382 = vmatmul.mubr.bf16.gmra.mrb[0].mxu0 %v268
      %v383 = vpop.f32.mrb[0].mxu0
      %v384 = vadd.f32 0.0, %v383
      %v385 = vpop.f32.mrb[0].mxu0
      %v386 = vpop.f32.mrb[0].mxu0
      %v387 = vadd.f32 0.0, %v386
      %v388 = vpop.f32.mrb[0].mxu0
      %389 = vmatprep.mubr.bf16.mxu0 0
      %390 = vmatmul.mubr.bf16.gmra.mrb[0].mxu0 %v276
      %v391 = vpop.f32.mrb[0].mxu0
      %v392 = vadd.f32 0.0, %v391
      %v393 = vpop.f32.mrb[0].mxu0
      %v394 = vpop.f32.mrb[0].mxu0
      %v395 = vadd.f32 0.0, %v394
      %v396 = vpop.f32.mrb[0].mxu0
      %397 = vmatprep.mubr.bf16.mxu0 0
      %398 = vmatmul.mubr.bf16.gmra.mrb[0].mxu0 %v279
      %v399 = vpop.f32.mrb[0].mxu0
      %v400 = vadd.f32 0.0, %v399
      %v401 = vpop.f32.mrb[0].mxu0
      %v402 = vpop.f32.mrb[0].mxu0
      %v403 = vpop.f32.mrb[0].mxu0
      %404 = vdwg.mxu0
      %v405 = vpack.c.b16 %v233, %v233
      %v427 = vunpack.c.l.b16 %v181
      %v428 = vunpack.c.l.b16 %v182
      %v429 = vunpack.c.l.b16 %v183
      %v430 = vunpack.c.l.b16 %v184
      %v431 = vunpack.c.l.b16 %v185
      %v432 = vunpack.c.l.b16 %v186
      %v433 = vunpack.c.l.b16 %v187
      %v434 = vunpack.c.l.b16 %v188
      %v435 = vunpack.c.l.b16 %v189
      %v436 = vunpack.c.l.b16 %v190
      %v437 = vunpack.c.l.b16 %v191
      %v438 = vunpack.c.l.b16 %v192
      %v439 = vunpack.c.l.b16 %v193
      %v440 = vunpack.c.l.b16 %v194
      %v441 = vunpack.c.l.b16 %v195
      %v442 = vunpack.c.l.b16 %v196
      %v443 = vpack.c.b16 %v428, %v427
      %v444 = vpack.c.b16 %v430, %v429
      %v445 = vpack.c.b16 %v432, %v431
      %v446 = vpack.c.b16 %v434, %v433
      %v447 = vpack.c.b16 %v436, %v435
      %v448 = vpack.c.b16 %v438, %v437
      %v449 = vpack.c.b16 %v440, %v439
      %v450 = vpack.c.b16 %v442, %v441
      %459 = vmatprep.subr.bf16.mxu0 0
      %460 = vmatpush1.bf16.msra.mxu0 %v443
      %461 = vmatprep.subr.bf16.mxu0 0
      %462 = vmatpush1.bf16.msra.mxu0 %v444
      %463 = vmatprep.subr.bf16.mxu0 0
      %464 = vmatpush1.bf16.msra.mxu0 %v445
      %465 = vmatprep.subr.bf16.mxu0 0
      %466 = vmatpush1.bf16.msra.mxu0 %v446
      %467 = vmatprep.subr.bf16.mxu0 0
      %468 = vmatpush1.bf16.msra.mxu0 %v447
      %469 = vmatprep.subr.bf16.mxu0 0
      %470 = vmatpush1.bf16.msra.mxu0 %v448
      %471 = vmatprep.subr.bf16.mxu0 0
      %472 = vmatpush1.bf16.msra.mxu0 %v449
      %473 = vmatprep.subr.bf16.mxu0 0
      %474 = vmatpush1.bf16.msra.mxu0 %v450
      %475 = vmatprep.subr.bf16.mxu0 0
      %476 = vmatpush1.bf16.msra.mxu0 0
      %477 = vmatprep.subr.bf16.mxu0 0
      %478 = vmatpush1.bf16.msra.mxu0 0
      %479 = vmatprep.subr.bf16.mxu0 0
      %480 = vmatpush1.bf16.msra.mxu0 0
      %481 = vmatprep.subr.bf16.mxu0 0
      %482 = vmatpush1.bf16.msra.mxu0 0
      %483 = vmatprep.subr.bf16.mxu0 0
      %484 = vmatpush1.bf16.msra.mxu0 0
      %485 = vmatprep.subr.bf16.mxu0 0
      %486 = vmatpush1.bf16.msra.mxu0 0
      %487 = vmatprep.subr.bf16.mxu0 0
      %488 = vmatpush1.bf16.msra.mxu0 0
      %489 = vmatprep.subr.bf16.mxu0 0
      %490 = vmatpush1.bf16.msra.mxu0 0
      %491 = vmatprep.mubr.bf16.mxu0 0
      %492 = vmatmul.mubr.bf16.gmra.mrb[0].mxu0 %v235
      %v493 = vpop.f32.mrb[0].mxu0
      %v494 = vadd.f32 %v368, %v493
      %v495 = vpop.f32.mrb[0].mxu0
      %v496 = vpop.f32.mrb[0].mxu0
      %v497 = vadd.f32 %v371, %v496
      %v498 = vpop.f32.mrb[0].mxu0
      %499 = vmatprep.mubr.bf16.mxu0 0
      %500 = vmatmul.mubr.bf16.gmra.mrb[0].mxu0 %v236
      %v501 = vpop.f32.mrb[0].mxu0
      %v502 = vadd.f32 %v376, %v501
      %v503 = vpop.f32.mrb[0].mxu0
      %v504 = vpop.f32.mrb[0].mxu0
      %v505 = vadd.f32 %v379, %v504
      %v506 = vpop.f32.mrb[0].mxu0
      %507 = vmatprep.mubr.bf16.mxu0 0
      %508 = vmatmul.mubr.bf16.gmra.mrb[0].mxu0 %v237
      %v509 = vpop.f32.mrb[0].mxu0
      %v510 = vadd.f32 %v384, %v509
      %v511 = vpop.f32.mrb[0].mxu0
      %v512 = vpop.f32.mrb[0].mxu0
      %v513 = vadd.f32 %v387, %v512
      %v514 = vpop.f32.mrb[0].mxu0
      %515 = vmatprep.mubr.bf16.mxu0 0
      %516 = vmatmul.mubr.bf16.gmra.mrb[0].mxu0 %v238
      %v517 = vpop.f32.mrb[0].mxu0
      %v518 = vadd.f32 %v392, %v517
      %v519 = vpop.f32.mrb[0].mxu0
      %v520 = vpop.f32.mrb[0].mxu0
      %v521 = vadd.f32 %v395, %v520
      %v522 = vpop.f32.mrb[0].mxu0
      %523 = vmatprep.mubr.bf16.mxu0 0
      %524 = vmatmul.mubr.bf16.gmra.mrb[0].mxu0 %v405
      %v525 = vpop.f32.mrb[0].mxu0
      %v526 = vadd.f32 %v400, %v525
      %v527 = vpop.f32.mrb[0].mxu0
      %v528 = vpop.f32.mrb[0].mxu0
      %v529 = vpop.f32.mrb[0].mxu0
      %530 = vdwg.mxu0
      %v531 = vld [vmem:[%s165 + $0x4] sm:$0xf]
      %v532 = vld [vmem:[%s165 + $0x8] sm:$0xf]
      %v533 = vld [vmem:[%s165 + $0xc] sm:$0xf]
      %v534 = vld [vmem:[%s165 + $0x10] sm:$0xf]
      %v535 = vld [vmem:[%s165 + $0x14] sm:$0xf]
      %v536 = vld [vmem:[%s165 + $0x18] sm:$0xf]
      %v537 = vld [vmem:[%s165 + $0x1c] sm:$0xf]
      %v538 = vld [vmem:[%s165 + $0x20] sm:$0xf]
      %v539 = vld [vmem:[%s165 + $0x24] sm:$0xf]
      %v540 = vld [vmem:[%s165 + $0x28] sm:$0x1]
      %s541 = scalar_lea.vmem %s1, 128
      %v542 = vld [vmem:[%s541] sm:$0xf]
      %v543 = vld [vmem:[%s541 + $0x4] sm:$0xf]
      %v544 = vld [vmem:[%s541 + $0x8] sm:$0xf]
      %v545 = vld [vmem:[%s541 + $0xc] sm:$0xf]
      %v546 = vld [vmem:[%s541 + $0x10] sm:$0xf]
      %v547 = vld [vmem:[%s541 + $0x14] sm:$0xf]
      %v548 = vld [vmem:[%s541 + $0x18] sm:$0xf]
      %v549 = vld [vmem:[%s541 + $0x1c] sm:$0xf]
      %v550 = vld [vmem:[%s541 + $0x20] sm:$0xf]
      %v551 = vld [vmem:[%s541 + $0x24] sm:$0xf]
      %v552 = vld [vmem:[%s541 + $0x28] sm:$0xf]
      %v553 = vld [vmem:[%s541 + $0x2c] sm:$0xf]
      %v554 = vld [vmem:[%s541 + $0x30] sm:$0xf]
      %v555 = vld [vmem:[%s541 + $0x34] sm:$0xf]
      %v556 = vld [vmem:[%s541 + $0x38] sm:$0xf]
      %v557 = vld [vmem:[%s541 + $0x3c] sm:$0xf]
      %v568 = vunpack.c.l.b16 %v531
      %v569 = vunpack.c.l.b16 %v532
      %v570 = vunpack.c.l.b16 %v533
      %v571 = vunpack.c.l.b16 %v534
      %v572 = vunpack.c.l.b16 %v535
      %v573 = vunpack.c.l.b16 %v536
      %v574 = vunpack.c.l.b16 %v537
      %v575 = vunpack.c.l.b16 %v538
      %v576 = vunpack.c.l.b16 %v539
      %v577 = vunpack.c.l.b16 %v540
      %v578 = vpack.c.b16 %v569, %v568
      %v579 = vpack.c.b16 %v571, %v570
      %v580 = vpack.c.b16 %v573, %v572
      %v581 = vpack.c.b16 %v575, %v574
      %v582 = vpack.c.b16 %v577, %v576
      %v584 = vshrl.u32 %v578, 16
      %v586 = vshll.u32 %v578, 16
      %v588 = vrot.slane %v586, 1
      %v589 = vor.u32 %v584, %v588
      %v591 = vshll.u32 %v579, 16
      %v593 = vrot.slane %v591, 1
      %v594 = vsel %vm240, %v589, %v593
      %v595 = vshrl.u32 %v579, 16
      %v597 = vor.u32 %v595, %v593
      %v599 = vshll.u32 %v580, 16
      %v601 = vrot.slane %v599, 1
      %v602 = vsel %vm240, %v597, %v601
      %v603 = vshrl.u32 %v580, 16
      %v605 = vor.u32 %v603, %v601
      %v607 = vshll.u32 %v581, 16
      %v609 = vrot.slane %v607, 1
      %v610 = vsel %vm240, %v605, %v609
      %v611 = vshrl.u32 %v581, 16
      %v613 = vor.u32 %v611, %v609
      %v615 = vshll.u32 %v582, 16
      %v617 = vrot.slane %v615, 1
      %v618 = vsel %vm240, %v613, %v617
      %v619 = vshrl.u32 %v582, 16
      %v621 = vor.u32 %v619, %v617
      %v643 = vunpack.c.l.b16 %v542
      %v644 = vunpack.c.l.b16 %v543
      %v645 = vunpack.c.l.b16 %v544
      %v646 = vunpack.c.l.b16 %v545
      %v647 = vunpack.c.l.b16 %v546
      %v648 = vunpack.c.l.b16 %v547
      %v649 = vunpack.c.l.b16 %v548
      %v650 = vunpack.c.l.b16 %v549
      %v651 = vunpack.c.l.b16 %v550
      %v652 = vunpack.c.l.b16 %v551
      %v653 = vunpack.c.l.b16 %v552
      %v654 = vunpack.c.l.b16 %v553
      %v655 = vunpack.c.l.b16 %v554
      %v656 = vunpack.c.l.b16 %v555
      %v657 = vunpack.c.l.b16 %v556
      %v658 = vunpack.c.l.b16 %v557
      %v659 = vpack.c.b16 %v644, %v643
      %v660 = vpack.c.b16 %v646, %v645
      %v661 = vpack.c.b16 %v648, %v647
      %v662 = vpack.c.b16 %v650, %v649
      %v663 = vpack.c.b16 %v652, %v651
      %v664 = vpack.c.b16 %v654, %v653
      %v665 = vpack.c.b16 %v656, %v655
      %v666 = vpack.c.b16 %v658, %v657
      %675 = vmatprep.subr.bf16.mxu0 0
      %676 = vmatpush1.bf16.msra.mxu0 %v659
      %677 = vmatprep.subr.bf16.mxu0 0
      %678 = vmatpush1.bf16.msra.mxu0 %v660
      %679 = vmatprep.subr.bf16.mxu0 0
      %680 = vmatpush1.bf16.msra.mxu0 %v661
      %681 = vmatprep.subr.bf16.mxu0 0
      %682 = vmatpush1.bf16.msra.mxu0 %v662
      %683 = vmatprep.subr.bf16.mxu0 0
      %684 = vmatpush1.bf16.msra.mxu0 %v663
      %685 = vmatprep.subr.bf16.mxu0 0
      %686 = vmatpush1.bf16.msra.mxu0 %v664
      %687 = vmatprep.subr.bf16.mxu0 0
      %688 = vmatpush1.bf16.msra.mxu0 %v665
      %689 = vmatprep.subr.bf16.mxu0 0
      %690 = vmatpush1.bf16.msra.mxu0 %v666
      %691 = vmatprep.subr.bf16.mxu0 0
      %692 = vmatpush1.bf16.msra.mxu0 0
      %693 = vmatprep.subr.bf16.mxu0 0
      %694 = vmatpush1.bf16.msra.mxu0 0
      %695 = vmatprep.subr.bf16.mxu0 0
      %696 = vmatpush1.bf16.msra.mxu0 0
      %697 = vmatprep.subr.bf16.mxu0 0
      %698 = vmatpush1.bf16.msra.mxu0 0
      %699 = vmatprep.subr.bf16.mxu0 0
      %700 = vmatpush1.bf16.msra.mxu0 0
      %701 = vmatprep.subr.bf16.mxu0 0
      %702 = vmatpush1.bf16.msra.mxu0 0
      %703 = vmatprep.subr.bf16.mxu0 0
      %704 = vmatpush1.bf16.msra.mxu0 0
      %705 = vmatprep.subr.bf16.mxu0 0
      %706 = vmatpush1.bf16.msra.mxu0 0
      %707 = vmatprep.mubr.bf16.mxu0 0
      %708 = vmatmul.mubr.bf16.gmra.mrb[0].mxu0 %v594
      %v709 = vpop.f32.mrb[0].mxu0
      %v710 = vadd.f32 0.0, %v709
      %v711 = vpop.f32.mrb[0].mxu0
      %v712 = vpop.f32.mrb[0].mxu0
      %v713 = vadd.f32 0.0, %v712
      %v714 = vpop.f32.mrb[0].mxu0
      %715 = vmatprep.mubr.bf16.mxu0 0
      %716 = vmatmul.mubr.bf16.gmra.mrb[0].mxu0 %v602
      %v717 = vpop.f32.mrb[0].mxu0
      %v718 = vadd.f32 0.0, %v717
      %v719 = vpop.f32.mrb[0].mxu0
      %v720 = vpop.f32.mrb[0].mxu0
      %v721 = vadd.f32 0.0, %v720
      %v722 = vpop.f32.mrb[0].mxu0
      %723 = vmatprep.mubr.bf16.mxu0 0
      %724 = vmatmul.mubr.bf16.gmra.mrb[0].mxu0 %v610
      %v725 = vpop.f32.mrb[0].mxu0
      %v726 = vadd.f32 0.0, %v725
      %v727 = vpop.f32.mrb[0].mxu0
      %v728 = vpop.f32.mrb[0].mxu0
      %v729 = vadd.f32 0.0, %v728
      %v730 = vpop.f32.mrb[0].mxu0
      %731 = vmatprep.mubr.bf16.mxu0 0
      %732 = vmatmul.mubr.bf16.gmra.mrb[0].mxu0 %v618
      %v733 = vpop.f32.mrb[0].mxu0
      %v734 = vadd.f32 0.0, %v733
      %v735 = vpop.f32.mrb[0].mxu0
      %v736 = vpop.f32.mrb[0].mxu0
      %v737 = vadd.f32 0.0, %v736
      %v738 = vpop.f32.mrb[0].mxu0
      %739 = vmatprep.mubr.bf16.mxu0 0
      %740 = vmatmul.mubr.bf16.gmra.mrb[0].mxu0 %v621
      %v741 = vpop.f32.mrb[0].mxu0
      %v742 = vadd.f32 0.0, %v741
      %v743 = vpop.f32.mrb[0].mxu0
      %v744 = vpop.f32.mrb[0].mxu0
      %v745 = vpop.f32.mrb[0].mxu0
      %746 = vdwg.mxu0
      %v747 = vadd.f32 %v494, %v710
      %v748 = vadd.f32 %v497, %v713
      %v749 = vadd.f32 %v502, %v718
      %v750 = vadd.f32 %v505, %v721
      %v751 = vadd.f32 %v510, %v726
      %v752 = vadd.f32 %v513, %v729
      %v753 = vadd.f32 %v518, %v734
      %v754 = vadd.f32 %v521, %v737
      %v755 = vadd.f32 %v526, %v742
      %v756 = vld [vmem:[%s165 + $0x4] sm:$0xe]
      %s757 = scalar_lea.vmem %s1, 192
      %v758 = vld [vmem:[%s757] sm:$0xf]
      %v759 = vld [vmem:[%s757 + $0x4] sm:$0xf]
      %v760 = vld [vmem:[%s757 + $0x8] sm:$0xf]
      %v761 = vld [vmem:[%s757 + $0xc] sm:$0xf]
      %v762 = vld [vmem:[%s757 + $0x10] sm:$0xf]
      %v763 = vld [vmem:[%s757 + $0x14] sm:$0xf]
      %v764 = vld [vmem:[%s757 + $0x18] sm:$0xf]
      %v765 = vld [vmem:[%s757 + $0x1c] sm:$0xf]
      %v766 = vld [vmem:[%s757 + $0x20] sm:$0xf]
      %v767 = vld [vmem:[%s757 + $0x24] sm:$0xf]
      %v768 = vld [vmem:[%s757 + $0x28] sm:$0xf]
      %v769 = vld [vmem:[%s757 + $0x2c] sm:$0xf]
      %v770 = vld [vmem:[%s757 + $0x30] sm:$0xf]
      %v771 = vld [vmem:[%s757 + $0x34] sm:$0xf]
      %v772 = vld [vmem:[%s757 + $0x38] sm:$0xf]
      %v773 = vld [vmem:[%s757 + $0x3c] sm:$0xf]
      %v775 = vunpack.c.l.b16 %v756
      %v776 = vpack.c.b16 %v569, %v775
      %vm777 = vcmask 1046528
      %v778 = vrot.slane %v776, 1
      %v779 = vrot.slane %v579, 1
      %v780 = vsel %vm777, %v778, %v779
      %v781 = vrot.slane %v580, 1
      %v782 = vsel %vm777, %v779, %v781
      %v783 = vrot.slane %v581, 1
      %v784 = vsel %vm777, %v781, %v783
      %v785 = vrot.slane %v582, 1
      %v786 = vsel %vm777, %v783, %v785
      %v808 = vunpack.c.l.b16 %v758
      %v809 = vunpack.c.l.b16 %v759
      %v810 = vunpack.c.l.b16 %v760
      %v811 = vunpack.c.l.b16 %v761
      %v812 = vunpack.c.l.b16 %v762
      %v813 = vunpack.c.l.b16 %v763
      %v814 = vunpack.c.l.b16 %v764
      %v815 = vunpack.c.l.b16 %v765
      %v816 = vunpack.c.l.b16 %v766
      %v817 = vunpack.c.l.b16 %v767
      %v818 = vunpack.c.l.b16 %v768
      %v819 = vunpack.c.l.b16 %v769
      %v820 = vunpack.c.l.b16 %v770
      %v821 = vunpack.c.l.b16 %v771
      %v822 = vunpack.c.l.b16 %v772
      %v823 = vunpack.c.l.b16 %v773
      %v824 = vpack.c.b16 %v809, %v808
      %v825 = vpack.c.b16 %v811, %v810
      %v826 = vpack.c.b16 %v813, %v812
      %v827 = vpack.c.b16 %v815, %v814
      %v828 = vpack.c.b16 %v817, %v816
      %v829 = vpack.c.b16 %v819, %v818
      %v830 = vpack.c.b16 %v821, %v820
      %v831 = vpack.c.b16 %v823, %v822
      %840 = vmatprep.subr.bf16.mxu0 0
      %841 = vmatpush1.bf16.msra.mxu0 %v824
      %842 = vmatprep.subr.bf16.mxu0 0
      %843 = vmatpush1.bf16.msra.mxu0 %v825
      %844 = vmatprep.subr.bf16.mxu0 0
      %845 = vmatpush1.bf16.msra.mxu0 %v826
      %846 = vmatprep.subr.bf16.mxu0 0
      %847 = vmatpush1.bf16.msra.mxu0 %v827
      %848 = vmatprep.subr.bf16.mxu0 0
      %849 = vmatpush1.bf16.msra.mxu0 %v828
      %850 = vmatprep.subr.bf16.mxu0 0
      %851 = vmatpush1.bf16.msra.mxu0 %v829
      %852 = vmatprep.subr.bf16.mxu0 0
      %853 = vmatpush1.bf16.msra.mxu0 %v830
      %854 = vmatprep.subr.bf16.mxu0 0
      %855 = vmatpush1.bf16.msra.mxu0 %v831
      %856 = vmatprep.subr.bf16.mxu0 0
      %857 = vmatpush1.bf16.msra.mxu0 0
      %858 = vmatprep.subr.bf16.mxu0 0
      %859 = vmatpush1.bf16.msra.mxu0 0
      %860 = vmatprep.subr.bf16.mxu0 0
      %861 = vmatpush1.bf16.msra.mxu0 0
      %862 = vmatprep.subr.bf16.mxu0 0
      %863 = vmatpush1.bf16.msra.mxu0 0
      %864 = vmatprep.subr.bf16.mxu0 0
      %865 = vmatpush1.bf16.msra.mxu0 0
      %866 = vmatprep.subr.bf16.mxu0 0
      %867 = vmatpush1.bf16.msra.mxu0 0
      %868 = vmatprep.subr.bf16.mxu0 0
      %869 = vmatpush1.bf16.msra.mxu0 0
      %870 = vmatprep.subr.bf16.mxu0 0
      %871 = vmatpush1.bf16.msra.mxu0 0
      %872 = vmatprep.mubr.bf16.mxu0 0
      %873 = vmatmul.mubr.bf16.gmra.mrb[0].mxu0 %v780
      %v874 = vpop.f32.mrb[0].mxu0
      %v875 = vadd.f32 0.0, %v874
      %v876 = vpop.f32.mrb[0].mxu0
      %v877 = vpop.f32.mrb[0].mxu0
      %v878 = vadd.f32 0.0, %v877
      %v879 = vpop.f32.mrb[0].mxu0
      %880 = vmatprep.mubr.bf16.mxu0 0
      %881 = vmatmul.mubr.bf16.gmra.mrb[0].mxu0 %v782
      %v882 = vpop.f32.mrb[0].mxu0
      %v883 = vadd.f32 0.0, %v882
      %v884 = vpop.f32.mrb[0].mxu0
      %v885 = vpop.f32.mrb[0].mxu0
      %v886 = vadd.f32 0.0, %v885
      %v887 = vpop.f32.mrb[0].mxu0
      %888 = vmatprep.mubr.bf16.mxu0 0
      %889 = vmatmul.mubr.bf16.gmra.mrb[0].mxu0 %v784
      %v890 = vpop.f32.mrb[0].mxu0
      %v891 = vadd.f32 0.0, %v890
      %v892 = vpop.f32.mrb[0].mxu0
      %v893 = vpop.f32.mrb[0].mxu0
      %v894 = vadd.f32 0.0, %v893
      %v895 = vpop.f32.mrb[0].mxu0
      %896 = vmatprep.mubr.bf16.mxu0 0
      %897 = vmatmul.mubr.bf16.gmra.mrb[0].mxu0 %v786
      %v898 = vpop.f32.mrb[0].mxu0
      %v899 = vadd.f32 0.0, %v898
      %v900 = vpop.f32.mrb[0].mxu0
      %v901 = vpop.f32.mrb[0].mxu0
      %v902 = vadd.f32 0.0, %v901
      %v903 = vpop.f32.mrb[0].mxu0
      %904 = vmatprep.mubr.bf16.mxu0 0
      %905 = vmatmul.mubr.bf16.gmra.mrb[0].mxu0 %v785
      %v906 = vpop.f32.mrb[0].mxu0
      %v907 = vadd.f32 0.0, %v906
      %v908 = vpop.f32.mrb[0].mxu0
      %v909 = vpop.f32.mrb[0].mxu0
      %v910 = vpop.f32.mrb[0].mxu0
      %911 = vdwg.mxu0
      %v912 = vadd.f32 %v747, %v875
      %v913 = vadd.f32 %v748, %v878
      %v914 = vadd.f32 %v749, %v883
      %v915 = vadd.f32 %v750, %v886
      %v916 = vadd.f32 %v751, %v891
      %v917 = vadd.f32 %v752, %v894
      %v918 = vadd.f32 %v753, %v899
      %v919 = vadd.f32 %v754, %v902
      %v920 = vadd.f32 %v755, %v907
      %v921 = vld [vmem:[%s2] sm:$0x1]
      %v923 = vlaneseq
      %v924 = vshrl.u32 %v923, 7
      %v925 = vsub.s32 0, %v924
      %v926 = vrot.slane %v921, %v925
      %v928 = vadd.f32 %v912, %v926
      %v929 = vadd.f32 %v913, %v926
      %v930 = vadd.f32 %v914, %v926
      %v931 = vadd.f32 %v915, %v926
      %v932 = vadd.f32 %v916, %v926
      %v933 = vadd.f32 %v917, %v926
      %v934 = vadd.f32 %v918, %v926
      %v935 = vadd.f32 %v919, %v926
      %v936 = vadd.f32 %v920, %v926
      %v937 = vmax.f32 %v928, 0.0
      %v938 = vmax.f32 %v929, 0.0
      %v939 = vmax.f32 %v930, 0.0
      %v940 = vmax.f32 %v931, 0.0
      %v941 = vmax.f32 %v932, 0.0
      %v942 = vmax.f32 %v933, 0.0
      %v943 = vmax.f32 %v934, 0.0
      %v944 = vmax.f32 %v935, 0.0
      %v945 = vmax.f32 %v936, 0.0
      %v946 = vpack.c.bf16 %v938, %v937
      %v947 = vpack.c.bf16 %v940, %v939
      %v948 = vpack.c.bf16 %v942, %v941
      %v949 = vpack.c.bf16 %v944, %v943
      %v950 = vpack.c.bf16 %v945, %v945
      %v956 = vunpack.c.l.b16 %v946
      %v957 = vunpack.c.h.b16 %v946
      %v958 = vunpack.c.l.b16 %v947
      %v959 = vunpack.c.h.b16 %v947
      %v960 = vunpack.c.l.b16 %v948
      %v961 = vunpack.c.h.b16 %v948
      %v962 = vunpack.c.l.b16 %v949
      %v963 = vunpack.c.h.b16 %v949
      %v964 = vunpack.c.l.b16 %v950
      %v965 = vpack.c.b16 %v956, %v956
      %v966 = vpack.c.b16 %v957, %v957
      %v967 = vpack.c.b16 %v958, %v958
      %v968 = vpack.c.b16 %v959, %v959
      %v969 = vpack.c.b16 %v960, %v960
      %v970 = vpack.c.b16 %v961, %v961
      %v971 = vpack.c.b16 %v962, %v962
      %v972 = vpack.c.b16 %v963, %v963
      %v973 = vpack.c.b16 %v964, %v964
      %vm983 = vcmask 519168
      %984 = vst.msk [vmem:[%s170] sm:$0xf] %vm983, %v965
      %985 = vst.msk [vmem:[%s170 + $0x4] sm:$0xf] %vm983, %v966
      %986 = vst.msk [vmem:[%s170 + $0x8] sm:$0xf] %vm983, %v967
      %987 = vst.msk [vmem:[%s170 + $0xc] sm:$0xf] %vm983, %v968
      %988 = vst.msk [vmem:[%s170 + $0x10] sm:$0xf] %vm983, %v969
      %989 = vst.msk [vmem:[%s170 + $0x14] sm:$0xf] %vm983, %v970
      %990 = vst.msk [vmem:[%s170 + $0x18] sm:$0xf] %vm983, %v971
      %991 = vst.msk [vmem:[%s170 + $0x1c] sm:$0xf] %vm983, %v972
      %992 = vst.msk [vmem:[%s170 + $0x20] sm:$0xf] %vm983, %v973
      %p993 = scmp.lt.s32.totalorder %s14, 1
      %s994 = scalar_select %p993, %s14, 1
      %s995 = smul.addr %s994, 9
      %s996 = smul.addr %s995, 4
      %s997 = scalar_lea.vmem %s3, %s996
      // Predicated region
      $region33: #{vae_encoder_forward.6} parent=31 // pred_check
        %p998 = pneg %p100
      $region34: #{vae_encoder_forward.6} parent=31 // pred_check_branch
        %1000 = sbr.rel (%p998) target = $region36
      $region35: #{vae_encoder_forward.6} parent=31 // pred_region
        _
      $region36: #{vae_encoder_forward.6} parent=31 // pred_fallthru
        _
    $region32: #{vae_encoder_forward.6} parent=5 // pred_fallthru
      _
    %p1001 = scmp.le.s32.totalorder 2, %s9
    // Predicated region
    $region37: #{vae_encoder_forward.6} parent=5 // pred_check
      %p1002 = pneg %p1001
    $region38: #{vae_encoder_forward.6} parent=5 // pred_check_branch
      %1004 = sbr.rel (%p1002) target = $region40
    $region39: #{vae_encoder_forward.6} parent=5 // pred_region
      %s1005 = ssub.s32 %s9, 2
      // Predicated region
      $region41: #{vae_encoder_forward.6} parent=39 // pred_check
        %p1006 = pneg %p106
      $region42: #{vae_encoder_forward.6} parent=39 // pred_check_branch
        %1008 = sbr.rel (%p1006) target = $region44
      $region43: #{vae_encoder_forward.6} parent=39 // pred_region
        %p1009 = scmp.lt.s32.totalorder %s15, 1
        %s1010 = scalar_select %p1009, %s15, 1
        %s1011 = smul.addr %s1010, 9
        %s1012 = smul.addr %s1011, 4
        %s1013 = scalar_lea.vmem %s3, %s1012
      $region44: #{vae_encoder_forward.6} parent=39 // pred_fallthru
        _
    $region40: #{vae_encoder_forward.6} parent=5 // pred_fallthru
      _
  $region6: #{vae_encoder_forward.6} parent=0 // loop_footer
    %s13 = sadd.s32 1, %s9
  $region7: #{vae_encoder_forward.6} parent=0 // loop_footer_branch
    %8 = sbr.rel target = $region3
  $region8: #{vae_encoder_forward.6} parent=0 // loop_exit
    _

// kernel: vae_encoder_forward.7
$region0: #{vae_encoder_forward.7}
  #allocation0 [shape = 'u32[]', space=smem, size = 0x4, offset = 0x4, fixed_abs, tag = 'smem constant byte address 0x4 - core index']
  #allocation1 [shape = 'u32[144,128]{1,0:T(1,128)}', space=vmem, size = 0x12000, scoped, tag = 'internal scratch']
  %s0 = inlined_call_operand.vmem [shape: bf16[2,30,256], index: 0, kind: input, shape index: {}]
  %s1 = inlined_call_operand.vmem [shape: bf16[4,256,128], index: 1, kind: input, shape index: {}]
  %s2 = inlined_call_operand.vmem [shape: f32[1,128], index: 2, kind: input, shape index: {}]
  %s3 = inlined_call_operand.vmem [shape: bf16[2,20,128], index: 3, kind: output, shape index: {}]
  %s4 = sld [smem:[#allocation0]]
  $region45: #{vae_encoder_forward.7} parent=0
    _
  %s6 = ssub.s32 1, %s4
  %s7 = scalar_select 0, %s6, %s4
  loop: start=0, step=1, limit=4
  $region2: #{vae_encoder_forward.7} parent=0 // loop_pre_header
    _
  $region3: #{vae_encoder_forward.7} parent=0 // loop_header
    %s9 = sphi 0, %s13
    %p10 = scmp.ge.s32.totalorder %s9, 4
    %s19 = sphi 0, %s21
    %s22 = sphi 0, %s19
    %s23 = sphi 0, %s22
    %s39 = sphi 0, %s23
    %s43 = sphi 0, %s43
    %s45 = sphi 0, %s43
    %s46 = sphi 0, %s45
    %s60 = sphi 0, %s46
    %s64 = sphi 0, %s64
    %s66 = sphi 0, %s64
    %s67 = sphi 0, %s66
    %s81 = sphi 0, %s67
    %s87 = sphi 0, %s89
    %s90 = sphi 0, %s87
    %s91 = sphi 0, %s90
    %s107 = sphi 0, %s91
  $region4: #{vae_encoder_forward.7} parent=0 // loop_header_branch
    %12 = sbr.rel (%p10) target = $region8
  $region5: #{vae_encoder_forward.7} parent=0 // loop_body
    %s14 = ssub.s32 %s9, 1
    %s15 = ssub.s32 %s9, 2
    %s16 = sadd.s32 %s9, 1
    %s17 = ssub.s32 %s9, %s16
    %p18 = scmp.eq.s32.totalorder %s17, 0
    %s20 = sadd.s32 %s19, 1
    %s21 = scalar_select %p18, %s19, %s20
    %p24 = pneg %p18
    %p25 = scmp.eq.s32.totalorder %s9, 1
    %p26 = por %p24, %p25
    %p27 = scmp.ne.s32.totalorder %s19, %s22
    %p28 = scmp.eq.s32.totalorder %s9, 0
    %p29 = por %p27, %p28
    %p30 = scmp.ne.s32.totalorder %s19, %s22
    %p31 = scmp.eq.s32.totalorder %s14, 1
    %p32 = por %p30, %p31
    %p33 = scmp.ne.s32.totalorder %s22, %s23
    %p34 = scmp.eq.s32.totalorder %s14, 0
    %p35 = por %p33, %p34
    %p36 = scmp.ne.s32.totalorder %s22, %s23
    %p37 = scmp.eq.s32.totalorder %s15, 1
    %p38 = por %p36, %p37
    %p40 = scmp.ne.s32.totalorder %s23, %s39
    %p41 = scmp.eq.s32.totalorder %s15, 0
    %p42 = por %p40, %p41
    %s44 = sadd.s32 %s43, 1
    %p47 = scmp.eq.s32.totalorder %s9, 1
    %p48 = scmp.ne.s32.totalorder %s43, %s45
    %p49 = scmp.eq.s32.totalorder %s9, 0
    %p50 = por %p48, %p49
    %p51 = scmp.ne.s32.totalorder %s43, %s45
    %p52 = scmp.eq.s32.totalorder %s14, 1
    %p53 = por %p51, %p52
    %p54 = scmp.ne.s32.totalorder %s45, %s46
    %p55 = scmp.eq.s32.totalorder %s14, 0
    %p56 = por %p54, %p55
    %p57 = scmp.ne.s32.totalorder %s45, %s46
    %p58 = scmp.eq.s32.totalorder %s15, 1
    %p59 = por %p57, %p58
    %p61 = scmp.ne.s32.totalorder %s46, %s60
    %p62 = scmp.eq.s32.totalorder %s15, 0
    %p63 = por %p61, %p62
    %s65 = sadd.s32 %s64, 1
    %p68 = scmp.eq.s32.totalorder %s9, 1
    %p69 = scmp.ne.s32.totalorder %s64, %s66
    %p70 = scmp.eq.s32.totalorder %s9, 0
    %p71 = por %p69, %p70
    %p72 = scmp.ne.s32.totalorder %s64, %s66
    %p73 = scmp.eq.s32.totalorder %s14, 1
    %p74 = por %p72, %p73
    %p75 = scmp.ne.s32.totalorder %s66, %s67
    %p76 = scmp.eq.s32.totalorder %s14, 0
    %p77 = por %p75, %p76
    %p78 = scmp.ne.s32.totalorder %s66, %s67
    %p79 = scmp.eq.s32.totalorder %s15, 1
    %p80 = por %p78, %p79
    %p82 = scmp.ne.s32.totalorder %s67, %s81
    %p83 = scmp.eq.s32.totalorder %s15, 0
    %p84 = por %p82, %p83
    %s85 = ssub.s32 %s9, %s16
    %p86 = scmp.eq.s32.totalorder %s85, 0
    %s88 = sadd.s32 %s87, 1
    %s89 = scalar_select %p86, %s87, %s88
    %p92 = pneg %p86
    %p93 = scmp.eq.s32.totalorder %s9, 1
    %p94 = por %p92, %p93
    %p95 = scmp.ne.s32.totalorder %s87, %s90
    %p96 = scmp.eq.s32.totalorder %s9, 0
    %p97 = por %p95, %p96
    %p98 = scmp.ne.s32.totalorder %s87, %s90
    %p99 = scmp.eq.s32.totalorder %s14, 1
    %p100 = por %p98, %p99
    %p101 = scmp.ne.s32.totalorder %s90, %s91
    %p102 = scmp.eq.s32.totalorder %s14, 0
    %p103 = por %p101, %p102
    %p104 = scmp.ne.s32.totalorder %s90, %s91
    %p105 = scmp.eq.s32.totalorder %s15, 1
    %p106 = por %p104, %p105
    %p108 = scmp.ne.s32.totalorder %s91, %s107
    %p109 = scmp.eq.s32.totalorder %s15, 0
    %p110 = por %p108, %p109
    %p111 = scmp.le.s32.totalorder 1, %s9
    %p112 = scmp.lt.s32.totalorder %s9, 3
    %p113 = pnand %p111, %p112
    %p114 = pneg %p113
    // Predicated region
    $region9: #{vae_encoder_forward.7} parent=5 // pred_check
      _
    $region10: #{vae_encoder_forward.7} parent=5 // pred_check_branch
      %116 = sbr.rel (%p113) target = $region12
    $region11: #{vae_encoder_forward.7} parent=5 // pred_region
      %s117 = ssub.s32 %s9, 1
      // Predicated region
      $region13: #{vae_encoder_forward.7} parent=11 // pred_check
        %p118 = pneg %p56
      $region14: #{vae_encoder_forward.7} parent=11 // pred_check_branch
        %120 = sbr.rel (%p118) target = $region16
      $region15: #{vae_encoder_forward.7} parent=11 // pred_region
        _
      $region16: #{vae_encoder_forward.7} parent=11 // pred_fallthru
        _
      // Predicated region
      $region17: #{vae_encoder_forward.7} parent=11 // pred_check
        %p121 = pneg %p77
      $region18: #{vae_encoder_forward.7} parent=11 // pred_check_branch
        %123 = sbr.rel (%p121) target = $region20
      $region19: #{vae_encoder_forward.7} parent=11 // pred_region
        _
      $region20: #{vae_encoder_forward.7} parent=11 // pred_fallthru
        _
    $region12: #{vae_encoder_forward.7} parent=5 // pred_fallthru
      _
    %p124 = scmp.lt.s32.totalorder %s9, 2
    // Predicated region
    $region21: #{vae_encoder_forward.7} parent=5 // pred_check
      %p125 = pneg %p124
    $region22: #{vae_encoder_forward.7} parent=5 // pred_check_branch
      %127 = sbr.rel (%p125) target = $region24
    $region23: #{vae_encoder_forward.7} parent=5 // pred_region
      // Predicated region
      $region25: #{vae_encoder_forward.7} parent=23 // pred_check
        %p128 = pneg %p29
      $region26: #{vae_encoder_forward.7} parent=23 // pred_check_branch
        %130 = sbr.rel (%p128) target = $region28
      $region27: #{vae_encoder_forward.7} parent=23 // pred_region
        %p131 = scmp.lt.s32.totalorder %s9, 1
        %s132 = scalar_select %p131, %s9, 1
        %s133 = smul.addr %s132, 8
        %s134 = smul.addr %s133, 4
        %s135 = scalar_lea.vmem %s0, %s134
      $region28: #{vae_encoder_forward.7} parent=23 // pred_fallthru
        _
    $region24: #{vae_encoder_forward.7} parent=5 // pred_fallthru
      _
    %p136 = scmp.le.s32.totalorder 1, %s9
    %p137 = scmp.lt.s32.totalorder %s9, 3
    %p138 = pnand %p136, %p137
    %p139 = pneg %p138
    // Predicated region
    $region29: #{vae_encoder_forward.7} parent=5 // pred_check
      _
    $region30: #{vae_encoder_forward.7} parent=5 // pred_check_branch
      %141 = sbr.rel (%p138) target = $region32
    $region31: #{vae_encoder_forward.7} parent=5 // pred_region
      %s142 = ssub.s32 %s9, 1
      %p143 = scmp.lt.s32.totalorder %s14, 1
      %s144 = scalar_select %p143, %s14, 1
      %s145 = smul.addr %s144, 8
      %s146 = smul.addr %s145, 4
      %s147 = scalar_lea.vmem %s0, %s146
      %p148 = pneg %p35
      %p149 = pneg %p32
      %p150 = pneg %p56
      %p151 = pneg %p53
      %p152 = pneg %p77
      %p153 = pneg %p74
      %p154 = pneg %p103
      %p155 = pneg %p100
      %p156 = scmp.lt.s32.totalorder %s14, 1
      %s157 = scalar_select %p156, %s14, 1
      %s158 = smul.addr %s157, 3
      %s159 = smul.addr %s158, 4
      %s160 = scalar_lea.vmem %s3, %s159
      %p161 = scmp.lt.s32.totalorder %s14, 1
      %s162 = scalar_select %p161, %s14, 1
      %s163 = smul.addr %s162, 8
      %s164 = smul.addr %s163, 4
      %s165 = scalar_lea.vmem %s0, %s164
      %p166 = scmp.lt.s32.totalorder %s14, 1
      %s167 = scalar_select %p166, %s14, 1
      %s168 = smul.addr %s167, 3
      %s169 = smul.addr %s168, 4
      %s170 = scalar_lea.vmem %s3, %s169
      %v172 = vld [vmem:[%s165] sm:$0xff]
      %v173 = vld [vmem:[%s165 + $0x8] sm:$0xff]
      %v174 = vld [vmem:[%s165 + $0x10] sm:$0x33]
      %v175 = vld [vmem:[%s1] sm:$0xf]
      %v176 = vld [vmem:[%s1 + $0x4] sm:$0xf]
      %v177 = vld [vmem:[%s1 + $0x8] sm:$0xf]
      %v178 = vld [vmem:[%s1 + $0xc] sm:$0xf]
      %v179 = vld [vmem:[%s1 + $0x10] sm:$0xf]
      %v180 = vld [vmem:[%s1 + $0x14] sm:$0xf]
      %v181 = vld [vmem:[%s1 + $0x18] sm:$0xf]
      %v182 = vld [vmem:[%s1 + $0x1c] sm:$0xf]
      %v183 = vld [vmem:[%s1 + $0x20] sm:$0xf]
      %v184 = vld [vmem:[%s1 + $0x24] sm:$0xf]
      %v185 = vld [vmem:[%s1 + $0x28] sm:$0xf]
      %v186 = vld [vmem:[%s1 + $0x2c] sm:$0xf]
      %v187 = vld [vmem:[%s1 + $0x30] sm:$0xf]
      %v188 = vld [vmem:[%s1 + $0x34] sm:$0xf]
      %v189 = vld [vmem:[%s1 + $0x38] sm:$0xf]
      %v190 = vld [vmem:[%s1 + $0x3c] sm:$0xf]
      %v191 = vld [vmem:[%s1 + $0x40] sm:$0xf]
      %v192 = vld [vmem:[%s1 + $0x44] sm:$0xf]
      %v193 = vld [vmem:[%s1 + $0x48] sm:$0xf]
      %v194 = vld [vmem:[%s1 + $0x4c] sm:$0xf]
      %v195 = vld [vmem:[%s1 + $0x50] sm:$0xf]
      %v196 = vld [vmem:[%s1 + $0x54] sm:$0xf]
      %v197 = vld [vmem:[%s1 + $0x58] sm:$0xf]
      %v198 = vld [vmem:[%s1 + $0x5c] sm:$0xf]
      %v199 = vld [vmem:[%s1 + $0x60] sm:$0xf]
      %v200 = vld [vmem:[%s1 + $0x64] sm:$0xf]
      %v201 = vld [vmem:[%s1 + $0x68] sm:$0xf]
      %v202 = vld [vmem:[%s1 + $0x6c] sm:$0xf]
      %v203 = vld [vmem:[%s1 + $0x70] sm:$0xf]
      %v204 = vld [vmem:[%s1 + $0x74] sm:$0xf]
      %v205 = vld [vmem:[%s1 + $0x78] sm:$0xf]
      %v206 = vld [vmem:[%s1 + $0x7c] sm:$0xf]
      %v207 = vld [vmem:[%s165 + $0x10] sm:$0x77]
      %s208 = scalar_lea.vmem %s1, 128
      %v209 = vld [vmem:[%s208] sm:$0xf]
      %v210 = vld [vmem:[%s208 + $0x4] sm:$0xf]
      %v211 = vld [vmem:[%s208 + $0x8] sm:$0xf]
      %v212 = vld [vmem:[%s208 + $0xc] sm:$0xf]
      %v213 = vld [vmem:[%s208 + $0x10] sm:$0xf]
      %v214 = vld [vmem:[%s208 + $0x14] sm:$0xf]
      %v215 = vld [vmem:[%s208 + $0x18] sm:$0xf]
      %v216 = vld [vmem:[%s208 + $0x1c] sm:$0xf]
      %v217 = vld [vmem:[%s208 + $0x20] sm:$0xf]
      %v218 = vld [vmem:[%s208 + $0x24] sm:$0xf]
      %v219 = vld [vmem:[%s208 + $0x28] sm:$0xf]
      %v220 = vld [vmem:[%s208 + $0x2c] sm:$0xf]
      %v221 = vld [vmem:[%s208 + $0x30] sm:$0xf]
      %v222 = vld [vmem:[%s208 + $0x34] sm:$0xf]
      %v223 = vld [vmem:[%s208 + $0x38] sm:$0xf]
      %v224 = vld [vmem:[%s208 + $0x3c] sm:$0xf]
      %v225 = vld [vmem:[%s208 + $0x40] sm:$0xf]
      %v226 = vld [vmem:[%s208 + $0x44] sm:$0xf]
      %v227 = vld [vmem:[%s208 + $0x48] sm:$0xf]
      %v228 = vld [vmem:[%s208 + $0x4c] sm:$0xf]
      %v229 = vld [vmem:[%s208 + $0x50] sm:$0xf]
      %v230 = vld [vmem:[%s208 + $0x54] sm:$0xf]
      %v231 = vld [vmem:[%s208 + $0x58] sm:$0xf]
      %v232 = vld [vmem:[%s208 + $0x5c] sm:$0xf]
      %v233 = vld [vmem:[%s208 + $0x60] sm:$0xf]
      %v234 = vld [vmem:[%s208 + $0x64] sm:$0xf]
      %v235 = vld [vmem:[%s208 + $0x68] sm:$0xf]
      %v236 = vld [vmem:[%s208 + $0x6c] sm:$0xf]
      %v237 = vld [vmem:[%s208 + $0x70] sm:$0xf]
      %v238 = vld [vmem:[%s208 + $0x74] sm:$0xf]
      %v239 = vld [vmem:[%s208 + $0x78] sm:$0xf]
      %v240 = vld [vmem:[%s208 + $0x7c] sm:$0xf]
      %v244 = vunpack.c.l.b16 %v172
      %v245 = vunpack.c.h.b16 %v172
      %v246 = vunpack.c.l.b16 %v173
      %v247 = vunpack.c.h.b16 %v173
      %v248 = vunpack.c.l.b16 %v207
      %v249 = vunpack.c.h.b16 %v207
      %v250 = vpack.c.b16 %v246, %v244
      %v251 = vpack.c.b16 %v247, %v245
      %v252 = vpack.c.b16 %v248, %v248
      %v253 = vpack.c.b16 %v249, %v249
      %vm254 = vsmask.f32 7424
      %v256 = vshrl.u32 %v250, 16
      %v258 = vshll.u32 %v250, 16
      %v260 = vrot.slane %v258, 1
      %v261 = vor.u32 %v256, %v260
      %v263 = vshll.u32 %v252, 16
      %v265 = vrot.slane %v263, 1
      %v266 = vsel %vm254, %v261, %v265
      %v268 = vshrl.u32 %v251, 16
      %v270 = vshll.u32 %v251, 16
      %v272 = vrot.slane %v270, 1
      %v273 = vor.u32 %v268, %v272
      %v275 = vshll.u32 %v253, 16
      %v277 = vrot.slane %v275, 1
      %v278 = vsel %vm254, %v273, %v277
      %v279 = vshrl.u32 %v252, 16
      %v281 = vor.u32 %v279, %v265
      %v282 = vshrl.u32 %v253, 16
      %v284 = vor.u32 %v282, %v277
      %v321 = vunpack.c.l.b16 %v209
      %v322 = vunpack.c.l.b16 %v210
      %v323 = vunpack.c.l.b16 %v211
      %v324 = vunpack.c.l.b16 %v212
      %v325 = vunpack.c.l.b16 %v213
      %v326 = vunpack.c.l.b16 %v214
      %v327 = vunpack.c.l.b16 %v215
      %v328 = vunpack.c.l.b16 %v216
      %v329 = vunpack.c.l.b16 %v217
      %v330 = vunpack.c.l.b16 %v218
      %v331 = vunpack.c.l.b16 %v219
      %v332 = vunpack.c.l.b16 %v220
      %v333 = vunpack.c.l.b16 %v221
      %v334 = vunpack.c.l.b16 %v222
      %v335 = vunpack.c.l.b16 %v223
      %v336 = vunpack.c.l.b16 %v224
      %v337 = vunpack.c.l.b16 %v225
      %v338 = vunpack.c.l.b16 %v226
      %v339 = vunpack.c.l.b16 %v227
      %v340 = vunpack.c.l.b16 %v228
      %v341 = vunpack.c.l.b16 %v229
      %v342 = vunpack.c.l.b16 %v230
      %v343 = vunpack.c.l.b16 %v231
      %v344 = vunpack.c.l.b16 %v232
      %v345 = vunpack.c.l.b16 %v233
      %v346 = vunpack.c.l.b16 %v234
      %v347 = vunpack.c.l.b16 %v235
      %v348 = vunpack.c.l.b16 %v236
      %v349 = vunpack.c.l.b16 %v237
      %v350 = vunpack.c.l.b16 %v238
      %v351 = vunpack.c.l.b16 %v239
      %v352 = vunpack.c.l.b16 %v240
      %v353 = vpack.c.b16 %v322, %v321
      %v354 = vpack.c.b16 %v324, %v323
      %v355 = vpack.c.b16 %v326, %v325
      %v356 = vpack.c.b16 %v328, %v327
      %v357 = vpack.c.b16 %v330, %v329
      %v358 = vpack.c.b16 %v332, %v331
      %v359 = vpack.c.b16 %v334, %v333
      %v360 = vpack.c.b16 %v336, %v335
      %v361 = vpack.c.b16 %v338, %v337
      %v362 = vpack.c.b16 %v340, %v339
      %v363 = vpack.c.b16 %v342, %v341
      %v364 = vpack.c.b16 %v344, %v343
      %v365 = vpack.c.b16 %v346, %v345
      %v366 = vpack.c.b16 %v348, %v347
      %v367 = vpack.c.b16 %v350, %v349
      %v368 = vpack.c.b16 %v352, %v351
      %385 = vmatprep.subr.bf16.mxu0 0
      %386 = vmatpush1.bf16.msra.mxu0 %v353
      %387 = vmatprep.subr.bf16.mxu0 0
      %388 = vmatpush1.bf16.msra.mxu0 %v354
      %389 = vmatprep.subr.bf16.mxu0 0
      %390 = vmatpush1.bf16.msra.mxu0 %v355
      %391 = vmatprep.subr.bf16.mxu0 0
      %392 = vmatpush1.bf16.msra.mxu0 %v356
      %393 = vmatprep.subr.bf16.mxu0 0
      %394 = vmatpush1.bf16.msra.mxu0 %v357
      %395 = vmatprep.subr.bf16.mxu0 0
      %396 = vmatpush1.bf16.msra.mxu0 %v358
      %397 = vmatprep.subr.bf16.mxu0 0
      %398 = vmatpush1.bf16.msra.mxu0 %v359
      %399 = vmatprep.subr.bf16.mxu0 0
      %400 = vmatpush1.bf16.msra.mxu0 %v360
      %401 = vmatprep.subr.bf16.mxu0 0
      %402 = vmatpush1.bf16.msra.mxu0 %v361
      %403 = vmatprep.subr.bf16.mxu0 0
      %404 = vmatpush1.bf16.msra.mxu0 %v362
      %405 = vmatprep.subr.bf16.mxu0 0
      %406 = vmatpush1.bf16.msra.mxu0 %v363
      %407 = vmatprep.subr.bf16.mxu0 0
      %408 = vmatpush1.bf16.msra.mxu0 %v364
      %409 = vmatprep.subr.bf16.mxu0 0
      %410 = vmatpush1.bf16.msra.mxu0 %v365
      %411 = vmatprep.subr.bf16.mxu0 0
      %412 = vmatpush1.bf16.msra.mxu0 %v366
      %413 = vmatprep.subr.bf16.mxu0 0
      %414 = vmatpush1.bf16.msra.mxu0 %v367
      %415 = vmatprep.subr.bf16.mxu0 0
      %416 = vmatpush1.bf16.msra.mxu0 %v368
      %417 = vmatprep.mubr.bf16.mxu0 %v278
      %418 = vmatmul.mubr.bf16.gmra.mrb[0].mxu0 %v266
      %v419 = vpop.f32.mrb[0].mxu0
      %v420 = vadd.f32 0.0, %v419
      %v421 = vpop.f32.mrb[0].mxu0
      %v422 = vpop.f32.mrb[0].mxu0
      %v423 = vadd.f32 0.0, %v422
      %v424 = vpop.f32.mrb[0].mxu0
      %425 = vmatprep.mubr.bf16.mxu0 %v284
      %426 = vmatmul.mubr.bf16.gmra.mrb[0].mxu0 %v281
      %v427 = vpop.f32.mrb[0].mxu0
      %v428 = vadd.f32 0.0, %v427
      %v429 = vpop.f32.mrb[0].mxu0
      %v430 = vpop.f32.mrb[0].mxu0
      %v431 = vpop.f32.mrb[0].mxu0
      %432 = vdwg.mxu0
      %v434 = vunpack.c.l.b16 %v174
      %v435 = vunpack.c.h.b16 %v174
      %v436 = vpack.c.b16 %v434, %v434
      %v437 = vpack.c.b16 %v435, %v435
      %v474 = vunpack.c.l.b16 %v175
      %v475 = vunpack.c.l.b16 %v176
      %v476 = vunpack.c.l.b16 %v177
      %v477 = vunpack.c.l.b16 %v178
      %v478 = vunpack.c.l.b16 %v179
      %v479 = vunpack.c.l.b16 %v180
      %v480 = vunpack.c.l.b16 %v181
      %v481 = vunpack.c.l.b16 %v182
      %v482 = vunpack.c.l.b16 %v183
      %v483 = vunpack.c.l.b16 %v184
      %v484 = vunpack.c.l.b16 %v185
      %v485 = vunpack.c.l.b16 %v186
      %v486 = vunpack.c.l.b16 %v187
      %v487 = vunpack.c.l.b16 %v188
      %v488 = vunpack.c.l.b16 %v189
      %v489 = vunpack.c.l.b16 %v190
      %v490 = vunpack.c.l.b16 %v191
      %v491 = vunpack.c.l.b16 %v192
      %v492 = vunpack.c.l.b16 %v193
      %v493 = vunpack.c.l.b16 %v194
      %v494 = vunpack.c.l.b16 %v195
      %v495 = vunpack.c.l.b16 %v196
      %v496 = vunpack.c.l.b16 %v197
      %v497 = vunpack.c.l.b16 %v198
      %v498 = vunpack.c.l.b16 %v199
      %v499 = vunpack.c.l.b16 %v200
      %v500 = vunpack.c.l.b16 %v201
      %v501 = vunpack.c.l.b16 %v202
      %v502 = vunpack.c.l.b16 %v203
      %v503 = vunpack.c.l.b16 %v204
      %v504 = vunpack.c.l.b16 %v205
      %v505 = vunpack.c.l.b16 %v206
      %v506 = vpack.c.b16 %v475, %v474
      %v507 = vpack.c.b16 %v477, %v476
      %v508 = vpack.c.b16 %v479, %v478
      %v509 = vpack.c.b16 %v481, %v480
      %v510 = vpack.c.b16 %v483, %v482
      %v511 = vpack.c.b16 %v485, %v484
      %v512 = vpack.c.b16 %v487, %v486
      %v513 = vpack.c.b16 %v489, %v488
      %v514 = vpack.c.b16 %v491, %v490
      %v515 = vpack.c.b16 %v493, %v492
      %v516 = vpack.c.b16 %v495, %v494
      %v517 = vpack.c.b16 %v497, %v496
      %v518 = vpack.c.b16 %v499, %v498
      %v519 = vpack.c.b16 %v501, %v500
      %v520 = vpack.c.b16 %v503, %v502
      %v521 = vpack.c.b16 %v505, %v504
      %538 = vmatprep.subr.bf16.mxu0 0
      %539 = vmatpush1.bf16.msra.mxu0 %v506
      %540 = vmatprep.subr.bf16.mxu0 0
      %541 = vmatpush1.bf16.msra.mxu0 %v507
      %542 = vmatprep.subr.bf16.mxu0 0
      %543 = vmatpush1.bf16.msra.mxu0 %v508
      %544 = vmatprep.subr.bf16.mxu0 0
      %545 = vmatpush1.bf16.msra.mxu0 %v509
      %546 = vmatprep.subr.bf16.mxu0 0
      %547 = vmatpush1.bf16.msra.mxu0 %v510
      %548 = vmatprep.subr.bf16.mxu0 0
      %549 = vmatpush1.bf16.msra.mxu0 %v511
      %550 = vmatprep.subr.bf16.mxu0 0
      %551 = vmatpush1.bf16.msra.mxu0 %v512
      %552 = vmatprep.subr.bf16.mxu0 0
      %553 = vmatpush1.bf16.msra.mxu0 %v513
      %554 = vmatprep.subr.bf16.mxu0 0
      %555 = vmatpush1.bf16.msra.mxu0 %v514
      %556 = vmatprep.subr.bf16.mxu0 0
      %557 = vmatpush1.bf16.msra.mxu0 %v515
      %558 = vmatprep.subr.bf16.mxu0 0
      %559 = vmatpush1.bf16.msra.mxu0 %v516
      %560 = vmatprep.subr.bf16.mxu0 0
      %561 = vmatpush1.bf16.msra.mxu0 %v517
      %562 = vmatprep.subr.bf16.mxu0 0
      %563 = vmatpush1.bf16.msra.mxu0 %v518
      %564 = vmatprep.subr.bf16.mxu0 0
      %565 = vmatpush1.bf16.msra.mxu0 %v519
      %566 = vmatprep.subr.bf16.mxu0 0
      %567 = vmatpush1.bf16.msra.mxu0 %v520
      %568 = vmatprep.subr.bf16.mxu0 0
      %569 = vmatpush1.bf16.msra.mxu0 %v521
      %570 = vmatprep.mubr.bf16.mxu0 %v251
      %571 = vmatmul.mubr.bf16.gmra.mrb[0].mxu0 %v250
      %v572 = vpop.f32.mrb[0].mxu0
      %v573 = vadd.f32 %v420, %v572
      %v574 = vpop.f32.mrb[0].mxu0
      %v575 = vpop.f32.mrb[0].mxu0
      %v576 = vadd.f32 %v423, %v575
      %v577 = vpop.f32.mrb[0].mxu0
      %578 = vmatprep.mubr.bf16.mxu0 %v437
      %579 = vmatmul.mubr.bf16.gmra.mrb[0].mxu0 %v436
      %v580 = vpop.f32.mrb[0].mxu0
      %v581 = vadd.f32 %v428, %v580
      %v582 = vpop.f32.mrb[0].mxu0
      %v583 = vpop.f32.mrb[0].mxu0
      %v584 = vpop.f32.mrb[0].mxu0
      %585 = vdwg.mxu0
      %v586 = vld [vmem:[%s165] sm:$0xcc]
      %v587 = vld [vmem:[%s165 + $0x8] sm:$0xff]
      %v588 = vld [vmem:[%s165 + $0x10] sm:$0xff]
      %v589 = vld [vmem:[%s165 + $0x18] sm:$0x11]
      %s590 = scalar_lea.vmem %s1, 256
      %v591 = vld [vmem:[%s590] sm:$0xf]
      %v592 = vld [vmem:[%s590 + $0x4] sm:$0xf]
      %v593 = vld [vmem:[%s590 + $0x8] sm:$0xf]
      %v594 = vld [vmem:[%s590 + $0xc] sm:$0xf]
      %v595 = vld [vmem:[%s590 + $0x10] sm:$0xf]
      %v596 = vld [vmem:[%s590 + $0x14] sm:$0xf]
      %v597 = vld [vmem:[%s590 + $0x18] sm:$0xf]
      %v598 = vld [vmem:[%s590 + $0x1c] sm:$0xf]
      %v599 = vld [vmem:[%s590 + $0x20] sm:$0xf]
      %v600 = vld [vmem:[%s590 + $0x24] sm:$0xf]
      %v601 = vld [vmem:[%s590 + $0x28] sm:$0xf]
      %v602 = vld [vmem:[%s590 + $0x2c] sm:$0xf]
      %v603 = vld [vmem:[%s590 + $0x30] sm:$0xf]
      %v604 = vld [vmem:[%s590 + $0x34] sm:$0xf]
      %v605 = vld [vmem:[%s590 + $0x38] sm:$0xf]
      %v606 = vld [vmem:[%s590 + $0x3c] sm:$0xf]
      %v607 = vld [vmem:[%s590 + $0x40] sm:$0xf]
      %v608 = vld [vmem:[%s590 + $0x44] sm:$0xf]
      %v609 = vld [vmem:[%s590 + $0x48] sm:$0xf]
      %v610 = vld [vmem:[%s590 + $0x4c] sm:$0xf]
      %v611 = vld [vmem:[%s590 + $0x50] sm:$0xf]
      %v612 = vld [vmem:[%s590 + $0x54] sm:$0xf]
      %v613 = vld [vmem:[%s590 + $0x58] sm:$0xf]
      %v614 = vld [vmem:[%s590 + $0x5c] sm:$0xf]
      %v615 = vld [vmem:[%s590 + $0x60] sm:$0xf]
      %v616 = vld [vmem:[%s590 + $0x64] sm:$0xf]
      %v617 = vld [vmem:[%s590 + $0x68] sm:$0xf]
      %v618 = vld [vmem:[%s590 + $0x6c] sm:$0xf]
      %v619 = vld [vmem:[%s590 + $0x70] sm:$0xf]
      %v620 = vld [vmem:[%s590 + $0x74] sm:$0xf]
      %v621 = vld [vmem:[%s590 + $0x78] sm:$0xf]
      %v622 = vld [vmem:[%s590 + $0x7c] sm:$0xf]
      %v627 = vunpack.c.l.b16 %v586
      %v628 = vunpack.c.h.b16 %v586
      %v629 = vunpack.c.l.b16 %v587
      %v630 = vunpack.c.h.b16 %v587
      %v631 = vunpack.c.l.b16 %v588
      %v632 = vunpack.c.h.b16 %v588
      %v633 = vunpack.c.l.b16 %v589
      %v634 = vunpack.c.h.b16 %v589
      %v635 = vpack.c.b16 %v629, %v627
      %v636 = vpack.c.b16 %v630, %v628
      %v637 = vpack.c.b16 %v633, %v631
      %v638 = vpack.c.b16 %v634, %v632
      %vm639 = vsmask.f32 5376
      %v641 = vshrl.u32 %v635, 16
      %v643 = vrot.slane %v641, 2
      %v644 = vshll.u32 %v635, 16
      %v646 = vrot.slane %v644, 3
      %v647 = vor.u32 %v643, %v646
      %v649 = vshrl.u32 %v637, 16
      %v651 = vrot.slane %v649, 2
      %v652 = vshll.u32 %v637, 16
      %v654 = vrot.slane %v652, 3
      %v655 = vor.u32 %v651, %v654
      %v656 = vsel %vm639, %v647, %v655
      %v658 = vshrl.u32 %v636, 16
      %v660 = vrot.slane %v658, 2
      %v661 = vshll.u32 %v636, 16
      %v663 = vrot.slane %v661, 3
      %v664 = vor.u32 %v660, %v663
      %v666 = vshrl.u32 %v638, 16
      %v668 = vrot.slane %v666, 2
      %v669 = vshll.u32 %v638, 16
      %v671 = vrot.slane %v669, 3
      %v672 = vor.u32 %v668, %v671
      %v673 = vsel %vm639, %v664, %v672
      %v710 = vunpack.c.l.b16 %v591
      %v711 = vunpack.c.l.b16 %v592
      %v712 = vunpack.c.l.b16 %v593
      %v713 = vunpack.c.l.b16 %v594
      %v714 = vunpack.c.l.b16 %v595
      %v715 = vunpack.c.l.b16 %v596
      %v716 = vunpack.c.l.b16 %v597
      %v717 = vunpack.c.l.b16 %v598
      %v718 = vunpack.c.l.b16 %v599
      %v719 = vunpack.c.l.b16 %v600
      %v720 = vunpack.c.l.b16 %v601
      %v721 = vunpack.c.l.b16 %v602
      %v722 = vunpack.c.l.b16 %v603
      %v723 = vunpack.c.l.b16 %v604
      %v724 = vunpack.c.l.b16 %v605
      %v725 = vunpack.c.l.b16 %v606
      %v726 = vunpack.c.l.b16 %v607
      %v727 = vunpack.c.l.b16 %v608
      %v728 = vunpack.c.l.b16 %v609
      %v729 = vunpack.c.l.b16 %v610
      %v730 = vunpack.c.l.b16 %v611
      %v731 = vunpack.c.l.b16 %v612
      %v732 = vunpack.c.l.b16 %v613
      %v733 = vunpack.c.l.b16 %v614
      %v734 = vunpack.c.l.b16 %v615
      %v735 = vunpack.c.l.b16 %v616
      %v736 = vunpack.c.l.b16 %v617
      %v737 = vunpack.c.l.b16 %v618
      %v738 = vunpack.c.l.b16 %v619
      %v739 = vunpack.c.l.b16 %v620
      %v740 = vunpack.c.l.b16 %v621
      %v741 = vunpack.c.l.b16 %v622
      %v742 = vpack.c.b16 %v711, %v710
      %v743 = vpack.c.b16 %v713, %v712
      %v744 = vpack.c.b16 %v715, %v714
      %v745 = vpack.c.b16 %v717, %v716
      %v746 = vpack.c.b16 %v719, %v718
      %v747 = vpack.c.b16 %v721, %v720
      %v748 = vpack.c.b16 %v723, %v722
      %v749 = vpack.c.b16 %v725, %v724
      %v750 = vpack.c.b16 %v727, %v726
      %v751 = vpack.c.b16 %v729, %v728
      %v752 = vpack.c.b16 %v731, %v730
      %v753 = vpack.c.b16 %v733, %v732
      %v754 = vpack.c.b16 %v735, %v734
      %v755 = vpack.c.b16 %v737, %v736
      %v756 = vpack.c.b16 %v739, %v738
      %v757 = vpack.c.b16 %v741, %v740
      %774 = vmatprep.subr.bf16.mxu0 0
      %775 = vmatpush1.bf16.msra.mxu0 %v742
      %776 = vmatprep.subr.bf16.mxu0 0
      %777 = vmatpush1.bf16.msra.mxu0 %v743
      %778 = vmatprep.subr.bf16.mxu0 0
      %779 = vmatpush1.bf16.msra.mxu0 %v744
      %780 = vmatprep.subr.bf16.mxu0 0
      %781 = vmatpush1.bf16.msra.mxu0 %v745
      %782 = vmatprep.subr.bf16.mxu0 0
      %783 = vmatpush1.bf16.msra.mxu0 %v746
      %784 = vmatprep.subr.bf16.mxu0 0
      %785 = vmatpush1.bf16.msra.mxu0 %v747
      %786 = vmatprep.subr.bf16.mxu0 0
      %787 = vmatpush1.bf16.msra.mxu0 %v748
      %788 = vmatprep.subr.bf16.mxu0 0
      %789 = vmatpush1.bf16.msra.mxu0 %v749
      %790 = vmatprep.subr.bf16.mxu0 0
      %791 = vmatpush1.bf16.msra.mxu0 %v750
      %792 = vmatprep.subr.bf16.mxu0 0
      %793 = vmatpush1.bf16.msra.mxu0 %v751
      %794 = vmatprep.subr.bf16.mxu0 0
      %795 = vmatpush1.bf16.msra.mxu0 %v752
      %796 = vmatprep.subr.bf16.mxu0 0
      %797 = vmatpush1.bf16.msra.mxu0 %v753
      %798 = vmatprep.subr.bf16.mxu0 0
      %799 = vmatpush1.bf16.msra.mxu0 %v754
      %800 = vmatprep.subr.bf16.mxu0 0
      %801 = vmatpush1.bf16.msra.mxu0 %v755
      %802 = vmatprep.subr.bf16.mxu0 0
      %803 = vmatpush1.bf16.msra.mxu0 %v756
      %804 = vmatprep.subr.bf16.mxu0 0
      %805 = vmatpush1.bf16.msra.mxu0 %v757
      %806 = vmatprep.mubr.bf16.mxu0 %v673
      %807 = vmatmul.mubr.bf16.gmra.mrb[0].mxu0 %v656
      %v808 = vpop.f32.mrb[0].mxu0
      %v809 = vadd.f32 0.0, %v808
      %v810 = vpop.f32.mrb[0].mxu0
      %v811 = vpop.f32.mrb[0].mxu0
      %v812 = vadd.f32 0.0, %v811
      %v813 = vpop.f32.mrb[0].mxu0
      %814 = vmatprep.mubr.bf16.mxu0 %v672
      %815 = vmatmul.mubr.bf16.gmra.mrb[0].mxu0 %v655
      %v816 = vpop.f32.mrb[0].mxu0
      %v817 = vadd.f32 0.0, %v816
      %v818 = vpop.f32.mrb[0].mxu0
      %v819 = vpop.f32.mrb[0].mxu0
      %v820 = vpop.f32.mrb[0].mxu0
      %821 = vdwg.mxu0
      %v822 = vadd.f32 %v573, %v809
      %v823 = vadd.f32 %v576, %v812
      %v824 = vadd.f32 %v581, %v817
      %v825 = vld [vmem:[%s165] sm:$0x88]
      %s826 = scalar_lea.vmem %s1, 384
      %v827 = vld [vmem:[%s826] sm:$0xf]
      %v828 = vld [vmem:[%s826 + $0x4] sm:$0xf]
      %v829 = vld [vmem:[%s826 + $0x8] sm:$0xf]
      %v830 = vld [vmem:[%s826 + $0xc] sm:$0xf]
      %v831 = vld [vmem:[%s826 + $0x10] sm:$0xf]
      %v832 = vld [vmem:[%s826 + $0x14] sm:$0xf]
      %v833 = vld [vmem:[%s826 + $0x18] sm:$0xf]
      %v834 = vld [vmem:[%s826 + $0x1c] sm:$0xf]
      %v835 = vld [vmem:[%s826 + $0x20] sm:$0xf]
      %v836 = vld [vmem:[%s826 + $0x24] sm:$0xf]
      %v837 = vld [vmem:[%s826 + $0x28] sm:$0xf]
      %v838 = vld [vmem:[%s826 + $0x2c] sm:$0xf]
      %v839 = vld [vmem:[%s826 + $0x30] sm:$0xf]
      %v840 = vld [vmem:[%s826 + $0x34] sm:$0xf]
      %v841 = vld [vmem:[%s826 + $0x38] sm:$0xf]
      %v842 = vld [vmem:[%s826 + $0x3c] sm:$0xf]
      %v843 = vld [vmem:[%s826 + $0x40] sm:$0xf]
      %v844 = vld [vmem:[%s826 + $0x44] sm:$0xf]
      %v845 = vld [vmem:[%s826 + $0x48] sm:$0xf]
      %v846 = vld [vmem:[%s826 + $0x4c] sm:$0xf]
      %v847 = vld [vmem:[%s826 + $0x50] sm:$0xf]
      %v848 = vld [vmem:[%s826 + $0x54] sm:$0xf]
      %v849 = vld [vmem:[%s826 + $0x58] sm:$0xf]
      %v850 = vld [vmem:[%s826 + $0x5c] sm:$0xf]
      %v851 = vld [vmem:[%s826 + $0x60] sm:$0xf]
      %v852 = vld [vmem:[%s826 + $0x64] sm:$0xf]
      %v853 = vld [vmem:[%s826 + $0x68] sm:$0xf]
      %v854 = vld [vmem:[%s826 + $0x6c] sm:$0xf]
      %v855 = vld [vmem:[%s826 + $0x70] sm:$0xf]
      %v856 = vld [vmem:[%s826 + $0x74] sm:$0xf]
      %v857 = vld [vmem:[%s826 + $0x78] sm:$0xf]
      %v858 = vld [vmem:[%s826 + $0x7c] sm:$0xf]
      %v860 = vunpack.c.l.b16 %v825
      %v861 = vunpack.c.h.b16 %v825
      %v862 = vpack.c.b16 %v629, %v860
      %v863 = vpack.c.b16 %v630, %v861
      %vm864 = vcmask 1044480
      %v865 = vrot.slane %v862, 3
      %v866 = vrot.slane %v637, 3
      %v867 = vsel %vm864, %v865, %v866
      %v868 = vrot.slane %v863, 3
      %v869 = vrot.slane %v638, 3
      %v870 = vsel %vm864, %v868, %v869
      %v907 = vunpack.c.l.b16 %v827
      %v908 = vunpack.c.l.b16 %v828
      %v909 = vunpack.c.l.b16 %v829
      %v910 = vunpack.c.l.b16 %v830
      %v911 = vunpack.c.l.b16 %v831
      %v912 = vunpack.c.l.b16 %v832
      %v913 = vunpack.c.l.b16 %v833
      %v914 = vunpack.c.l.b16 %v834
      %v915 = vunpack.c.l.b16 %v835
      %v916 = vunpack.c.l.b16 %v836
      %v917 = vunpack.c.l.b16 %v837
      %v918 = vunpack.c.l.b16 %v838
      %v919 = vunpack.c.l.b16 %v839
      %v920 = vunpack.c.l.b16 %v840
      %v921 = vunpack.c.l.b16 %v841
      %v922 = vunpack.c.l.b16 %v842
      %v923 = vunpack.c.l.b16 %v843
      %v924 = vunpack.c.l.b16 %v844
      %v925 = vunpack.c.l.b16 %v845
      %v926 = vunpack.c.l.b16 %v846
      %v927 = vunpack.c.l.b16 %v847
      %v928 = vunpack.c.l.b16 %v848
      %v929 = vunpack.c.l.b16 %v849
      %v930 = vunpack.c.l.b16 %v850
      %v931 = vunpack.c.l.b16 %v851
      %v932 = vunpack.c.l.b16 %v852
      %v933 = vunpack.c.l.b16 %v853
      %v934 = vunpack.c.l.b16 %v854
      %v935 = vunpack.c.l.b16 %v855
      %v936 = vunpack.c.l.b16 %v856
      %v937 = vunpack.c.l.b16 %v857
      %v938 = vunpack.c.l.b16 %v858
      %v939 = vpack.c.b16 %v908, %v907
      %v940 = vpack.c.b16 %v910, %v909
      %v941 = vpack.c.b16 %v912, %v911
      %v942 = vpack.c.b16 %v914, %v913
      %v943 = vpack.c.b16 %v916, %v915
      %v944 = vpack.c.b16 %v918, %v917
      %v945 = vpack.c.b16 %v920, %v919
      %v946 = vpack.c.b16 %v922, %v921
      %v947 = vpack.c.b16 %v924, %v923
      %v948 = vpack.c.b16 %v926, %v925
      %v949 = vpack.c.b16 %v928, %v927
      %v950 = vpack.c.b16 %v930, %v929
      %v951 = vpack.c.b16 %v932, %v931
      %v952 = vpack.c.b16 %v934, %v933
      %v953 = vpack.c.b16 %v936, %v935
      %v954 = vpack.c.b16 %v938, %v937
      %971 = vmatprep.subr.bf16.mxu0 0
      %972 = vmatpush1.bf16.msra.mxu0 %v939
      %973 = vmatprep.subr.bf16.mxu0 0
      %974 = vmatpush1.bf16.msra.mxu0 %v940
      %975 = vmatprep.subr.bf16.mxu0 0
      %976 = vmatpush1.bf16.msra.mxu0 %v941
      %977 = vmatprep.subr.bf16.mxu0 0
      %978 = vmatpush1.bf16.msra.mxu0 %v942
      %979 = vmatprep.subr.bf16.mxu0 0
      %980 = vmatpush1.bf16.msra.mxu0 %v943
      %981 = vmatprep.subr.bf16.mxu0 0
      %982 = vmatpush1.bf16.msra.mxu0 %v944
      %983 = vmatprep.subr.bf16.mxu0 0
      %984 = vmatpush1.bf16.msra.mxu0 %v945
      %985 = vmatprep.subr.bf16.mxu0 0
      %986 = vmatpush1.bf16.msra.mxu0 %v946
      %987 = vmatprep.subr.bf16.mxu0 0
      %988 = vmatpush1.bf16.msra.mxu0 %v947
      %989 = vmatprep.subr.bf16.mxu0 0
      %990 = vmatpush1.bf16.msra.mxu0 %v948
      %991 = vmatprep.subr.bf16.mxu0 0
      %992 = vmatpush1.bf16.msra.mxu0 %v949
      %993 = vmatprep.subr.bf16.mxu0 0
      %994 = vmatpush1.bf16.msra.mxu0 %v950
      %995 = vmatprep.subr.bf16.mxu0 0
      %996 = vmatpush1.bf16.msra.mxu0 %v951
      %997 = vmatprep.subr.bf16.mxu0 0
      %998 = vmatpush1.bf16.msra.mxu0 %v952
      %999 = vmatprep.subr.bf16.mxu0 0
      %1000 = vmatpush1.bf16.msra.mxu0 %v953
      %1001 = vmatprep.subr.bf16.mxu0 0
      %1002 = vmatpush1.bf16.msra.mxu0 %v954
      %1003 = vmatprep.mubr.bf16.mxu0 %v870
      %1004 = vmatmul.mubr.bf16.gmra.mrb[0].mxu0 %v867
      %v1005 = vpop.f32.mrb[0].mxu0
      %v1006 = vadd.f32 0.0, %v1005
      %v1007 = vpop.f32.mrb[0].mxu0
      %v1008 = vpop.f32.mrb[0].mxu0
      %v1009 = vadd.f32 0.0, %v1008
      %v1010 = vpop.f32.mrb[0].mxu0
      %1011 = vmatprep.mubr.bf16.mxu0 %v869
      %1012 = vmatmul.mubr.bf16.gmra.mrb[0].mxu0 %v866
      %v1013 = vpop.f32.mrb[0].mxu0
      %v1014 = vadd.f32 0.0, %v1013
      %v1015 = vpop.f32.mrb[0].mxu0
      %v1016 = vpop.f32.mrb[0].mxu0
      %v1017 = vpop.f32.mrb[0].mxu0
      %1018 = vdwg.mxu0
      %v1019 = vadd.f32 %v822, %v1006
      %v1020 = vadd.f32 %v823, %v1009
      %v1021 = vadd.f32 %v824, %v1014
      %v1022 = vld [vmem:[%s2] sm:$0x1]
      %v1024 = vlaneseq
      %v1025 = vshrl.u32 %v1024, 7
      %v1026 = vsub.s32 0, %v1025
      %v1027 = vrot.slane %v1022, %v1026
      %v1029 = vadd.f32 %v1019, %v1027
      %v1030 = vadd.f32 %v1020, %v1027
      %v1031 = vadd.f32 %v1021, %v1027
      %v1032 = vmax.f32 %v1029, 0.0
      %v1033 = vmax.f32 %v1030, 0.0
      %v1034 = vmax.f32 %v1031, 0.0
      %v1035 = vpack.c.bf16 %v1033, %v1032
      %v1036 = vpack.c.bf16 %v1034, %v1034
      %v1039 = vunpack.c.l.b16 %v1035
      %v1040 = vunpack.c.h.b16 %v1035
      %v1041 = vunpack.c.l.b16 %v1036
      %v1042 = vpack.c.b16 %v1039, %v1039
      %v1043 = vpack.c.b16 %v1040, %v1040
      %v1044 = vpack.c.b16 %v1041, %v1041
      %1048 = vst [vmem:[%s170] sm:$0xf] %v1042
      %1049 = vst [vmem:[%s170 + $0x4] sm:$0xf] %v1043
      %1050 = vst [vmem:[%s170 + $0x8] sm:$0x3] %v1044
      %p1051 = scmp.lt.s32.totalorder %s14, 1
      %s1052 = scalar_select %p1051, %s14, 1
      %s1053 = smul.addr %s1052, 3
      %s1054 = smul.addr %s1053, 4
      %s1055 = scalar_lea.vmem %s3, %s1054
      // Predicated region
      $region33: #{vae_encoder_forward.7} parent=31 // pred_check
        %p1056 = pneg %p100
      $region34: #{vae_encoder_forward.7} parent=31 // pred_check_branch
        %1058 = sbr.rel (%p1056) target = $region36
      $region35: #{vae_encoder_forward.7} parent=31 // pred_region
        _
      $region36: #{vae_encoder_forward.7} parent=31 // pred_fallthru
        _
    $region32: #{vae_encoder_forward.7} parent=5 // pred_fallthru
      _
    %p1059 = scmp.le.s32.totalorder 2, %s9
    // Predicated region
    $region37: #{vae_encoder_forward.7} parent=5 // pred_check
      %p1060 = pneg %p1059
    $region38: #{vae_encoder_forward.7} parent=5 // pred_check_branch
      %1062 = sbr.rel (%p1060) target = $region40
    $region39: #{vae_encoder_forward.7} parent=5 // pred_region
      %s1063 = ssub.s32 %s9, 2
      // Predicated region
      $region41: #{vae_encoder_forward.7} parent=39 // pred_check
        %p1064 = pneg %p106
      $region42: #{vae_encoder_forward.7} parent=39 // pred_check_branch
        %1066 = sbr.rel (%p1064) target = $region44
      $region43: #{vae_encoder_forward.7} parent=39 // pred_region
        %p1067 = scmp.lt.s32.totalorder %s15, 1
        %s1068 = scalar_select %p1067, %s15, 1
        %s1069 = smul.addr %s1068, 3
        %s1070 = smul.addr %s1069, 4
        %s1071 = scalar_lea.vmem %s3, %s1070
      $region44: #{vae_encoder_forward.7} parent=39 // pred_fallthru
        _
    $region40: #{vae_encoder_forward.7} parent=5 // pred_fallthru
      _
  $region6: #{vae_encoder_forward.7} parent=0 // loop_footer
    %s13 = sadd.s32 1, %s9
  $region7: #{vae_encoder_forward.7} parent=0 // loop_footer_branch
    %8 = sbr.rel target = $region3
  $region8: #{vae_encoder_forward.7} parent=0 // loop_exit
    _

// kernel: vae_encoder_forward.9
$region0: #{vae_encoder_forward.9}
  #allocation0 [shape = 'u32[]', space=smem, size = 0x4, offset = 0x4, fixed_abs, tag = 'smem constant byte address 0x4 - core index']
  #allocation1 [shape = 'u32[144,128]{1,0:T(1,128)}', space=vmem, size = 0x12000, scoped, tag = 'internal scratch']
  #allocation2 [shape = 'f32[2,64]{1,0:T(2,128)}', space=vmem, size = 0x400, scoped, tag = 'scratch operand']
  %s0 = inlined_call_operand.vmem [shape: bf16[2,2048], index: 0, kind: input, shape index: {}]
  %s1 = inlined_call_operand.vmem [shape: bf16[2048,64], index: 1, kind: input, shape index: {}]
  %s2 = inlined_call_operand.vmem [shape: f32[1,64], index: 2, kind: input, shape index: {}]
  %s3 = inlined_call_operand.vmem [shape: f32[2,64], index: 3, kind: output, shape index: {}]
  %s4 = sld [smem:[#allocation0]]
  $region30: #{vae_encoder_forward.9} parent=0
    _
  %s6 = ssub.s32 1, %s4
  %s7 = scalar_select 0, %s6, %s4
  // Predicated region
  $region2: #{vae_encoder_forward.9} parent=0 // pred_check
    _
  $region3: #{vae_encoder_forward.9} parent=0 // pred_check_branch
    %9 = sbr.rel (0) target = $region5
  $region4: #{vae_encoder_forward.9} parent=0 // pred_region
    _
  $region5: #{vae_encoder_forward.9} parent=0 // pred_fallthru
    _
  // Predicated region
  $region6: #{vae_encoder_forward.9} parent=0 // pred_check
    _
  $region7: #{vae_encoder_forward.9} parent=0 // pred_check_branch
    %11 = sbr.rel (0) target = $region9
  $region8: #{vae_encoder_forward.9} parent=0 // pred_region
    _
  $region9: #{vae_encoder_forward.9} parent=0 // pred_fallthru
    _
  // Predicated region
  $region10: #{vae_encoder_forward.9} parent=0 // pred_check
    _
  $region11: #{vae_encoder_forward.9} parent=0 // pred_check_branch
    %13 = sbr.rel (0) target = $region13
  $region12: #{vae_encoder_forward.9} parent=0 // pred_region
    _
  $region13: #{vae_encoder_forward.9} parent=0 // pred_fallthru
    _
  %p15 = scmp.eq.s32.totalorder 0, 0
  // Predicated region
  $region14: #{vae_encoder_forward.9} parent=0 // pred_check
    %p16 = pneg %p15
  $region15: #{vae_encoder_forward.9} parent=0 // pred_check_branch
    %18 = sbr.rel (%p16) target = $region17
  $region16: #{vae_encoder_forward.9} parent=0 // pred_region
    %vm19 = vcmask 517120
    %20 = vst.msk [vmem:[#allocation2] sm:$0x3] %vm19, 0.0
  $region17: #{vae_encoder_forward.9} parent=0 // pred_fallthru
    _
  %v21 = vld [vmem:[#allocation2] sm:$0x3]
  %v22 = vld [vmem:[%s0] sm:$0xff]
  %v23 = vld [vmem:[%s0 + $0x8] sm:$0xff]
  %v24 = vld [vmem:[%s1] sm:$0xf]
  %v25 = vld [vmem:[%s1 + $0x4] sm:$0xf]
  %v26 = vld [vmem:[%s1 + $0x8] sm:$0xf]
  %v27 = vld [vmem:[%s1 + $0xc] sm:$0xf]
  %v28 = vld [vmem:[%s1 + $0x10] sm:$0xf]
  %v29 = vld [vmem:[%s1 + $0x14] sm:$0xf]
  %v30 = vld [vmem:[%s1 + $0x18] sm:$0xf]
  %v31 = vld [vmem:[%s1 + $0x1c] sm:$0xf]
  %v32 = vld [vmem:[%s1 + $0x20] sm:$0xf]
  %v33 = vld [vmem:[%s1 + $0x24] sm:$0xf]
  %v34 = vld [vmem:[%s1 + $0x28] sm:$0xf]
  %v35 = vld [vmem:[%s1 + $0x2c] sm:$0xf]
  %v36 = vld [vmem:[%s1 + $0x30] sm:$0xf]
  %v37 = vld [vmem:[%s1 + $0x34] sm:$0xf]
  %v38 = vld [vmem:[%s1 + $0x38] sm:$0xf]
  %v39 = vld [vmem:[%s1 + $0x3c] sm:$0xf]
  %v40 = vld [vmem:[%s1 + $0x40] sm:$0xf]
  %v41 = vld [vmem:[%s1 + $0x44] sm:$0xf]
  %v42 = vld [vmem:[%s1 + $0x48] sm:$0xf]
  %v43 = vld [vmem:[%s1 + $0x4c] sm:$0xf]
  %v44 = vld [vmem:[%s1 + $0x50] sm:$0xf]
  %v45 = vld [vmem:[%s1 + $0x54] sm:$0xf]
  %v46 = vld [vmem:[%s1 + $0x58] sm:$0xf]
  %v47 = vld [vmem:[%s1 + $0x5c] sm:$0xf]
  %v48 = vld [vmem:[%s1 + $0x60] sm:$0xf]
  %v49 = vld [vmem:[%s1 + $0x64] sm:$0xf]
  %v50 = vld [vmem:[%s1 + $0x68] sm:$0xf]
  %v51 = vld [vmem:[%s1 + $0x6c] sm:$0xf]
  %v52 = vld [vmem:[%s1 + $0x70] sm:$0xf]
  %v53 = vld [vmem:[%s1 + $0x74] sm:$0xf]
  %v54 = vld [vmem:[%s1 + $0x78] sm:$0xf]
  %v55 = vld [vmem:[%s1 + $0x7c] sm:$0xf]
  %v56 = vld [vmem:[%s1 + $0x80] sm:$0xf]
  %v57 = vld [vmem:[%s1 + $0x84] sm:$0xf]
  %v58 = vld [vmem:[%s1 + $0x88] sm:$0xf]
  %v59 = vld [vmem:[%s1 + $0x8c] sm:$0xf]
  %v60 = vld [vmem:[%s1 + $0x90] sm:$0xf]
  %v61 = vld [vmem:[%s1 + $0x94] sm:$0xf]
  %v62 = vld [vmem:[%s1 + $0x98] sm:$0xf]
  %v63 = vld [vmem:[%s1 + $0x9c] sm:$0xf]
  %v64 = vld [vmem:[%s1 + $0xa0] sm:$0xf]
  %v65 = vld [vmem:[%s1 + $0xa4] sm:$0xf]
  %v66 = vld [vmem:[%s1 + $0xa8] sm:$0xf]
  %v67 = vld [vmem:[%s1 + $0xac] sm:$0xf]
  %v68 = vld [vmem:[%s1 + $0xb0] sm:$0xf]
  %v69 = vld [vmem:[%s1 + $0xb4] sm:$0xf]
  %v70 = vld [vmem:[%s1 + $0xb8] sm:$0xf]
  %v71 = vld [vmem:[%s1 + $0xbc] sm:$0xf]
  %v72 = vld [vmem:[%s1 + $0xc0] sm:$0xf]
  %v73 = vld [vmem:[%s1 + $0xc4] sm:$0xf]
  %v74 = vld [vmem:[%s1 + $0xc8] sm:$0xf]
  %v75 = vld [vmem:[%s1 + $0xcc] sm:$0xf]
  %v76 = vld [vmem:[%s1 + $0xd0] sm:$0xf]
  %v77 = vld [vmem:[%s1 + $0xd4] sm:$0xf]
  %v78 = vld [vmem:[%s1 + $0xd8] sm:$0xf]
  %v79 = vld [vmem:[%s1 + $0xdc] sm:$0xf]
  %v80 = vld [vmem:[%s1 + $0xe0] sm:$0xf]
  %v81 = vld [vmem:[%s1 + $0xe4] sm:$0xf]
  %v82 = vld [vmem:[%s1 + $0xe8] sm:$0xf]
  %v83 = vld [vmem:[%s1 + $0xec] sm:$0xf]
  %v84 = vld [vmem:[%s1 + $0xf0] sm:$0xf]
  %v85 = vld [vmem:[%s1 + $0xf4] sm:$0xf]
  %v86 = vld [vmem:[%s1 + $0xf8] sm:$0xf]
  %v87 = vld [vmem:[%s1 + $0xfc] sm:$0xf]
  %v88 = vld [vmem:[%s1 + $0x100] sm:$0xf]
  %v89 = vld [vmem:[%s1 + $0x104] sm:$0xf]
  %v90 = vld [vmem:[%s1 + $0x108] sm:$0xf]
  %v91 = vld [vmem:[%s1 + $0x10c] sm:$0xf]
  %v92 = vld [vmem:[%s1 + $0x110] sm:$0xf]
  %v93 = vld [vmem:[%s1 + $0x114] sm:$0xf]
  %v94 = vld [vmem:[%s1 + $0x118] sm:$0xf]
  %v95 = vld [vmem:[%s1 + $0x11c] sm:$0xf]
  %v96 = vld [vmem:[%s1 + $0x120] sm:$0xf]
  %v97 = vld [vmem:[%s1 + $0x124] sm:$0xf]
  %v98 = vld [vmem:[%s1 + $0x128] sm:$0xf]
  %v99 = vld [vmem:[%s1 + $0x12c] sm:$0xf]
  %v100 = vld [vmem:[%s1 + $0x130] sm:$0xf]
  %v101 = vld [vmem:[%s1 + $0x134] sm:$0xf]
  %v102 = vld [vmem:[%s1 + $0x138] sm:$0xf]
  %v103 = vld [vmem:[%s1 + $0x13c] sm:$0xf]
  %v104 = vld [vmem:[%s1 + $0x140] sm:$0xf]
  %v105 = vld [vmem:[%s1 + $0x144] sm:$0xf]
  %v106 = vld [vmem:[%s1 + $0x148] sm:$0xf]
  %v107 = vld [vmem:[%s1 + $0x14c] sm:$0xf]
  %v108 = vld [vmem:[%s1 + $0x150] sm:$0xf]
  %v109 = vld [vmem:[%s1 + $0x154] sm:$0xf]
  %v110 = vld [vmem:[%s1 + $0x158] sm:$0xf]
  %v111 = vld [vmem:[%s1 + $0x15c] sm:$0xf]
  %v112 = vld [vmem:[%s1 + $0x160] sm:$0xf]
  %v113 = vld [vmem:[%s1 + $0x164] sm:$0xf]
  %v114 = vld [vmem:[%s1 + $0x168] sm:$0xf]
  %v115 = vld [vmem:[%s1 + $0x16c] sm:$0xf]
  %v116 = vld [vmem:[%s1 + $0x170] sm:$0xf]
  %v117 = vld [vmem:[%s1 + $0x174] sm:$0xf]
  %v118 = vld [vmem:[%s1 + $0x178] sm:$0xf]
  %v119 = vld [vmem:[%s1 + $0x17c] sm:$0xf]
  %v120 = vld [vmem:[%s1 + $0x180] sm:$0xf]
  %v121 = vld [vmem:[%s1 + $0x184] sm:$0xf]
  %v122 = vld [vmem:[%s1 + $0x188] sm:$0xf]
  %v123 = vld [vmem:[%s1 + $0x18c] sm:$0xf]
  %v124 = vld [vmem:[%s1 + $0x190] sm:$0xf]
  %v125 = vld [vmem:[%s1 + $0x194] sm:$0xf]
  %v126 = vld [vmem:[%s1 + $0x198] sm:$0xf]
  %v127 = vld [vmem:[%s1 + $0x19c] sm:$0xf]
  %v128 = vld [vmem:[%s1 + $0x1a0] sm:$0xf]
  %v129 = vld [vmem:[%s1 + $0x1a4] sm:$0xf]
  %v130 = vld [vmem:[%s1 + $0x1a8] sm:$0xf]
  %v131 = vld [vmem:[%s1 + $0x1ac] sm:$0xf]
  %v132 = vld [vmem:[%s1 + $0x1b0] sm:$0xf]
  %v133 = vld [vmem:[%s1 + $0x1b4] sm:$0xf]
  %v134 = vld [vmem:[%s1 + $0x1b8] sm:$0xf]
  %v135 = vld [vmem:[%s1 + $0x1bc] sm:$0xf]
  %v136 = vld [vmem:[%s1 + $0x1c0] sm:$0xf]
  %v137 = vld [vmem:[%s1 + $0x1c4] sm:$0xf]
  %v138 = vld [vmem:[%s1 + $0x1c8] sm:$0xf]
  %v139 = vld [vmem:[%s1 + $0x1cc] sm:$0xf]
  %v140 = vld [vmem:[%s1 + $0x1d0] sm:$0xf]
  %v141 = vld [vmem:[%s1 + $0x1d4] sm:$0xf]
  %v142 = vld [vmem:[%s1 + $0x1d8] sm:$0xf]
  %v143 = vld [vmem:[%s1 + $0x1dc] sm:$0xf]
  %v144 = vld [vmem:[%s1 + $0x1e0] sm:$0xf]
  %v145 = vld [vmem:[%s1 + $0x1e4] sm:$0xf]
  %v146 = vld [vmem:[%s1 + $0x1e8] sm:$0xf]
  %v147 = vld [vmem:[%s1 + $0x1ec] sm:$0xf]
  %v148 = vld [vmem:[%s1 + $0x1f0] sm:$0xf]
  %v149 = vld [vmem:[%s1 + $0x1f4] sm:$0xf]
  %v150 = vld [vmem:[%s1 + $0x1f8] sm:$0xf]
  %v151 = vld [vmem:[%s1 + $0x1fc] sm:$0xf]
  %v152 = vld [vmem:[%s1 + $0x200] sm:$0xf]
  %v153 = vld [vmem:[%s1 + $0x204] sm:$0xf]
  %v154 = vld [vmem:[%s1 + $0x208] sm:$0xf]
  %v155 = vld [vmem:[%s1 + $0x20c] sm:$0xf]
  %v156 = vld [vmem:[%s1 + $0x210] sm:$0xf]
  %v157 = vld [vmem:[%s1 + $0x214] sm:$0xf]
  %v158 = vld [vmem:[%s1 + $0x218] sm:$0xf]
  %v159 = vld [vmem:[%s1 + $0x21c] sm:$0xf]
  %v160 = vld [vmem:[%s1 + $0x220] sm:$0xf]
  %v161 = vld [vmem:[%s1 + $0x224] sm:$0xf]
  %v162 = vld [vmem:[%s1 + $0x228] sm:$0xf]
  %v163 = vld [vmem:[%s1 + $0x22c] sm:$0xf]
  %v164 = vld [vmem:[%s1 + $0x230] sm:$0xf]
  %v165 = vld [vmem:[%s1 + $0x234] sm:$0xf]
  %v166 = vld [vmem:[%s1 + $0x238] sm:$0xf]
  %v167 = vld [vmem:[%s1 + $0x23c] sm:$0xf]
  %v168 = vld [vmem:[%s1 + $0x240] sm:$0xf]
  %v169 = vld [vmem:[%s1 + $0x244] sm:$0xf]
  %v170 = vld [vmem:[%s1 + $0x248] sm:$0xf]
  %v171 = vld [vmem:[%s1 + $0x24c] sm:$0xf]
  %v172 = vld [vmem:[%s1 + $0x250] sm:$0xf]
  %v173 = vld [vmem:[%s1 + $0x254] sm:$0xf]
  %v174 = vld [vmem:[%s1 + $0x258] sm:$0xf]
  %v175 = vld [vmem:[%s1 + $0x25c] sm:$0xf]
  %v176 = vld [vmem:[%s1 + $0x260] sm:$0xf]
  %v177 = vld [vmem:[%s1 + $0x264] sm:$0xf]
  %v178 = vld [vmem:[%s1 + $0x268] sm:$0xf]
  %v179 = vld [vmem:[%s1 + $0x26c] sm:$0xf]
  %v180 = vld [vmem:[%s1 + $0x270] sm:$0xf]
  %v181 = vld [vmem:[%s1 + $0x274] sm:$0xf]
  %v182 = vld [vmem:[%s1 + $0x278] sm:$0xf]
  %v183 = vld [vmem:[%s1 + $0x27c] sm:$0xf]
  %v184 = vld [vmem:[%s1 + $0x280] sm:$0xf]
  %v185 = vld [vmem:[%s1 + $0x284] sm:$0xf]
  %v186 = vld [vmem:[%s1 + $0x288] sm:$0xf]
  %v187 = vld [vmem:[%s1 + $0x28c] sm:$0xf]
  %v188 = vld [vmem:[%s1 + $0x290] sm:$0xf]
  %v189 = vld [vmem:[%s1 + $0x294] sm:$0xf]
  %v190 = vld [vmem:[%s1 + $0x298] sm:$0xf]
  %v191 = vld [vmem:[%s1 + $0x29c] sm:$0xf]
  %v192 = vld [vmem:[%s1 + $0x2a0] sm:$0xf]
  %v193 = vld [vmem:[%s1 + $0x2a4] sm:$0xf]
  %v194 = vld [vmem:[%s1 + $0x2a8] sm:$0xf]
  %v195 = vld [vmem:[%s1 + $0x2ac] sm:$0xf]
  %v196 = vld [vmem:[%s1 + $0x2b0] sm:$0xf]
  %v197 = vld [vmem:[%s1 + $0x2b4] sm:$0xf]
  %v198 = vld [vmem:[%s1 + $0x2b8] sm:$0xf]
  %v199 = vld [vmem:[%s1 + $0x2bc] sm:$0xf]
  %v200 = vld [vmem:[%s1 + $0x2c0] sm:$0xf]
  %v201 = vld [vmem:[%s1 + $0x2c4] sm:$0xf]
  %v202 = vld [vmem:[%s1 + $0x2c8] sm:$0xf]
  %v203 = vld [vmem:[%s1 + $0x2cc] sm:$0xf]
  %v204 = vld [vmem:[%s1 + $0x2d0] sm:$0xf]
  %v205 = vld [vmem:[%s1 + $0x2d4] sm:$0xf]
  %v206 = vld [vmem:[%s1 + $0x2d8] sm:$0xf]
  %v207 = vld [vmem:[%s1 + $0x2dc] sm:$0xf]
  %v208 = vld [vmem:[%s1 + $0x2e0] sm:$0xf]
  %v209 = vld [vmem:[%s1 + $0x2e4] sm:$0xf]
  %v210 = vld [vmem:[%s1 + $0x2e8] sm:$0xf]
  %v211 = vld [vmem:[%s1 + $0x2ec] sm:$0xf]
  %v212 = vld [vmem:[%s1 + $0x2f0] sm:$0xf]
  %v213 = vld [vmem:[%s1 + $0x2f4] sm:$0xf]
  %v214 = vld [vmem:[%s1 + $0x2f8] sm:$0xf]
  %v215 = vld [vmem:[%s1 + $0x2fc] sm:$0xf]
  %v216 = vld [vmem:[%s1 + $0x300] sm:$0xf]
  %v217 = vld [vmem:[%s1 + $0x304] sm:$0xf]
  %v218 = vld [vmem:[%s1 + $0x308] sm:$0xf]
  %v219 = vld [vmem:[%s1 + $0x30c] sm:$0xf]
  %v220 = vld [vmem:[%s1 + $0x310] sm:$0xf]
  %v221 = vld [vmem:[%s1 + $0x314] sm:$0xf]
  %v222 = vld [vmem:[%s1 + $0x318] sm:$0xf]
  %v223 = vld [vmem:[%s1 + $0x31c] sm:$0xf]
  %v224 = vld [vmem:[%s1 + $0x320] sm:$0xf]
  %v225 = vld [vmem:[%s1 + $0x324] sm:$0xf]
  %v226 = vld [vmem:[%s1 + $0x328] sm:$0xf]
  %v227 = vld [vmem:[%s1 + $0x32c] sm:$0xf]
  %v228 = vld [vmem:[%s1 + $0x330] sm:$0xf]
  %v229 = vld [vmem:[%s1 + $0x334] sm:$0xf]
  %v230 = vld [vmem:[%s1 + $0x338] sm:$0xf]
  %v231 = vld [vmem:[%s1 + $0x33c] sm:$0xf]
  %v232 = vld [vmem:[%s1 + $0x340] sm:$0xf]
  %v233 = vld [vmem:[%s1 + $0x344] sm:$0xf]
  %v234 = vld [vmem:[%s1 + $0x348] sm:$0xf]
  %v235 = vld [vmem:[%s1 + $0x34c] sm:$0xf]
  %v236 = vld [vmem:[%s1 + $0x350] sm:$0xf]
  %v237 = vld [vmem:[%s1 + $0x354] sm:$0xf]
  %v238 = vld [vmem:[%s1 + $0x358] sm:$0xf]
  %v239 = vld [vmem:[%s1 + $0x35c] sm:$0xf]
  %v240 = vld [vmem:[%s1 + $0x360] sm:$0xf]
  %v241 = vld [vmem:[%s1 + $0x364] sm:$0xf]
  %v242 = vld [vmem:[%s1 + $0x368] sm:$0xf]
  %v243 = vld [vmem:[%s1 + $0x36c] sm:$0xf]
  %v244 = vld [vmem:[%s1 + $0x370] sm:$0xf]
  %v245 = vld [vmem:[%s1 + $0x374] sm:$0xf]
  %v246 = vld [vmem:[%s1 + $0x378] sm:$0xf]
  %v247 = vld [vmem:[%s1 + $0x37c] sm:$0xf]
  %v248 = vld [vmem:[%s1 + $0x380] sm:$0xf]
  %v249 = vld [vmem:[%s1 + $0x384] sm:$0xf]
  %v250 = vld [vmem:[%s1 + $0x388] sm:$0xf]
  %v251 = vld [vmem:[%s1 + $0x38c] sm:$0xf]
  %v252 = vld [vmem:[%s1 + $0x390] sm:$0xf]
  %v253 = vld [vmem:[%s1 + $0x394] sm:$0xf]
  %v254 = vld [vmem:[%s1 + $0x398] sm:$0xf]
  %v255 = vld [vmem:[%s1 + $0x39c] sm:$0xf]
  %v256 = vld [vmem:[%s1 + $0x3a0] sm:$0xf]
  %v257 = vld [vmem:[%s1 + $0x3a4] sm:$0xf]
  %v258 = vld [vmem:[%s1 + $0x3a8] sm:$0xf]
  %v259 = vld [vmem:[%s1 + $0x3ac] sm:$0xf]
  %v260 = vld [vmem:[%s1 + $0x3b0] sm:$0xf]
  %v261 = vld [vmem:[%s1 + $0x3b4] sm:$0xf]
  %v262 = vld [vmem:[%s1 + $0x3b8] sm:$0xf]
  %v263 = vld [vmem:[%s1 + $0x3bc] sm:$0xf]
  %v264 = vld [vmem:[%s1 + $0x3c0] sm:$0xf]
  %v265 = vld [vmem:[%s1 + $0x3c4] sm:$0xf]
  %v266 = vld [vmem:[%s1 + $0x3c8] sm:$0xf]
  %v267 = vld [vmem:[%s1 + $0x3cc] sm:$0xf]
  %v268 = vld [vmem:[%s1 + $0x3d0] sm:$0xf]
  %v269 = vld [vmem:[%s1 + $0x3d4] sm:$0xf]
  %v270 = vld [vmem:[%s1 + $0x3d8] sm:$0xf]
  %v271 = vld [vmem:[%s1 + $0x3dc] sm:$0xf]
  %v272 = vld [vmem:[%s1 + $0x3e0] sm:$0xf]
  %v273 = vld [vmem:[%s1 + $0x3e4] sm:$0xf]
  %v274 = vld [vmem:[%s1 + $0x3e8] sm:$0xf]
  %v275 = vld [vmem:[%s1 + $0x3ec] sm:$0xf]
  %v276 = vld [vmem:[%s1 + $0x3f0] sm:$0xf]
  %v277 = vld [vmem:[%s1 + $0x3f4] sm:$0xf]
  %v278 = vld [vmem:[%s1 + $0x3f8] sm:$0xf]
  %v279 = vld [vmem:[%s1 + $0x3fc] sm:$0xf]
  %v282 = vcombine.high %v22, %v22
  %v284 = vunpack.c.l.s4 1966171168
  %v285 = vunpack.c.0.s8 %v284
  %v286 = vlaneseq
  %v287 = vshrl.u32 %v286, 7
  %v288 = vsub.s32 %v285, %v287
  %v289 = vrot.slane %v22, %v288
  %v291 = vunpack.c.l.s4 1966171168
  %v292 = vunpack.c.0.s8 %v291
  %v293 = vlaneseq
  %v294 = vshrl.u32 %v293, 7
  %v295 = vsub.s32 %v292, %v294
  %v296 = vrot.slane %v282, %v295
  %v297 = vcombine.high %v289, %v289
  %v298 = vcombine.high %v296, %v296
  %v300 = vunpack.c.l.s4 1966171168
  %v301 = vunpack.c.0.s8 %v300
  %v302 = vlaneseq
  %v303 = vshrl.u32 %v302, 7
  %v304 = vsub.s32 %v301, %v303
  %v305 = vrot.slane %v289, %v304
  %v307 = vunpack.c.l.s4 1966171168
  %v308 = vunpack.c.0.s8 %v307
  %v309 = vlaneseq
  %v310 = vshrl.u32 %v309, 7
  %v311 = vsub.s32 %v308, %v310
  %v312 = vrot.slane %v296, %v311
  %v314 = vunpack.c.l.s4 1966171168
  %v315 = vunpack.c.0.s8 %v314
  %v316 = vlaneseq
  %v317 = vshrl.u32 %v316, 7
  %v318 = vsub.s32 %v315, %v317
  %v319 = vrot.slane %v297, %v318
  %v321 = vunpack.c.l.s4 1966171168
  %v322 = vunpack.c.0.s8 %v321
  %v323 = vlaneseq
  %v324 = vshrl.u32 %v323, 7
  %v325 = vsub.s32 %v322, %v324
  %v326 = vrot.slane %v298, %v325
  %v327 = vcombine.high %v305, %v305
  %v328 = vcombine.high %v312, %v312
  %v329 = vcombine.high %v319, %v319
  %v330 = vcombine.high %v326, %v326
  %v331 = vcombine.high %v23, %v23
  %v333 = vunpack.c.l.s4 1966171168
  %v334 = vunpack.c.0.s8 %v333
  %v335 = vlaneseq
  %v336 = vshrl.u32 %v335, 7
  %v337 = vsub.s32 %v334, %v336
  %v338 = vrot.slane %v23, %v337
  %v340 = vunpack.c.l.s4 1966171168
  %v341 = vunpack.c.0.s8 %v340
  %v342 = vlaneseq
  %v343 = vshrl.u32 %v342, 7
  %v344 = vsub.s32 %v341, %v343
  %v345 = vrot.slane %v331, %v344
  %v346 = vcombine.high %v338, %v338
  %v347 = vcombine.high %v345, %v345
  %v349 = vunpack.c.l.s4 1966171168
  %v350 = vunpack.c.0.s8 %v349
  %v351 = vlaneseq
  %v352 = vshrl.u32 %v351, 7
  %v353 = vsub.s32 %v350, %v352
  %v354 = vrot.slane %v338, %v353
  %v356 = vunpack.c.l.s4 1966171168
  %v357 = vunpack.c.0.s8 %v356
  %v358 = vlaneseq
  %v359 = vshrl.u32 %v358, 7
  %v360 = vsub.s32 %v357, %v359
  %v361 = vrot.slane %v345, %v360
  %v363 = vunpack.c.l.s4 1966171168
  %v364 = vunpack.c.0.s8 %v363
  %v365 = vlaneseq
  %v366 = vshrl.u32 %v365, 7
  %v367 = vsub.s32 %v364, %v366
  %v368 = vrot.slane %v346, %v367
  %v370 = vunpack.c.l.s4 1966171168
  %v371 = vunpack.c.0.s8 %v370
  %v372 = vlaneseq
  %v373 = vshrl.u32 %v372, 7
  %v374 = vsub.s32 %v371, %v373
  %v375 = vrot.slane %v347, %v374
  %v376 = vcombine.high %v354, %v354
  %v377 = vcombine.high %v361, %v361
  %v378 = vcombine.high %v368, %v368
  %v379 = vcombine.high %v375, %v375
  %v652 = vunpack.c.l.b16 %v24
  %v653 = vunpack.c.l.b16 %v25
  %v654 = vunpack.c.l.b16 %v26
  %v655 = vunpack.c.l.b16 %v27
  %v656 = vunpack.c.l.b16 %v28
  %v657 = vunpack.c.l.b16 %v29
  %v658 = vunpack.c.l.b16 %v30
  %v659 = vunpack.c.l.b16 %v31
  %v660 = vunpack.c.l.b16 %v32
  %v661 = vunpack.c.l.b16 %v33
  %v662 = vunpack.c.l.b16 %v34
  %v663 = vunpack.c.l.b16 %v35
  %v664 = vunpack.c.l.b16 %v36
  %v665 = vunpack.c.l.b16 %v37
  %v666 = vunpack.c.l.b16 %v38
  %v667 = vunpack.c.l.b16 %v39
  %v668 = vunpack.c.l.b16 %v40
  %v669 = vunpack.c.l.b16 %v41
  %v670 = vunpack.c.l.b16 %v42
  %v671 = vunpack.c.l.b16 %v43
  %v672 = vunpack.c.l.b16 %v44
  %v673 = vunpack.c.l.b16 %v45
  %v674 = vunpack.c.l.b16 %v46
  %v675 = vunpack.c.l.b16 %v47
  %v676 = vunpack.c.l.b16 %v48
  %v677 = vunpack.c.l.b16 %v49
  %v678 = vunpack.c.l.b16 %v50
  %v679 = vunpack.c.l.b16 %v51
  %v680 = vunpack.c.l.b16 %v52
  %v681 = vunpack.c.l.b16 %v53
  %v682 = vunpack.c.l.b16 %v54
  %v683 = vunpack.c.l.b16 %v55
  %v684 = vunpack.c.l.b16 %v56
  %v685 = vunpack.c.l.b16 %v57
  %v686 = vunpack.c.l.b16 %v58
  %v687 = vunpack.c.l.b16 %v59
  %v688 = vunpack.c.l.b16 %v60
  %v689 = vunpack.c.l.b16 %v61
  %v690 = vunpack.c.l.b16 %v62
  %v691 = vunpack.c.l.b16 %v63
  %v692 = vunpack.c.l.b16 %v64
  %v693 = vunpack.c.l.b16 %v65
  %v694 = vunpack.c.l.b16 %v66
  %v695 = vunpack.c.l.b16 %v67
  %v696 = vunpack.c.l.b16 %v68
  %v697 = vunpack.c.l.b16 %v69
  %v698 = vunpack.c.l.b16 %v70
  %v699 = vunpack.c.l.b16 %v71
  %v700 = vunpack.c.l.b16 %v72
  %v701 = vunpack.c.l.b16 %v73
  %v702 = vunpack.c.l.b16 %v74
  %v703 = vunpack.c.l.b16 %v75
  %v704 = vunpack.c.l.b16 %v76
  %v705 = vunpack.c.l.b16 %v77
  %v706 = vunpack.c.l.b16 %v78
  %v707 = vunpack.c.l.b16 %v79
  %v708 = vunpack.c.l.b16 %v80
  %v709 = vunpack.c.l.b16 %v81
  %v710 = vunpack.c.l.b16 %v82
  %v711 = vunpack.c.l.b16 %v83
  %v712 = vunpack.c.l.b16 %v84
  %v713 = vunpack.c.l.b16 %v85
  %v714 = vunpack.c.l.b16 %v86
  %v715 = vunpack.c.l.b16 %v87
  %v716 = vunpack.c.l.b16 %v88
  %v717 = vunpack.c.l.b16 %v89
  %v718 = vunpack.c.l.b16 %v90
  %v719 = vunpack.c.l.b16 %v91
  %v720 = vunpack.c.l.b16 %v92
  %v721 = vunpack.c.l.b16 %v93
  %v722 = vunpack.c.l.b16 %v94
  %v723 = vunpack.c.l.b16 %v95
  %v724 = vunpack.c.l.b16 %v96
  %v725 = vunpack.c.l.b16 %v97
  %v726 = vunpack.c.l.b16 %v98
  %v727 = vunpack.c.l.b16 %v99
  %v728 = vunpack.c.l.b16 %v100
  %v729 = vunpack.c.l.b16 %v101
  %v730 = vunpack.c.l.b16 %v102
  %v731 = vunpack.c.l.b16 %v103
  %v732 = vunpack.c.l.b16 %v104
  %v733 = vunpack.c.l.b16 %v105
  %v734 = vunpack.c.l.b16 %v106
  %v735 = vunpack.c.l.b16 %v107
  %v736 = vunpack.c.l.b16 %v108
  %v737 = vunpack.c.l.b16 %v109
  %v738 = vunpack.c.l.b16 %v110
  %v739 = vunpack.c.l.b16 %v111
  %v740 = vunpack.c.l.b16 %v112
  %v741 = vunpack.c.l.b16 %v113
  %v742 = vunpack.c.l.b16 %v114
  %v743 = vunpack.c.l.b16 %v115
  %v744 = vunpack.c.l.b16 %v116
  %v745 = vunpack.c.l.b16 %v117
  %v746 = vunpack.c.l.b16 %v118
  %v747 = vunpack.c.l.b16 %v119
  %v748 = vunpack.c.l.b16 %v120
  %v749 = vunpack.c.l.b16 %v121
  %v750 = vunpack.c.l.b16 %v122
  %v751 = vunpack.c.l.b16 %v123
  %v752 = vunpack.c.l.b16 %v124
  %v753 = vunpack.c.l.b16 %v125
  %v754 = vunpack.c.l.b16 %v126
  %v755 = vunpack.c.l.b16 %v127
  %v756 = vunpack.c.l.b16 %v128
  %v757 = vunpack.c.l.b16 %v129
  %v758 = vunpack.c.l.b16 %v130
  %v759 = vunpack.c.l.b16 %v131
  %v760 = vunpack.c.l.b16 %v132
  %v761 = vunpack.c.l.b16 %v133
  %v762 = vunpack.c.l.b16 %v134
  %v763 = vunpack.c.l.b16 %v135
  %v764 = vunpack.c.l.b16 %v136
  %v765 = vunpack.c.l.b16 %v137
  %v766 = vunpack.c.l.b16 %v138
  %v767 = vunpack.c.l.b16 %v139
  %v768 = vunpack.c.l.b16 %v140
  %v769 = vunpack.c.l.b16 %v141
  %v770 = vunpack.c.l.b16 %v142
  %v771 = vunpack.c.l.b16 %v143
  %v772 = vunpack.c.l.b16 %v144
  %v773 = vunpack.c.l.b16 %v145
  %v774 = vunpack.c.l.b16 %v146
  %v775 = vunpack.c.l.b16 %v147
  %v776 = vunpack.c.l.b16 %v148
  %v777 = vunpack.c.l.b16 %v149
  %v778 = vunpack.c.l.b16 %v150
  %v779 = vunpack.c.l.b16 %v151
  %v780 = vunpack.c.l.b16 %v152
  %v781 = vunpack.c.l.b16 %v153
  %v782 = vunpack.c.l.b16 %v154
  %v783 = vunpack.c.l.b16 %v155
  %v784 = vunpack.c.l.b16 %v156
  %v785 = vunpack.c.l.b16 %v157
  %v786 = vunpack.c.l.b16 %v158
  %v787 = vunpack.c.l.b16 %v159
  %v788 = vunpack.c.l.b16 %v160
  %v789 = vunpack.c.l.b16 %v161
  %v790 = vunpack.c.l.b16 %v162
  %v791 = vunpack.c.l.b16 %v163
  %v792 = vunpack.c.l.b16 %v164
  %v793 = vunpack.c.l.b16 %v165
  %v794 = vunpack.c.l.b16 %v166
  %v795 = vunpack.c.l.b16 %v167
  %v796 = vunpack.c.l.b16 %v168
  %v797 = vunpack.c.l.b16 %v169
  %v798 = vunpack.c.l.b16 %v170
  %v799 = vunpack.c.l.b16 %v171
  %v800 = vunpack.c.l.b16 %v172
  %v801 = vunpack.c.l.b16 %v173
  %v802 = vunpack.c.l.b16 %v174
  %v803 = vunpack.c.l.b16 %v175
  %v804 = vunpack.c.l.b16 %v176
  %v805 = vunpack.c.l.b16 %v177
  %v806 = vunpack.c.l.b16 %v178
  %v807 = vunpack.c.l.b16 %v179
  %v808 = vunpack.c.l.b16 %v180
  %v809 = vunpack.c.l.b16 %v181
  %v810 = vunpack.c.l.b16 %v182
  %v811 = vunpack.c.l.b16 %v183
  %v812 = vunpack.c.l.b16 %v184
  %v813 = vunpack.c.l.b16 %v185
  %v814 = vunpack.c.l.b16 %v186
  %v815 = vunpack.c.l.b16 %v187
  %v816 = vunpack.c.l.b16 %v188
  %v817 = vunpack.c.l.b16 %v189
  %v818 = vunpack.c.l.b16 %v190
  %v819 = vunpack.c.l.b16 %v191
  %v820 = vunpack.c.l.b16 %v192
  %v821 = vunpack.c.l.b16 %v193
  %v822 = vunpack.c.l.b16 %v194
  %v823 = vunpack.c.l.b16 %v195
  %v824 = vunpack.c.l.b16 %v196
  %v825 = vunpack.c.l.b16 %v197
  %v826 = vunpack.c.l.b16 %v198
  %v827 = vunpack.c.l.b16 %v199
  %v828 = vunpack.c.l.b16 %v200
  %v829 = vunpack.c.l.b16 %v201
  %v830 = vunpack.c.l.b16 %v202
  %v831 = vunpack.c.l.b16 %v203
  %v832 = vunpack.c.l.b16 %v204
  %v833 = vunpack.c.l.b16 %v205
  %v834 = vunpack.c.l.b16 %v206
  %v835 = vunpack.c.l.b16 %v207
  %v836 = vunpack.c.l.b16 %v208
  %v837 = vunpack.c.l.b16 %v209
  %v838 = vunpack.c.l.b16 %v210
  %v839 = vunpack.c.l.b16 %v211
  %v840 = vunpack.c.l.b16 %v212
  %v841 = vunpack.c.l.b16 %v213
  %v842 = vunpack.c.l.b16 %v214
  %v843 = vunpack.c.l.b16 %v215
  %v844 = vunpack.c.l.b16 %v216
  %v845 = vunpack.c.l.b16 %v217
  %v846 = vunpack.c.l.b16 %v218
  %v847 = vunpack.c.l.b16 %v219
  %v848 = vunpack.c.l.b16 %v220
  %v849 = vunpack.c.l.b16 %v221
  %v850 = vunpack.c.l.b16 %v222
  %v851 = vunpack.c.l.b16 %v223
  %v852 = vunpack.c.l.b16 %v224
  %v853 = vunpack.c.l.b16 %v225
  %v854 = vunpack.c.l.b16 %v226
  %v855 = vunpack.c.l.b16 %v227
  %v856 = vunpack.c.l.b16 %v228
  %v857 = vunpack.c.l.b16 %v229
  %v858 = vunpack.c.l.b16 %v230
  %v859 = vunpack.c.l.b16 %v231
  %v860 = vunpack.c.l.b16 %v232
  %v861 = vunpack.c.l.b16 %v233
  %v862 = vunpack.c.l.b16 %v234
  %v863 = vunpack.c.l.b16 %v235
  %v864 = vunpack.c.l.b16 %v236
  %v865 = vunpack.c.l.b16 %v237
  %v866 = vunpack.c.l.b16 %v238
  %v867 = vunpack.c.l.b16 %v239
  %v868 = vunpack.c.l.b16 %v240
  %v869 = vunpack.c.l.b16 %v241
  %v870 = vunpack.c.l.b16 %v242
  %v871 = vunpack.c.l.b16 %v243
  %v872 = vunpack.c.l.b16 %v244
  %v873 = vunpack.c.l.b16 %v245
  %v874 = vunpack.c.l.b16 %v246
  %v875 = vunpack.c.l.b16 %v247
  %v876 = vunpack.c.l.b16 %v248
  %v877 = vunpack.c.l.b16 %v249
  %v878 = vunpack.c.l.b16 %v250
  %v879 = vunpack.c.l.b16 %v251
  %v880 = vunpack.c.l.b16 %v252
  %v881 = vunpack.c.l.b16 %v253
  %v882 = vunpack.c.l.b16 %v254
  %v883 = vunpack.c.l.b16 %v255
  %v884 = vunpack.c.l.b16 %v256
  %v885 = vunpack.c.l.b16 %v257
  %v886 = vunpack.c.l.b16 %v258
  %v887 = vunpack.c.l.b16 %v259
  %v888 = vunpack.c.l.b16 %v260
  %v889 = vunpack.c.l.b16 %v261
  %v890 = vunpack.c.l.b16 %v262
  %v891 = vunpack.c.l.b16 %v263
  %v892 = vunpack.c.l.b16 %v264
  %v893 = vunpack.c.l.b16 %v265
  %v894 = vunpack.c.l.b16 %v266
  %v895 = vunpack.c.l.b16 %v267
  %v896 = vunpack.c.l.b16 %v268
  %v897 = vunpack.c.l.b16 %v269
  %v898 = vunpack.c.l.b16 %v270
  %v899 = vunpack.c.l.b16 %v271
  %v900 = vunpack.c.l.b16 %v272
  %v901 = vunpack.c.l.b16 %v273
  %v902 = vunpack.c.l.b16 %v274
  %v903 = vunpack.c.l.b16 %v275
  %v904 = vunpack.c.l.b16 %v276
  %v905 = vunpack.c.l.b16 %v277
  %v906 = vunpack.c.l.b16 %v278
  %v907 = vunpack.c.l.b16 %v279
  %v908 = vpack.c.b16 %v653, %v652
  %v909 = vpack.c.b16 %v655, %v654
  %v910 = vpack.c.b16 %v657, %v656
  %v911 = vpack.c.b16 %v659, %v658
  %v912 = vpack.c.b16 %v661, %v660
  %v913 = vpack.c.b16 %v663, %v662
  %v914 = vpack.c.b16 %v665, %v664
  %v915 = vpack.c.b16 %v667, %v666
  %v916 = vpack.c.b16 %v669, %v668
  %v917 = vpack.c.b16 %v671, %v670
  %v918 = vpack.c.b16 %v673, %v672
  %v919 = vpack.c.b16 %v675, %v674
  %v920 = vpack.c.b16 %v677, %v676
  %v921 = vpack.c.b16 %v679, %v678
  %v922 = vpack.c.b16 %v681, %v680
  %v923 = vpack.c.b16 %v683, %v682
  %v924 = vpack.c.b16 %v685, %v684
  %v925 = vpack.c.b16 %v687, %v686
  %v926 = vpack.c.b16 %v689, %v688
  %v927 = vpack.c.b16 %v691, %v690
  %v928 = vpack.c.b16 %v693, %v692
  %v929 = vpack.c.b16 %v695, %v694
  %v930 = vpack.c.b16 %v697, %v696
  %v931 = vpack.c.b16 %v699, %v698
  %v932 = vpack.c.b16 %v701, %v700
  %v933 = vpack.c.b16 %v703, %v702
  %v934 = vpack.c.b16 %v705, %v704
  %v935 = vpack.c.b16 %v707, %v706
  %v936 = vpack.c.b16 %v709, %v708
  %v937 = vpack.c.b16 %v711, %v710
  %v938 = vpack.c.b16 %v713, %v712
  %v939 = vpack.c.b16 %v715, %v714
  %v940 = vpack.c.b16 %v717, %v716
  %v941 = vpack.c.b16 %v719, %v718
  %v942 = vpack.c.b16 %v721, %v720
  %v943 = vpack.c.b16 %v723, %v722
  %v944 = vpack.c.b16 %v725, %v724
  %v945 = vpack.c.b16 %v727, %v726
  %v946 = vpack.c.b16 %v729, %v728
  %v947 = vpack.c.b16 %v731, %v730
  %v948 = vpack.c.b16 %v733, %v732
  %v949 = vpack.c.b16 %v735, %v734
  %v950 = vpack.c.b16 %v737, %v736
  %v951 = vpack.c.b16 %v739, %v738
  %v952 = vpack.c.b16 %v741, %v740
  %v953 = vpack.c.b16 %v743, %v742
  %v954 = vpack.c.b16 %v745, %v744
  %v955 = vpack.c.b16 %v747, %v746
  %v956 = vpack.c.b16 %v749, %v748
  %v957 = vpack.c.b16 %v751, %v750
  %v958 = vpack.c.b16 %v753, %v752
  %v959 = vpack.c.b16 %v755, %v754
  %v960 = vpack.c.b16 %v757, %v756
  %v961 = vpack.c.b16 %v759, %v758
  %v962 = vpack.c.b16 %v761, %v760
  %v963 = vpack.c.b16 %v763, %v762
  %v964 = vpack.c.b16 %v765, %v764
  %v965 = vpack.c.b16 %v767, %v766
  %v966 = vpack.c.b16 %v769, %v768
  %v967 = vpack.c.b16 %v771, %v770
  %v968 = vpack.c.b16 %v773, %v772
  %v969 = vpack.c.b16 %v775, %v774
  %v970 = vpack.c.b16 %v777, %v776
  %v971 = vpack.c.b16 %v779, %v778
  %v972 = vpack.c.b16 %v781, %v780
  %v973 = vpack.c.b16 %v783, %v782
  %v974 = vpack.c.b16 %v785, %v784
  %v975 = vpack.c.b16 %v787, %v786
  %v976 = vpack.c.b16 %v789, %v788
  %v977 = vpack.c.b16 %v791, %v790
  %v978 = vpack.c.b16 %v793, %v792
  %v979 = vpack.c.b16 %v795, %v794
  %v980 = vpack.c.b16 %v797, %v796
  %v981 = vpack.c.b16 %v799, %v798
  %v982 = vpack.c.b16 %v801, %v800
  %v983 = vpack.c.b16 %v803, %v802
  %v984 = vpack.c.b16 %v805, %v804
  %v985 = vpack.c.b16 %v807, %v806
  %v986 = vpack.c.b16 %v809, %v808
  %v987 = vpack.c.b16 %v811, %v810
  %v988 = vpack.c.b16 %v813, %v812
  %v989 = vpack.c.b16 %v815, %v814
  %v990 = vpack.c.b16 %v817, %v816
  %v991 = vpack.c.b16 %v819, %v818
  %v992 = vpack.c.b16 %v821, %v820
  %v993 = vpack.c.b16 %v823, %v822
  %v994 = vpack.c.b16 %v825, %v824
  %v995 = vpack.c.b16 %v827, %v826
  %v996 = vpack.c.b16 %v829, %v828
  %v997 = vpack.c.b16 %v831, %v830
  %v998 = vpack.c.b16 %v833, %v832
  %v999 = vpack.c.b16 %v835, %v834
  %v1000 = vpack.c.b16 %v837, %v836
  %v1001 = vpack.c.b16 %v839, %v838
  %v1002 = vpack.c.b16 %v841, %v840
  %v1003 = vpack.c.b16 %v843, %v842
  %v1004 = vpack.c.b16 %v845, %v844
  %v1005 = vpack.c.b16 %v847, %v846
  %v1006 = vpack.c.b16 %v849, %v848
  %v1007 = vpack.c.b16 %v851, %v850
  %v1008 = vpack.c.b16 %v853, %v852
  %v1009 = vpack.c.b16 %v855, %v854
  %v1010 = vpack.c.b16 %v857, %v856
  %v1011 = vpack.c.b16 %v859, %v858
  %v1012 = vpack.c.b16 %v861, %v860
  %v1013 = vpack.c.b16 %v863, %v862
  %v1014 = vpack.c.b16 %v865, %v864
  %v1015 = vpack.c.b16 %v867, %v866
  %v1016 = vpack.c.b16 %v869, %v868
  %v1017 = vpack.c.b16 %v871, %v870
  %v1018 = vpack.c.b16 %v873, %v872
  %v1019 = vpack.c.b16 %v875, %v874
  %v1020 = vpack.c.b16 %v877, %v876
  %v1021 = vpack.c.b16 %v879, %v878
  %v1022 = vpack.c.b16 %v881, %v880
  %v1023 = vpack.c.b16 %v883, %v882
  %v1024 = vpack.c.b16 %v885, %v884
  %v1025 = vpack.c.b16 %v887, %v886
  %v1026 = vpack.c.b16 %v889, %v888
  %v1027 = vpack.c.b16 %v891, %v890
  %v1028 = vpack.c.b16 %v893, %v892
  %v1029 = vpack.c.b16 %v895, %v894
  %v1030 = vpack.c.b16 %v897, %v896
  %v1031 = vpack.c.b16 %v899, %v898
  %v1032 = vpack.c.b16 %v901, %v900
  %v1033 = vpack.c.b16 %v903, %v902
  %v1034 = vpack.c.b16 %v905, %v904
  %v1035 = vpack.c.b16 %v907, %v906
  %1164 = vmatprep.subr.bf16.mxu0 0
  %1165 = vmatpush1.bf16.msra.mxu0 %v908
  %1166 = vmatprep.subr.bf16.mxu0 0
  %1167 = vmatpush1.bf16.msra.mxu0 %v909
  %1168 = vmatprep.subr.bf16.mxu0 0
  %1169 = vmatpush1.bf16.msra.mxu0 %v910
  %1170 = vmatprep.subr.bf16.mxu0 0
  %1171 = vmatpush1.bf16.msra.mxu0 %v911
  %1172 = vmatprep.subr.bf16.mxu0 0
  %1173 = vmatpush1.bf16.msra.mxu0 %v912
  %1174 = vmatprep.subr.bf16.mxu0 0
  %1175 = vmatpush1.bf16.msra.mxu0 %v913
  %1176 = vmatprep.subr.bf16.mxu0 0
  %1177 = vmatpush1.bf16.msra.mxu0 %v914
  %1178 = vmatprep.subr.bf16.mxu0 0
  %1179 = vmatpush1.bf16.msra.mxu0 %v915
  %1180 = vmatprep.subr.bf16.mxu0 0
  %1181 = vmatpush1.bf16.msra.mxu0 %v916
  %1182 = vmatprep.subr.bf16.mxu0 0
  %1183 = vmatpush1.bf16.msra.mxu0 %v917
  %1184 = vmatprep.subr.bf16.mxu0 0
  %1185 = vmatpush1.bf16.msra.mxu0 %v918
  %1186 = vmatprep.subr.bf16.mxu0 0
  %1187 = vmatpush1.bf16.msra.mxu0 %v919
  %1188 = vmatprep.subr.bf16.mxu0 0
  %1189 = vmatpush1.bf16.msra.mxu0 %v920
  %1190 = vmatprep.subr.bf16.mxu0 0
  %1191 = vmatpush1.bf16.msra.mxu0 %v921
  %1192 = vmatprep.subr.bf16.mxu0 0
  %1193 = vmatpush1.bf16.msra.mxu0 %v922
  %1194 = vmatprep.subr.bf16.mxu0 0
  %1195 = vmatpush1.bf16.msra.mxu0 %v923
  %1196 = vmatprep.mubr.bf16.mxu0 %v319
  %1197 = vmatmul.mubr.bf16.gmra.mrb[0].mxu0 %v305
  %v1198 = vpop.f32.mrb[0].mxu0
  %v1199 = vadd.f32 0.0, %v1198
  %v1200 = vpop.f32.mrb[0].mxu0
  %v1201 = vpop.f32.mrb[0].mxu0
  %v1202 = vpop.f32.mrb[0].mxu0
  %1203 = vdwg.mxu0
  %1204 = vmatprep.subr.bf16.mxu0 0
  %1205 = vmatpush1.bf16.msra.mxu0 %v924
  %1206 = vmatprep.subr.bf16.mxu0 0
  %1207 = vmatpush1.bf16.msra.mxu0 %v925
  %1208 = vmatprep.subr.bf16.mxu0 0
  %1209 = vmatpush1.bf16.msra.mxu0 %v926
  %1210 = vmatprep.subr.bf16.mxu0 0
  %1211 = vmatpush1.bf16.msra.mxu0 %v927
  %1212 = vmatprep.subr.bf16.mxu0 0
  %1213 = vmatpush1.bf16.msra.mxu0 %v928
  %1214 = vmatprep.subr.bf16.mxu0 0
  %1215 = vmatpush1.bf16.msra.mxu0 %v929
  %1216 = vmatprep.subr.bf16.mxu0 0
  %1217 = vmatpush1.bf16.msra.mxu0 %v930
  %1218 = vmatprep.subr.bf16.mxu0 0
  %1219 = vmatpush1.bf16.msra.mxu0 %v931
  %1220 = vmatprep.subr.bf16.mxu0 0
  %1221 = vmatpush1.bf16.msra.mxu0 %v932
  %1222 = vmatprep.subr.bf16.mxu0 0
  %1223 = vmatpush1.bf16.msra.mxu0 %v933
  %1224 = vmatprep.subr.bf16.mxu0 0
  %1225 = vmatpush1.bf16.msra.mxu0 %v934
  %1226 = vmatprep.subr.bf16.mxu0 0
  %1227 = vmatpush1.bf16.msra.mxu0 %v935
  %1228 = vmatprep.subr.bf16.mxu0 0
  %1229 = vmatpush1.bf16.msra.mxu0 %v936
  %1230 = vmatprep.subr.bf16.mxu0 0
  %1231 = vmatpush1.bf16.msra.mxu0 %v937
  %1232 = vmatprep.subr.bf16.mxu0 0
  %1233 = vmatpush1.bf16.msra.mxu0 %v938
  %1234 = vmatprep.subr.bf16.mxu0 0
  %1235 = vmatpush1.bf16.msra.mxu0 %v939
  %1236 = vmatprep.mubr.bf16.mxu0 %v329
  %1237 = vmatmul.mubr.bf16.gmra.mrb[0].mxu0 %v327
  %v1238 = vpop.f32.mrb[0].mxu0
  %v1239 = vadd.f32 %v1199, %v1238
  %v1240 = vpop.f32.mrb[0].mxu0
  %v1241 = vpop.f32.mrb[0].mxu0
  %v1242 = vpop.f32.mrb[0].mxu0
  %1243 = vdwg.mxu0
  %1244 = vmatprep.subr.bf16.mxu0 0
  %1245 = vmatpush1.bf16.msra.mxu0 %v940
  %1246 = vmatprep.subr.bf16.mxu0 0
  %1247 = vmatpush1.bf16.msra.mxu0 %v941
  %1248 = vmatprep.subr.bf16.mxu0 0
  %1249 = vmatpush1.bf16.msra.mxu0 %v942
  %1250 = vmatprep.subr.bf16.mxu0 0
  %1251 = vmatpush1.bf16.msra.mxu0 %v943
  %1252 = vmatprep.subr.bf16.mxu0 0
  %1253 = vmatpush1.bf16.msra.mxu0 %v944
  %1254 = vmatprep.subr.bf16.mxu0 0
  %1255 = vmatpush1.bf16.msra.mxu0 %v945
  %1256 = vmatprep.subr.bf16.mxu0 0
  %1257 = vmatpush1.bf16.msra.mxu0 %v946
  %1258 = vmatprep.subr.bf16.mxu0 0
  %1259 = vmatpush1.bf16.msra.mxu0 %v947
  %1260 = vmatprep.subr.bf16.mxu0 0
  %1261 = vmatpush1.bf16.msra.mxu0 %v948
  %1262 = vmatprep.subr.bf16.mxu0 0
  %1263 = vmatpush1.bf16.msra.mxu0 %v949
  %1264 = vmatprep.subr.bf16.mxu0 0
  %1265 = vmatpush1.bf16.msra.mxu0 %v950
  %1266 = vmatprep.subr.bf16.mxu0 0
  %1267 = vmatpush1.bf16.msra.mxu0 %v951
  %1268 = vmatprep.subr.bf16.mxu0 0
  %1269 = vmatpush1.bf16.msra.mxu0 %v952
  %1270 = vmatprep.subr.bf16.mxu0 0
  %1271 = vmatpush1.bf16.msra.mxu0 %v953
  %1272 = vmatprep.subr.bf16.mxu0 0
  %1273 = vmatpush1.bf16.msra.mxu0 %v954
  %1274 = vmatprep.subr.bf16.mxu0 0
  %1275 = vmatpush1.bf16.msra.mxu0 %v955
  %1276 = vmatprep.mubr.bf16.mxu0 %v326
  %1277 = vmatmul.mubr.bf16.gmra.mrb[0].mxu0 %v312
  %v1278 = vpop.f32.mrb[0].mxu0
  %v1279 = vadd.f32 %v1239, %v1278
  %v1280 = vpop.f32.mrb[0].mxu0
  %v1281 = vpop.f32.mrb[0].mxu0
  %v1282 = vpop.f32.mrb[0].mxu0
  %1283 = vdwg.mxu0
  %1284 = vmatprep.subr.bf16.mxu0 0
  %1285 = vmatpush1.bf16.msra.mxu0 %v956
  %1286 = vmatprep.subr.bf16.mxu0 0
  %1287 = vmatpush1.bf16.msra.mxu0 %v957
  %1288 = vmatprep.subr.bf16.mxu0 0
  %1289 = vmatpush1.bf16.msra.mxu0 %v958
  %1290 = vmatprep.subr.bf16.mxu0 0
  %1291 = vmatpush1.bf16.msra.mxu0 %v959
  %1292 = vmatprep.subr.bf16.mxu0 0
  %1293 = vmatpush1.bf16.msra.mxu0 %v960
  %1294 = vmatprep.subr.bf16.mxu0 0
  %1295 = vmatpush1.bf16.msra.mxu0 %v961
  %1296 = vmatprep.subr.bf16.mxu0 0
  %1297 = vmatpush1.bf16.msra.mxu0 %v962
  %1298 = vmatprep.subr.bf16.mxu0 0
  %1299 = vmatpush1.bf16.msra.mxu0 %v963
  %1300 = vmatprep.subr.bf16.mxu0 0
  %1301 = vmatpush1.bf16.msra.mxu0 %v964
  %1302 = vmatprep.subr.bf16.mxu0 0
  %1303 = vmatpush1.bf16.msra.mxu0 %v965
  %1304 = vmatprep.subr.bf16.mxu0 0
  %1305 = vmatpush1.bf16.msra.mxu0 %v966
  %1306 = vmatprep.subr.bf16.mxu0 0
  %1307 = vmatpush1.bf16.msra.mxu0 %v967
  %1308 = vmatprep.subr.bf16.mxu0 0
  %1309 = vmatpush1.bf16.msra.mxu0 %v968
  %1310 = vmatprep.subr.bf16.mxu0 0
  %1311 = vmatpush1.bf16.msra.mxu0 %v969
  %1312 = vmatprep.subr.bf16.mxu0 0
  %1313 = vmatpush1.bf16.msra.mxu0 %v970
  %1314 = vmatprep.subr.bf16.mxu0 0
  %1315 = vmatpush1.bf16.msra.mxu0 %v971
  %1316 = vmatprep.mubr.bf16.mxu0 %v330
  %1317 = vmatmul.mubr.bf16.gmra.mrb[0].mxu0 %v328
  %v1318 = vpop.f32.mrb[0].mxu0
  %v1319 = vadd.f32 %v1279, %v1318
  %v1320 = vpop.f32.mrb[0].mxu0
  %v1321 = vpop.f32.mrb[0].mxu0
  %v1322 = vpop.f32.mrb[0].mxu0
  %1323 = vdwg.mxu0
  %1324 = vmatprep.subr.bf16.mxu0 0
  %1325 = vmatpush1.bf16.msra.mxu0 %v972
  %1326 = vmatprep.subr.bf16.mxu0 0
  %1327 = vmatpush1.bf16.msra.mxu0 %v973
  %1328 = vmatprep.subr.bf16.mxu0 0
  %1329 = vmatpush1.bf16.msra.mxu0 %v974
  %1330 = vmatprep.subr.bf16.mxu0 0
  %1331 = vmatpush1.bf16.msra.mxu0 %v975
  %1332 = vmatprep.subr.bf16.mxu0 0
  %1333 = vmatpush1.bf16.msra.mxu0 %v976
  %1334 = vmatprep.subr.bf16.mxu0 0
  %1335 = vmatpush1.bf16.msra.mxu0 %v977
  %1336 = vmatprep.subr.bf16.mxu0 0
  %1337 = vmatpush1.bf16.msra.mxu0 %v978
  %1338 = vmatprep.subr.bf16.mxu0 0
  %1339 = vmatpush1.bf16.msra.mxu0 %v979
  %1340 = vmatprep.subr.bf16.mxu0 0
  %1341 = vmatpush1.bf16.msra.mxu0 %v980
  %1342 = vmatprep.subr.bf16.mxu0 0
  %1343 = vmatpush1.bf16.msra.mxu0 %v981
  %1344 = vmatprep.subr.bf16.mxu0 0
  %1345 = vmatpush1.bf16.msra.mxu0 %v982
  %1346 = vmatprep.subr.bf16.mxu0 0
  %1347 = vmatpush1.bf16.msra.mxu0 %v983
  %1348 = vmatprep.subr.bf16.mxu0 0
  %1349 = vmatpush1.bf16.msra.mxu0 %v984
  %1350 = vmatprep.subr.bf16.mxu0 0
  %1351 = vmatpush1.bf16.msra.mxu0 %v985
  %1352 = vmatprep.subr.bf16.mxu0 0
  %1353 = vmatpush1.bf16.msra.mxu0 %v986
  %1354 = vmatprep.subr.bf16.mxu0 0
  %1355 = vmatpush1.bf16.msra.mxu0 %v987
  %1356 = vmatprep.mubr.bf16.mxu0 %v368
  %1357 = vmatmul.mubr.bf16.gmra.mrb[0].mxu0 %v354
  %v1358 = vpop.f32.mrb[0].mxu0
  %v1359 = vadd.f32 %v1319, %v1358
  %v1360 = vpop.f32.mrb[0].mxu0
  %v1361 = vpop.f32.mrb[0].mxu0
  %v1362 = vpop.f32.mrb[0].mxu0
  %1363 = vdwg.mxu0
  %1364 = vmatprep.subr.bf16.mxu0 0
  %1365 = vmatpush1.bf16.msra.mxu0 %v988
  %1366 = vmatprep.subr.bf16.mxu0 0
  %1367 = vmatpush1.bf16.msra.mxu0 %v989
  %1368 = vmatprep.subr.bf16.mxu0 0
  %1369 = vmatpush1.bf16.msra.mxu0 %v990
  %1370 = vmatprep.subr.bf16.mxu0 0
  %1371 = vmatpush1.bf16.msra.mxu0 %v991
  %1372 = vmatprep.subr.bf16.mxu0 0
  %1373 = vmatpush1.bf16.msra.mxu0 %v992
  %1374 = vmatprep.subr.bf16.mxu0 0
  %1375 = vmatpush1.bf16.msra.mxu0 %v993
  %1376 = vmatprep.subr.bf16.mxu0 0
  %1377 = vmatpush1.bf16.msra.mxu0 %v994
  %1378 = vmatprep.subr.bf16.mxu0 0
  %1379 = vmatpush1.bf16.msra.mxu0 %v995
  %1380 = vmatprep.subr.bf16.mxu0 0
  %1381 = vmatpush1.bf16.msra.mxu0 %v996
  %1382 = vmatprep.subr.bf16.mxu0 0
  %1383 = vmatpush1.bf16.msra.mxu0 %v997
  %1384 = vmatprep.subr.bf16.mxu0 0
  %1385 = vmatpush1.bf16.msra.mxu0 %v998
  %1386 = vmatprep.subr.bf16.mxu0 0
  %1387 = vmatpush1.bf16.msra.mxu0 %v999
  %1388 = vmatprep.subr.bf16.mxu0 0
  %1389 = vmatpush1.bf16.msra.mxu0 %v1000
  %1390 = vmatprep.subr.bf16.mxu0 0
  %1391 = vmatpush1.bf16.msra.mxu0 %v1001
  %1392 = vmatprep.subr.bf16.mxu0 0
  %1393 = vmatpush1.bf16.msra.mxu0 %v1002
  %1394 = vmatprep.subr.bf16.mxu0 0
  %1395 = vmatpush1.bf16.msra.mxu0 %v1003
  %1396 = vmatprep.mubr.bf16.mxu0 %v378
  %1397 = vmatmul.mubr.bf16.gmra.mrb[0].mxu0 %v376
  %v1398 = vpop.f32.mrb[0].mxu0
  %v1399 = vadd.f32 %v1359, %v1398
  %v1400 = vpop.f32.mrb[0].mxu0
  %v1401 = vpop.f32.mrb[0].mxu0
  %v1402 = vpop.f32.mrb[0].mxu0
  %1403 = vdwg.mxu0
  %1404 = vmatprep.subr.bf16.mxu0 0
  %1405 = vmatpush1.bf16.msra.mxu0 %v1004
  %1406 = vmatprep.subr.bf16.mxu0 0
  %1407 = vmatpush1.bf16.msra.mxu0 %v1005
  %1408 = vmatprep.subr.bf16.mxu0 0
  %1409 = vmatpush1.bf16.msra.mxu0 %v1006
  %1410 = vmatprep.subr.bf16.mxu0 0
  %1411 = vmatpush1.bf16.msra.mxu0 %v1007
  %1412 = vmatprep.subr.bf16.mxu0 0
  %1413 = vmatpush1.bf16.msra.mxu0 %v1008
  %1414 = vmatprep.subr.bf16.mxu0 0
  %1415 = vmatpush1.bf16.msra.mxu0 %v1009
  %1416 = vmatprep.subr.bf16.mxu0 0
  %1417 = vmatpush1.bf16.msra.mxu0 %v1010
  %1418 = vmatprep.subr.bf16.mxu0 0
  %1419 = vmatpush1.bf16.msra.mxu0 %v1011
  %1420 = vmatprep.subr.bf16.mxu0 0
  %1421 = vmatpush1.bf16.msra.mxu0 %v1012
  %1422 = vmatprep.subr.bf16.mxu0 0
  %1423 = vmatpush1.bf16.msra.mxu0 %v1013
  %1424 = vmatprep.subr.bf16.mxu0 0
  %1425 = vmatpush1.bf16.msra.mxu0 %v1014
  %1426 = vmatprep.subr.bf16.mxu0 0
  %1427 = vmatpush1.bf16.msra.mxu0 %v1015
  %1428 = vmatprep.subr.bf16.mxu0 0
  %1429 = vmatpush1.bf16.msra.mxu0 %v1016
  %1430 = vmatprep.subr.bf16.mxu0 0
  %1431 = vmatpush1.bf16.msra.mxu0 %v1017
  %1432 = vmatprep.subr.bf16.mxu0 0
  %1433 = vmatpush1.bf16.msra.mxu0 %v1018
  %1434 = vmatprep.subr.bf16.mxu0 0
  %1435 = vmatpush1.bf16.msra.mxu0 %v1019
  %1436 = vmatprep.mubr.bf16.mxu0 %v375
  %1437 = vmatmul.mubr.bf16.gmra.mrb[0].mxu0 %v361
  %v1438 = vpop.f32.mrb[0].mxu0
  %v1439 = vadd.f32 %v1399, %v1438
  %v1440 = vpop.f32.mrb[0].mxu0
  %v1441 = vpop.f32.mrb[0].mxu0
  %v1442 = vpop.f32.mrb[0].mxu0
  %1443 = vdwg.mxu0
  %1444 = vmatprep.subr.bf16.mxu0 0
  %1445 = vmatpush1.bf16.msra.mxu0 %v1020
  %1446 = vmatprep.subr.bf16.mxu0 0
  %1447 = vmatpush1.bf16.msra.mxu0 %v1021
  %1448 = vmatprep.subr.bf16.mxu0 0
  %1449 = vmatpush1.bf16.msra.mxu0 %v1022
  %1450 = vmatprep.subr.bf16.mxu0 0
  %1451 = vmatpush1.bf16.msra.mxu0 %v1023
  %1452 = vmatprep.subr.bf16.mxu0 0
  %1453 = vmatpush1.bf16.msra.mxu0 %v1024
  %1454 = vmatprep.subr.bf16.mxu0 0
  %1455 = vmatpush1.bf16.msra.mxu0 %v1025
  %1456 = vmatprep.subr.bf16.mxu0 0
  %1457 = vmatpush1.bf16.msra.mxu0 %v1026
  %1458 = vmatprep.subr.bf16.mxu0 0
  %1459 = vmatpush1.bf16.msra.mxu0 %v1027
  %1460 = vmatprep.subr.bf16.mxu0 0
  %1461 = vmatpush1.bf16.msra.mxu0 %v1028
  %1462 = vmatprep.subr.bf16.mxu0 0
  %1463 = vmatpush1.bf16.msra.mxu0 %v1029
  %1464 = vmatprep.subr.bf16.mxu0 0
  %1465 = vmatpush1.bf16.msra.mxu0 %v1030
  %1466 = vmatprep.subr.bf16.mxu0 0
  %1467 = vmatpush1.bf16.msra.mxu0 %v1031
  %1468 = vmatprep.subr.bf16.mxu0 0
  %1469 = vmatpush1.bf16.msra.mxu0 %v1032
  %1470 = vmatprep.subr.bf16.mxu0 0
  %1471 = vmatpush1.bf16.msra.mxu0 %v1033
  %1472 = vmatprep.subr.bf16.mxu0 0
  %1473 = vmatpush1.bf16.msra.mxu0 %v1034
  %1474 = vmatprep.subr.bf16.mxu0 0
  %1475 = vmatpush1.bf16.msra.mxu0 %v1035
  %1476 = vmatprep.mubr.bf16.mxu0 %v379
  %1477 = vmatmul.mubr.bf16.gmra.mrb[0].mxu0 %v377
  %v1478 = vpop.f32.mrb[0].mxu0
  %v1479 = vadd.f32 %v1439, %v1478
  %v1480 = vpop.f32.mrb[0].mxu0
  %v1481 = vpop.f32.mrb[0].mxu0
  %v1482 = vpop.f32.mrb[0].mxu0
  %1483 = vdwg.mxu0
  %v1484 = vadd.f32 %v21, %v1479
  %vm1485 = vcmask 517120
  %1486 = vst.msk [vmem:[#allocation2] sm:$0x3] %vm1485, %v1484
  // Predicated region
  $region18: #{vae_encoder_forward.9} parent=0 // pred_check
    %p1487 = pneg %p15
  $region19: #{vae_encoder_forward.9} parent=0 // pred_check_branch
    %1489 = sbr.rel (%p1487) target = $region21
  $region20: #{vae_encoder_forward.9} parent=0 // pred_region
    %v1490 = vld [vmem:[#allocation2] sm:$0x3]
    %v1491 = vld [vmem:[%s2] sm:$0x1]
    %v1493 = vlaneseq
    %v1494 = vshrl.u32 %v1493, 7
    %v1495 = vsub.s32 0, %v1494
    %v1496 = vrot.slane %v1491, %v1495
    %v1498 = vadd.f32 %v1490, %v1496
    %1499 = vst.msk [vmem:[%s3] sm:$0x3] %vm1485, %v1498
  $region21: #{vae_encoder_forward.9} parent=0 // pred_fallthru
    _
  // Predicated region
  $region22: #{vae_encoder_forward.9} parent=0 // pred_check
    _
  $region23: #{vae_encoder_forward.9} parent=0 // pred_check_branch
    %1501 = sbr.rel (0) target = $region25
  $region24: #{vae_encoder_forward.9} parent=0 // pred_region
    _
  $region25: #{vae_encoder_forward.9} parent=0 // pred_fallthru
    _
  // Predicated region
  $region26: #{vae_encoder_forward.9} parent=0 // pred_check
    _
  $region27: #{vae_encoder_forward.9} parent=0 // pred_check_branch
    %1503 = sbr.rel (0) target = $region29
  $region28: #{vae_encoder_forward.9} parent=0 // pred_region
    _
  $region29: #{vae_encoder_forward.9} parent=0 // pred_fallthru
    _

// kernel: vae_encoder_forward.8
$region0: #{vae_encoder_forward.8}
  #allocation0 [shape = 'u32[]', space=smem, size = 0x4, offset = 0x4, fixed_abs, tag = 'smem constant byte address 0x4 - core index']
  #allocation1 [shape = 'u32[144,128]{1,0:T(1,128)}', space=vmem, size = 0x12000, scoped, tag = 'internal scratch']
  %s0 = inlined_call_operand.vmem [shape: bf16[2,12,512], index: 0, kind: input, shape index: {}]
  %s1 = inlined_call_operand.vmem [shape: bf16[4,512,256], index: 1, kind: input, shape index: {}]
  %s2 = inlined_call_operand.vmem [shape: f32[1,256], index: 2, kind: input, shape index: {}]
  %s3 = inlined_call_operand.vmem [shape: bf16[2,6,256], index: 3, kind: output, shape index: {}]
  %s4 = sld [smem:[#allocation0]]
  $region45: #{vae_encoder_forward.8} parent=0
    _
  %s6 = ssub.s32 1, %s4
  %s7 = scalar_select 0, %s6, %s4
  loop: start=0, step=1, limit=4
  $region2: #{vae_encoder_forward.8} parent=0 // loop_pre_header
    _
  $region3: #{vae_encoder_forward.8} parent=0 // loop_header
    %s9 = sphi 0, %s13
    %p10 = scmp.ge.s32.totalorder %s9, 4
    %s19 = sphi 0, %s21
    %s22 = sphi 0, %s19
    %s23 = sphi 0, %s22
    %s39 = sphi 0, %s23
    %s43 = sphi 0, %s43
    %s45 = sphi 0, %s43
    %s46 = sphi 0, %s45
    %s60 = sphi 0, %s46
    %s64 = sphi 0, %s64
    %s66 = sphi 0, %s64
    %s67 = sphi 0, %s66
    %s81 = sphi 0, %s67
    %s87 = sphi 0, %s89
    %s90 = sphi 0, %s87
    %s91 = sphi 0, %s90
    %s107 = sphi 0, %s91
  $region4: #{vae_encoder_forward.8} parent=0 // loop_header_branch
    %12 = sbr.rel (%p10) target = $region8
  $region5: #{vae_encoder_forward.8} parent=0 // loop_body
    %s14 = ssub.s32 %s9, 1
    %s15 = ssub.s32 %s9, 2
    %s16 = sadd.s32 %s9, 1
    %s17 = ssub.s32 %s9, %s16
    %p18 = scmp.eq.s32.totalorder %s17, 0
    %s20 = sadd.s32 %s19, 1
    %s21 = scalar_select %p18, %s19, %s20
    %p24 = pneg %p18
    %p25 = scmp.eq.s32.totalorder %s9, 1
    %p26 = por %p24, %p25
    %p27 = scmp.ne.s32.totalorder %s19, %s22
    %p28 = scmp.eq.s32.totalorder %s9, 0
    %p29 = por %p27, %p28
    %p30 = scmp.ne.s32.totalorder %s19, %s22
    %p31 = scmp.eq.s32.totalorder %s14, 1
    %p32 = por %p30, %p31
    %p33 = scmp.ne.s32.totalorder %s22, %s23
    %p34 = scmp.eq.s32.totalorder %s14, 0
    %p35 = por %p33, %p34
    %p36 = scmp.ne.s32.totalorder %s22, %s23
    %p37 = scmp.eq.s32.totalorder %s15, 1
    %p38 = por %p36, %p37
    %p40 = scmp.ne.s32.totalorder %s23, %s39
    %p41 = scmp.eq.s32.totalorder %s15, 0
    %p42 = por %p40, %p41
    %s44 = sadd.s32 %s43, 1
    %p47 = scmp.eq.s32.totalorder %s9, 1
    %p48 = scmp.ne.s32.totalorder %s43, %s45
    %p49 = scmp.eq.s32.totalorder %s9, 0
    %p50 = por %p48, %p49
    %p51 = scmp.ne.s32.totalorder %s43, %s45
    %p52 = scmp.eq.s32.totalorder %s14, 1
    %p53 = por %p51, %p52
    %p54 = scmp.ne.s32.totalorder %s45, %s46
    %p55 = scmp.eq.s32.totalorder %s14, 0
    %p56 = por %p54, %p55
    %p57 = scmp.ne.s32.totalorder %s45, %s46
    %p58 = scmp.eq.s32.totalorder %s15, 1
    %p59 = por %p57, %p58
    %p61 = scmp.ne.s32.totalorder %s46, %s60
    %p62 = scmp.eq.s32.totalorder %s15, 0
    %p63 = por %p61, %p62
    %s65 = sadd.s32 %s64, 1
    %p68 = scmp.eq.s32.totalorder %s9, 1
    %p69 = scmp.ne.s32.totalorder %s64, %s66
    %p70 = scmp.eq.s32.totalorder %s9, 0
    %p71 = por %p69, %p70
    %p72 = scmp.ne.s32.totalorder %s64, %s66
    %p73 = scmp.eq.s32.totalorder %s14, 1
    %p74 = por %p72, %p73
    %p75 = scmp.ne.s32.totalorder %s66, %s67
    %p76 = scmp.eq.s32.totalorder %s14, 0
    %p77 = por %p75, %p76
    %p78 = scmp.ne.s32.totalorder %s66, %s67
    %p79 = scmp.eq.s32.totalorder %s15, 1
    %p80 = por %p78, %p79
    %p82 = scmp.ne.s32.totalorder %s67, %s81
    %p83 = scmp.eq.s32.totalorder %s15, 0
    %p84 = por %p82, %p83
    %s85 = ssub.s32 %s9, %s16
    %p86 = scmp.eq.s32.totalorder %s85, 0
    %s88 = sadd.s32 %s87, 1
    %s89 = scalar_select %p86, %s87, %s88
    %p92 = pneg %p86
    %p93 = scmp.eq.s32.totalorder %s9, 1
    %p94 = por %p92, %p93
    %p95 = scmp.ne.s32.totalorder %s87, %s90
    %p96 = scmp.eq.s32.totalorder %s9, 0
    %p97 = por %p95, %p96
    %p98 = scmp.ne.s32.totalorder %s87, %s90
    %p99 = scmp.eq.s32.totalorder %s14, 1
    %p100 = por %p98, %p99
    %p101 = scmp.ne.s32.totalorder %s90, %s91
    %p102 = scmp.eq.s32.totalorder %s14, 0
    %p103 = por %p101, %p102
    %p104 = scmp.ne.s32.totalorder %s90, %s91
    %p105 = scmp.eq.s32.totalorder %s15, 1
    %p106 = por %p104, %p105
    %p108 = scmp.ne.s32.totalorder %s91, %s107
    %p109 = scmp.eq.s32.totalorder %s15, 0
    %p110 = por %p108, %p109
    %p111 = scmp.le.s32.totalorder 1, %s9
    %p112 = scmp.lt.s32.totalorder %s9, 3
    %p113 = pnand %p111, %p112
    %p114 = pneg %p113
    // Predicated region
    $region9: #{vae_encoder_forward.8} parent=5 // pred_check
      _
    $region10: #{vae_encoder_forward.8} parent=5 // pred_check_branch
      %116 = sbr.rel (%p113) target = $region12
    $region11: #{vae_encoder_forward.8} parent=5 // pred_region
      %s117 = ssub.s32 %s9, 1
      // Predicated region
      $region13: #{vae_encoder_forward.8} parent=11 // pred_check
        %p118 = pneg %p56
      $region14: #{vae_encoder_forward.8} parent=11 // pred_check_branch
        %120 = sbr.rel (%p118) target = $region16
      $region15: #{vae_encoder_forward.8} parent=11 // pred_region
        _
      $region16: #{vae_encoder_forward.8} parent=11 // pred_fallthru
        _
      // Predicated region
      $region17: #{vae_encoder_forward.8} parent=11 // pred_check
        %p121 = pneg %p77
      $region18: #{vae_encoder_forward.8} parent=11 // pred_check_branch
        %123 = sbr.rel (%p121) target = $region20
      $region19: #{vae_encoder_forward.8} parent=11 // pred_region
        _
      $region20: #{vae_encoder_forward.8} parent=11 // pred_fallthru
        _
    $region12: #{vae_encoder_forward.8} parent=5 // pred_fallthru
      _
    %p124 = scmp.lt.s32.totalorder %s9, 2
    // Predicated region
    $region21: #{vae_encoder_forward.8} parent=5 // pred_check
      %p125 = pneg %p124
    $region22: #{vae_encoder_forward.8} parent=5 // pred_check_branch
      %127 = sbr.rel (%p125) target = $region24
    $region23: #{vae_encoder_forward.8} parent=5 // pred_region
      // Predicated region
      $region25: #{vae_encoder_forward.8} parent=23 // pred_check
        %p128 = pneg %p29
      $region26: #{vae_encoder_forward.8} parent=23 // pred_check_branch
        %130 = sbr.rel (%p128) target = $region28
      $region27: #{vae_encoder_forward.8} parent=23 // pred_region
        %p131 = scmp.lt.s32.totalorder %s9, 1
        %s132 = scalar_select %p131, %s9, 1
        %s133 = smul.addr %s132, 8
        %s134 = smul.addr %s133, 4
        %s135 = scalar_lea.vmem %s0, %s134
      $region28: #{vae_encoder_forward.8} parent=23 // pred_fallthru
        _
    $region24: #{vae_encoder_forward.8} parent=5 // pred_fallthru
      _
    %p136 = scmp.le.s32.totalorder 1, %s9
    %p137 = scmp.lt.s32.totalorder %s9, 3
    %p138 = pnand %p136, %p137
    %p139 = pneg %p138
    // Predicated region
    $region29: #{vae_encoder_forward.8} parent=5 // pred_check
      _
    $region30: #{vae_encoder_forward.8} parent=5 // pred_check_branch
      %141 = sbr.rel (%p138) target = $region32
    $region31: #{vae_encoder_forward.8} parent=5 // pred_region
      %s142 = ssub.s32 %s9, 1
      %p143 = scmp.lt.s32.totalorder %s14, 1
      %s144 = scalar_select %p143, %s14, 1
      %s145 = smul.addr %s144, 8
      %s146 = smul.addr %s145, 4
      %s147 = scalar_lea.vmem %s0, %s146
      %p148 = pneg %p35
      %p149 = pneg %p32
      %p150 = pneg %p56
      %p151 = pneg %p53
      %p152 = pneg %p77
      %p153 = pneg %p74
      %p154 = pneg %p103
      %p155 = pneg %p100
      %p156 = scmp.lt.s32.totalorder %s14, 1
      %s157 = scalar_select %p156, %s14, 1
      %s158 = smul.addr %s157, 2
      %s159 = smul.addr %s158, 4
      %s160 = scalar_lea.vmem %s3, %s159
      %p161 = scmp.lt.s32.totalorder %s14, 1
      %s162 = scalar_select %p161, %s14, 1
      %s163 = smul.addr %s162, 8
      %s164 = smul.addr %s163, 4
      %s165 = scalar_lea.vmem %s0, %s164
      %p166 = scmp.lt.s32.totalorder %s14, 1
      %s167 = scalar_select %p166, %s14, 1
      %s168 = smul.addr %s167, 2
      %s169 = smul.addr %s168, 4
      %s170 = scalar_lea.vmem %s3, %s169
      %v171 = vld [vmem:[%s165] sm:$0x77]
      %v172 = vld [vmem:[%s165 + $0x8] sm:$0x77]
      %v173 = vld [vmem:[%s1] sm:$0xff]
      %v174 = vld [vmem:[%s1 + $0x8] sm:$0xff]
      %v175 = vld [vmem:[%s1 + $0x10] sm:$0xff]
      %v176 = vld [vmem:[%s1 + $0x18] sm:$0xff]
      %v177 = vld [vmem:[%s1 + $0x20] sm:$0xff]
      %v178 = vld [vmem:[%s1 + $0x28] sm:$0xff]
      %v179 = vld [vmem:[%s1 + $0x30] sm:$0xff]
      %v180 = vld [vmem:[%s1 + $0x38] sm:$0xff]
      %v181 = vld [vmem:[%s1 + $0x40] sm:$0xff]
      %v182 = vld [vmem:[%s1 + $0x48] sm:$0xff]
      %v183 = vld [vmem:[%s1 + $0x50] sm:$0xff]
      %v184 = vld [vmem:[%s1 + $0x58] sm:$0xff]
      %v185 = vld [vmem:[%s1 + $0x60] sm:$0xff]
      %v186 = vld [vmem:[%s1 + $0x68] sm:$0xff]
      %v187 = vld [vmem:[%s1 + $0x70] sm:$0xff]
      %v188 = vld [vmem:[%s1 + $0x78] sm:$0xff]
      %v189 = vld [vmem:[%s1 + $0x80] sm:$0xff]
      %v190 = vld [vmem:[%s1 + $0x88] sm:$0xff]
      %v191 = vld [vmem:[%s1 + $0x90] sm:$0xff]
      %v192 = vld [vmem:[%s1 + $0x98] sm:$0xff]
      %v193 = vld [vmem:[%s1 + $0xa0] sm:$0xff]
      %v194 = vld [vmem:[%s1 + $0xa8] sm:$0xff]
      %v195 = vld [vmem:[%s1 + $0xb0] sm:$0xff]
      %v196 = vld [vmem:[%s1 + $0xb8] sm:$0xff]
      %v197 = vld [vmem:[%s1 + $0xc0] sm:$0xff]
      %v198 = vld [vmem:[%s1 + $0xc8] sm:$0xff]
      %v199 = vld [vmem:[%s1 + $0xd0] sm:$0xff]
      %v200 = vld [vmem:[%s1 + $0xd8] sm:$0xff]
      %v201 = vld [vmem:[%s1 + $0xe0] sm:$0xff]
      %v202 = vld [vmem:[%s1 + $0xe8] sm:$0xff]
      %v203 = vld [vmem:[%s1 + $0xf0] sm:$0xff]
      %v204 = vld [vmem:[%s1 + $0xf8] sm:$0xff]
      %v205 = vld [vmem:[%s1 + $0x100] sm:$0xff]
      %v206 = vld [vmem:[%s1 + $0x108] sm:$0xff]
      %v207 = vld [vmem:[%s1 + $0x110] sm:$0xff]
      %v208 = vld [vmem:[%s1 + $0x118] sm:$0xff]
      %v209 = vld [vmem:[%s1 + $0x120] sm:$0xff]
      %v210 = vld [vmem:[%s1 + $0x128] sm:$0xff]
      %v211 = vld [vmem:[%s1 + $0x130] sm:$0xff]
      %v212 = vld [vmem:[%s1 + $0x138] sm:$0xff]
      %v213 = vld [vmem:[%s1 + $0x140] sm:$0xff]
      %v214 = vld [vmem:[%s1 + $0x148] sm:$0xff]
      %v215 = vld [vmem:[%s1 + $0x150] sm:$0xff]
      %v216 = vld [vmem:[%s1 + $0x158] sm:$0xff]
      %v217 = vld [vmem:[%s1 + $0x160] sm:$0xff]
      %v218 = vld [vmem:[%s1 + $0x168] sm:$0xff]
      %v219 = vld [vmem:[%s1 + $0x170] sm:$0xff]
      %v220 = vld [vmem:[%s1 + $0x178] sm:$0xff]
      %v221 = vld [vmem:[%s1 + $0x180] sm:$0xff]
      %v222 = vld [vmem:[%s1 + $0x188] sm:$0xff]
      %v223 = vld [vmem:[%s1 + $0x190] sm:$0xff]
      %v224 = vld [vmem:[%s1 + $0x198] sm:$0xff]
      %v225 = vld [vmem:[%s1 + $0x1a0] sm:$0xff]
      %v226 = vld [vmem:[%s1 + $0x1a8] sm:$0xff]
      %v227 = vld [vmem:[%s1 + $0x1b0] sm:$0xff]
      %v228 = vld [vmem:[%s1 + $0x1b8] sm:$0xff]
      %v229 = vld [vmem:[%s1 + $0x1c0] sm:$0xff]
      %v230 = vld [vmem:[%s1 + $0x1c8] sm:$0xff]
      %v231 = vld [vmem:[%s1 + $0x1d0] sm:$0xff]
      %v232 = vld [vmem:[%s1 + $0x1d8] sm:$0xff]
      %v233 = vld [vmem:[%s1 + $0x1e0] sm:$0xff]
      %v234 = vld [vmem:[%s1 + $0x1e8] sm:$0xff]
      %v235 = vld [vmem:[%s1 + $0x1f0] sm:$0xff]
      %v236 = vld [vmem:[%s1 + $0x1f8] sm:$0xff]
      %v237 = vld [vmem:[%s165] sm:$0xff]
      %v238 = vld [vmem:[%s165 + $0x8] sm:$0xff]
      %s239 = scalar_lea.vmem %s1, 512
      %v240 = vld [vmem:[%s239] sm:$0xff]
      %v241 = vld [vmem:[%s239 + $0x8] sm:$0xff]
      %v242 = vld [vmem:[%s239 + $0x10] sm:$0xff]
      %v243 = vld [vmem:[%s239 + $0x18] sm:$0xff]
      %v244 = vld [vmem:[%s239 + $0x20] sm:$0xff]
      %v245 = vld [vmem:[%s239 + $0x28] sm:$0xff]
      %v246 = vld [vmem:[%s239 + $0x30] sm:$0xff]
      %v247 = vld [vmem:[%s239 + $0x38] sm:$0xff]
      %v248 = vld [vmem:[%s239 + $0x40] sm:$0xff]
      %v249 = vld [vmem:[%s239 + $0x48] sm:$0xff]
      %v250 = vld [vmem:[%s239 + $0x50] sm:$0xff]
      %v251 = vld [vmem:[%s239 + $0x58] sm:$0xff]
      %v252 = vld [vmem:[%s239 + $0x60] sm:$0xff]
      %v253 = vld [vmem:[%s239 + $0x68] sm:$0xff]
      %v254 = vld [vmem:[%s239 + $0x70] sm:$0xff]
      %v255 = vld [vmem:[%s239 + $0x78] sm:$0xff]
      %v256 = vld [vmem:[%s239 + $0x80] sm:$0xff]
      %v257 = vld [vmem:[%s239 + $0x88] sm:$0xff]
      %v258 = vld [vmem:[%s239 + $0x90] sm:$0xff]
      %v259 = vld [vmem:[%s239 + $0x98] sm:$0xff]
      %v260 = vld [vmem:[%s239 + $0xa0] sm:$0xff]
      %v261 = vld [vmem:[%s239 + $0xa8] sm:$0xff]
      %v262 = vld [vmem:[%s239 + $0xb0] sm:$0xff]
      %v263 = vld [vmem:[%s239 + $0xb8] sm:$0xff]
      %v264 = vld [vmem:[%s239 + $0xc0] sm:$0xff]
      %v265 = vld [vmem:[%s239 + $0xc8] sm:$0xff]
      %v266 = vld [vmem:[%s239 + $0xd0] sm:$0xff]
      %v267 = vld [vmem:[%s239 + $0xd8] sm:$0xff]
      %v268 = vld [vmem:[%s239 + $0xe0] sm:$0xff]
      %v269 = vld [vmem:[%s239 + $0xe8] sm:$0xff]
      %v270 = vld [vmem:[%s239 + $0xf0] sm:$0xff]
      %v271 = vld [vmem:[%s239 + $0xf8] sm:$0xff]
      %v272 = vld [vmem:[%s239 + $0x100] sm:$0xff]
      %v273 = vld [vmem:[%s239 + $0x108] sm:$0xff]
      %v274 = vld [vmem:[%s239 + $0x110] sm:$0xff]
      %v275 = vld [vmem:[%s239 + $0x118] sm:$0xff]
      %v276 = vld [vmem:[%s239 + $0x120] sm:$0xff]
      %v277 = vld [vmem:[%s239 + $0x128] sm:$0xff]
      %v278 = vld [vmem:[%s239 + $0x130] sm:$0xff]
      %v279 = vld [vmem:[%s239 + $0x138] sm:$0xff]
      %v280 = vld [vmem:[%s239 + $0x140] sm:$0xff]
      %v281 = vld [vmem:[%s239 + $0x148] sm:$0xff]
      %v282 = vld [vmem:[%s239 + $0x150] sm:$0xff]
      %v283 = vld [vmem:[%s239 + $0x158] sm:$0xff]
      %v284 = vld [vmem:[%s239 + $0x160] sm:$0xff]
      %v285 = vld [vmem:[%s239 + $0x168] sm:$0xff]
      %v286 = vld [vmem:[%s239 + $0x170] sm:$0xff]
      %v287 = vld [vmem:[%s239 + $0x178] sm:$0xff]
      %v288 = vld [vmem:[%s239 + $0x180] sm:$0xff]
      %v289 = vld [vmem:[%s239 + $0x188] sm:$0xff]
      %v290 = vld [vmem:[%s239 + $0x190] sm:$0xff]
      %v291 = vld [vmem:[%s239 + $0x198] sm:$0xff]
      %v292 = vld [vmem:[%s239 + $0x1a0] sm:$0xff]
      %v293 = vld [vmem:[%s239 + $0x1a8] sm:$0xff]
      %v294 = vld [vmem:[%s239 + $0x1b0] sm:$0xff]
      %v295 = vld [vmem:[%s239 + $0x1b8] sm:$0xff]
      %v296 = vld [vmem:[%s239 + $0x1c0] sm:$0xff]
      %v297 = vld [vmem:[%s239 + $0x1c8] sm:$0xff]
      %v298 = vld [vmem:[%s239 + $0x1d0] sm:$0xff]
      %v299 = vld [vmem:[%s239 + $0x1d8] sm:$0xff]
      %v300 = vld [vmem:[%s239 + $0x1e0] sm:$0xff]
      %v301 = vld [vmem:[%s239 + $0x1e8] sm:$0xff]
      %v302 = vld [vmem:[%s239 + $0x1f0] sm:$0xff]
      %v303 = vld [vmem:[%s239 + $0x1f8] sm:$0xff]
      %v306 = vunpack.c.l.b16 %v237
      %v307 = vunpack.c.h.b16 %v237
      %v308 = vunpack.c.l.b16 %v238
      %v309 = vunpack.c.h.b16 %v238
      %v310 = vpack.c.b16 %v306, %v306
      %v311 = vpack.c.b16 %v307, %v307
      %v312 = vpack.c.b16 %v308, %v308
      %v313 = vpack.c.b16 %v309, %v309
      %v315 = vshrl.u32 %v310, 16
      %v317 = vshll.u32 %v310, 16
      %v319 = vrot.slane %v317, 1
      %v320 = vor.u32 %v315, %v319
      %v322 = vshrl.u32 %v311, 16
      %v324 = vshll.u32 %v311, 16
      %v326 = vrot.slane %v324, 1
      %v327 = vor.u32 %v322, %v326
      %v329 = vshrl.u32 %v312, 16
      %v331 = vshll.u32 %v312, 16
      %v333 = vrot.slane %v331, 1
      %v334 = vor.u32 %v329, %v333
      %v336 = vshrl.u32 %v313, 16
      %v338 = vshll.u32 %v313, 16
      %v340 = vrot.slane %v338, 1
      %v341 = vor.u32 %v336, %v340
      %v410 = vunpack.c.l.b16 %v240
      %v411 = vunpack.c.h.b16 %v240
      %v412 = vunpack.c.l.b16 %v241
      %v413 = vunpack.c.h.b16 %v241
      %v414 = vunpack.c.l.b16 %v242
      %v415 = vunpack.c.h.b16 %v242
      %v416 = vunpack.c.l.b16 %v243
      %v417 = vunpack.c.h.b16 %v243
      %v418 = vunpack.c.l.b16 %v244
      %v419 = vunpack.c.h.b16 %v244
      %v420 = vunpack.c.l.b16 %v245
      %v421 = vunpack.c.h.b16 %v245
      %v422 = vunpack.c.l.b16 %v246
      %v423 = vunpack.c.h.b16 %v246
      %v424 = vunpack.c.l.b16 %v247
      %v425 = vunpack.c.h.b16 %v247
      %v426 = vunpack.c.l.b16 %v248
      %v427 = vunpack.c.h.b16 %v248
      %v428 = vunpack.c.l.b16 %v249
      %v429 = vunpack.c.h.b16 %v249
      %v430 = vunpack.c.l.b16 %v250
      %v431 = vunpack.c.h.b16 %v250
      %v432 = vunpack.c.l.b16 %v251
      %v433 = vunpack.c.h.b16 %v251
      %v434 = vunpack.c.l.b16 %v252
      %v435 = vunpack.c.h.b16 %v252
      %v436 = vunpack.c.l.b16 %v253
      %v437 = vunpack.c.h.b16 %v253
      %v438 = vunpack.c.l.b16 %v254
      %v439 = vunpack.c.h.b16 %v254
      %v440 = vunpack.c.l.b16 %v255
      %v441 = vunpack.c.h.b16 %v255
      %v442 = vunpack.c.l.b16 %v256
      %v443 = vunpack.c.h.b16 %v256
      %v444 = vunpack.c.l.b16 %v257
      %v445 = vunpack.c.h.b16 %v257
      %v446 = vunpack.c.l.b16 %v258
      %v447 = vunpack.c.h.b16 %v258
      %v448 = vunpack.c.l.b16 %v259
      %v449 = vunpack.c.h.b16 %v259
      %v450 = vunpack.c.l.b16 %v260
      %v451 = vunpack.c.h.b16 %v260
      %v452 = vunpack.c.l.b16 %v261
      %v453 = vunpack.c.h.b16 %v261
      %v454 = vunpack.c.l.b16 %v262
      %v455 = vunpack.c.h.b16 %v262
      %v456 = vunpack.c.l.b16 %v263
      %v457 = vunpack.c.h.b16 %v263
      %v458 = vunpack.c.l.b16 %v264
      %v459 = vunpack.c.h.b16 %v264
      %v460 = vunpack.c.l.b16 %v265
      %v461 = vunpack.c.h.b16 %v265
      %v462 = vunpack.c.l.b16 %v266
      %v463 = vunpack.c.h.b16 %v266
      %v464 = vunpack.c.l.b16 %v267
      %v465 = vunpack.c.h.b16 %v267
      %v466 = vunpack.c.l.b16 %v268
      %v467 = vunpack.c.h.b16 %v268
      %v468 = vunpack.c.l.b16 %v269
      %v469 = vunpack.c.h.b16 %v269
      %v470 = vunpack.c.l.b16 %v270
      %v471 = vunpack.c.h.b16 %v270
      %v472 = vunpack.c.l.b16 %v271
      %v473 = vunpack.c.h.b16 %v271
      %v474 = vunpack.c.l.b16 %v272
      %v475 = vunpack.c.h.b16 %v272
      %v476 = vunpack.c.l.b16 %v273
      %v477 = vunpack.c.h.b16 %v273
      %v478 = vunpack.c.l.b16 %v274
      %v479 = vunpack.c.h.b16 %v274
      %v480 = vunpack.c.l.b16 %v275
      %v481 = vunpack.c.h.b16 %v275
      %v482 = vunpack.c.l.b16 %v276
      %v483 = vunpack.c.h.b16 %v276
      %v484 = vunpack.c.l.b16 %v277
      %v485 = vunpack.c.h.b16 %v277
      %v486 = vunpack.c.l.b16 %v278
      %v487 = vunpack.c.h.b16 %v278
      %v488 = vunpack.c.l.b16 %v279
      %v489 = vunpack.c.h.b16 %v279
      %v490 = vunpack.c.l.b16 %v280
      %v491 = vunpack.c.h.b16 %v280
      %v492 = vunpack.c.l.b16 %v281
      %v493 = vunpack.c.h.b16 %v281
      %v494 = vunpack.c.l.b16 %v282
      %v495 = vunpack.c.h.b16 %v282
      %v496 = vunpack.c.l.b16 %v283
      %v497 = vunpack.c.h.b16 %v283
      %v498 = vunpack.c.l.b16 %v284
      %v499 = vunpack.c.h.b16 %v284
      %v500 = vunpack.c.l.b16 %v285
      %v501 = vunpack.c.h.b16 %v285
      %v502 = vunpack.c.l.b16 %v286
      %v503 = vunpack.c.h.b16 %v286
      %v504 = vunpack.c.l.b16 %v287
      %v505 = vunpack.c.h.b16 %v287
      %v506 = vunpack.c.l.b16 %v288
      %v507 = vunpack.c.h.b16 %v288
      %v508 = vunpack.c.l.b16 %v289
      %v509 = vunpack.c.h.b16 %v289
      %v510 = vunpack.c.l.b16 %v290
      %v511 = vunpack.c.h.b16 %v290
      %v512 = vunpack.c.l.b16 %v291
      %v513 = vunpack.c.h.b16 %v291
      %v514 = vunpack.c.l.b16 %v292
      %v515 = vunpack.c.h.b16 %v292
      %v516 = vunpack.c.l.b16 %v293
      %v517 = vunpack.c.h.b16 %v293
      %v518 = vunpack.c.l.b16 %v294
      %v519 = vunpack.c.h.b16 %v294
      %v520 = vunpack.c.l.b16 %v295
      %v521 = vunpack.c.h.b16 %v295
      %v522 = vunpack.c.l.b16 %v296
      %v523 = vunpack.c.h.b16 %v296
      %v524 = vunpack.c.l.b16 %v297
      %v525 = vunpack.c.h.b16 %v297
      %v526 = vunpack.c.l.b16 %v298
      %v527 = vunpack.c.h.b16 %v298
      %v528 = vunpack.c.l.b16 %v299
      %v529 = vunpack.c.h.b16 %v299
      %v530 = vunpack.c.l.b16 %v300
      %v531 = vunpack.c.h.b16 %v300
      %v532 = vunpack.c.l.b16 %v301
      %v533 = vunpack.c.h.b16 %v301
      %v534 = vunpack.c.l.b16 %v302
      %v535 = vunpack.c.h.b16 %v302
      %v536 = vunpack.c.l.b16 %v303
      %v537 = vunpack.c.h.b16 %v303
      %v538 = vpack.c.b16 %v412, %v410
      %v539 = vpack.c.b16 %v413, %v411
      %v540 = vpack.c.b16 %v416, %v414
      %v541 = vpack.c.b16 %v417, %v415
      %v542 = vpack.c.b16 %v420, %v418
      %v543 = vpack.c.b16 %v421, %v419
      %v544 = vpack.c.b16 %v424, %v422
      %v545 = vpack.c.b16 %v425, %v423
      %v546 = vpack.c.b16 %v428, %v426
      %v547 = vpack.c.b16 %v429, %v427
      %v548 = vpack.c.b16 %v432, %v430
      %v549 = vpack.c.b16 %v433, %v431
      %v550 = vpack.c.b16 %v436, %v434
      %v551 = vpack.c.b16 %v437, %v435
      %v552 = vpack.c.b16 %v440, %v438
      %v553 = vpack.c.b16 %v441, %v439
      %v554 = vpack.c.b16 %v444, %v442
      %v555 = vpack.c.b16 %v445, %v443
      %v556 = vpack.c.b16 %v448, %v446
      %v557 = vpack.c.b16 %v449, %v447
      %v558 = vpack.c.b16 %v452, %v450
      %v559 = vpack.c.b16 %v453, %v451
      %v560 = vpack.c.b16 %v456, %v454
      %v561 = vpack.c.b16 %v457, %v455
      %v562 = vpack.c.b16 %v460, %v458
      %v563 = vpack.c.b16 %v461, %v459
      %v564 = vpack.c.b16 %v464, %v462
      %v565 = vpack.c.b16 %v465, %v463
      %v566 = vpack.c.b16 %v468, %v466
      %v567 = vpack.c.b16 %v469, %v467
      %v568 = vpack.c.b16 %v472, %v470
      %v569 = vpack.c.b16 %v473, %v471
      %v570 = vpack.c.b16 %v476, %v474
      %v571 = vpack.c.b16 %v477, %v475
      %v572 = vpack.c.b16 %v480, %v478
      %v573 = vpack.c.b16 %v481, %v479
      %v574 = vpack.c.b16 %v484, %v482
      %v575 = vpack.c.b16 %v485, %v483
      %v576 = vpack.c.b16 %v488, %v486
      %v577 = vpack.c.b16 %v489, %v487
      %v578 = vpack.c.b16 %v492, %v490
      %v579 = vpack.c.b16 %v493, %v491
      %v580 = vpack.c.b16 %v496, %v494
      %v581 = vpack.c.b16 %v497, %v495
      %v582 = vpack.c.b16 %v500, %v498
      %v583 = vpack.c.b16 %v501, %v499
      %v584 = vpack.c.b16 %v504, %v502
      %v585 = vpack.c.b16 %v505, %v503
      %v586 = vpack.c.b16 %v508, %v506
      %v587 = vpack.c.b16 %v509, %v507
      %v588 = vpack.c.b16 %v512, %v510
      %v589 = vpack.c.b16 %v513, %v511
      %v590 = vpack.c.b16 %v516, %v514
      %v591 = vpack.c.b16 %v517, %v515
      %v592 = vpack.c.b16 %v520, %v518
      %v593 = vpack.c.b16 %v521, %v519
      %v594 = vpack.c.b16 %v524, %v522
      %v595 = vpack.c.b16 %v525, %v523
      %v596 = vpack.c.b16 %v528, %v526
      %v597 = vpack.c.b16 %v529, %v527
      %v598 = vpack.c.b16 %v532, %v530
      %v599 = vpack.c.b16 %v533, %v531
      %v600 = vpack.c.b16 %v536, %v534
      %v601 = vpack.c.b16 %v537, %v535
      %666 = vmatprep.subr.bf16.mxu0 %v539
      %667 = vmatpush1.bf16.msra.mxu0 %v538
      %668 = vmatprep.subr.bf16.mxu0 %v541
      %669 = vmatpush1.bf16.msra.mxu0 %v540
      %670 = vmatprep.subr.bf16.mxu0 %v543
      %671 = vmatpush1.bf16.msra.mxu0 %v542
      %672 = vmatprep.subr.bf16.mxu0 %v545
      %673 = vmatpush1.bf16.msra.mxu0 %v544
      %674 = vmatprep.subr.bf16.mxu0 %v547
      %675 = vmatpush1.bf16.msra.mxu0 %v546
      %676 = vmatprep.subr.bf16.mxu0 %v549
      %677 = vmatpush1.bf16.msra.mxu0 %v548
      %678 = vmatprep.subr.bf16.mxu0 %v551
      %679 = vmatpush1.bf16.msra.mxu0 %v550
      %680 = vmatprep.subr.bf16.mxu0 %v553
      %681 = vmatpush1.bf16.msra.mxu0 %v552
      %682 = vmatprep.subr.bf16.mxu0 %v555
      %683 = vmatpush1.bf16.msra.mxu0 %v554
      %684 = vmatprep.subr.bf16.mxu0 %v557
      %685 = vmatpush1.bf16.msra.mxu0 %v556
      %686 = vmatprep.subr.bf16.mxu0 %v559
      %687 = vmatpush1.bf16.msra.mxu0 %v558
      %688 = vmatprep.subr.bf16.mxu0 %v561
      %689 = vmatpush1.bf16.msra.mxu0 %v560
      %690 = vmatprep.subr.bf16.mxu0 %v563
      %691 = vmatpush1.bf16.msra.mxu0 %v562
      %692 = vmatprep.subr.bf16.mxu0 %v565
      %693 = vmatpush1.bf16.msra.mxu0 %v564
      %694 = vmatprep.subr.bf16.mxu0 %v567
      %695 = vmatpush1.bf16.msra.mxu0 %v566
      %696 = vmatprep.subr.bf16.mxu0 %v569
      %697 = vmatpush1.bf16.msra.mxu0 %v568
      %698 = vmatprep.mubr.bf16.mxu0 %v327
      %699 = vmatmul.mubr.bf16.gmra.mrb[0].mxu0 %v320
      %v700 = vpop.f32.mrb[0].mxu0
      %v701 = vadd.f32 0.0, %v700
      %v702 = vpop.f32.mrb[0].mxu0
      %v703 = vadd.f32 0.0, %v702
      %v704 = vpop.f32.mrb[0].mxu0
      %v705 = vpop.f32.mrb[0].mxu0
      %706 = vdwg.mxu0
      %707 = vmatprep.subr.bf16.mxu0 %v571
      %708 = vmatpush1.bf16.msra.mxu0 %v570
      %709 = vmatprep.subr.bf16.mxu0 %v573
      %710 = vmatpush1.bf16.msra.mxu0 %v572
      %711 = vmatprep.subr.bf16.mxu0 %v575
      %712 = vmatpush1.bf16.msra.mxu0 %v574
      %713 = vmatprep.subr.bf16.mxu0 %v577
      %714 = vmatpush1.bf16.msra.mxu0 %v576
      %715 = vmatprep.subr.bf16.mxu0 %v579
      %716 = vmatpush1.bf16.msra.mxu0 %v578
      %717 = vmatprep.subr.bf16.mxu0 %v581
      %718 = vmatpush1.bf16.msra.mxu0 %v580
      %719 = vmatprep.subr.bf16.mxu0 %v583
      %720 = vmatpush1.bf16.msra.mxu0 %v582
      %721 = vmatprep.subr.bf16.mxu0 %v585
      %722 = vmatpush1.bf16.msra.mxu0 %v584
      %723 = vmatprep.subr.bf16.mxu0 %v587
      %724 = vmatpush1.bf16.msra.mxu0 %v586
      %725 = vmatprep.subr.bf16.mxu0 %v589
      %726 = vmatpush1.bf16.msra.mxu0 %v588
      %727 = vmatprep.subr.bf16.mxu0 %v591
      %728 = vmatpush1.bf16.msra.mxu0 %v590
      %729 = vmatprep.subr.bf16.mxu0 %v593
      %730 = vmatpush1.bf16.msra.mxu0 %v592
      %731 = vmatprep.subr.bf16.mxu0 %v595
      %732 = vmatpush1.bf16.msra.mxu0 %v594
      %733 = vmatprep.subr.bf16.mxu0 %v597
      %734 = vmatpush1.bf16.msra.mxu0 %v596
      %735 = vmatprep.subr.bf16.mxu0 %v599
      %736 = vmatpush1.bf16.msra.mxu0 %v598
      %737 = vmatprep.subr.bf16.mxu0 %v601
      %738 = vmatpush1.bf16.msra.mxu0 %v600
      %739 = vmatprep.mubr.bf16.mxu0 %v341
      %740 = vmatmul.mubr.bf16.gmra.mrb[0].mxu0 %v334
      %v741 = vpop.f32.mrb[0].mxu0
      %v742 = vadd.f32 %v701, %v741
      %v743 = vpop.f32.mrb[0].mxu0
      %v744 = vadd.f32 %v703, %v743
      %v745 = vpop.f32.mrb[0].mxu0
      %v746 = vpop.f32.mrb[0].mxu0
      %747 = vdwg.mxu0
      %v750 = vunpack.c.l.b16 %v171
      %v751 = vunpack.c.h.b16 %v171
      %v752 = vunpack.c.l.b16 %v172
      %v753 = vunpack.c.h.b16 %v172
      %v754 = vpack.c.b16 %v750, %v750
      %v755 = vpack.c.b16 %v751, %v751
      %v756 = vpack.c.b16 %v752, %v752
      %v757 = vpack.c.b16 %v753, %v753
      %v826 = vunpack.c.l.b16 %v173
      %v827 = vunpack.c.h.b16 %v173
      %v828 = vunpack.c.l.b16 %v174
      %v829 = vunpack.c.h.b16 %v174
      %v830 = vunpack.c.l.b16 %v175
      %v831 = vunpack.c.h.b16 %v175
      %v832 = vunpack.c.l.b16 %v176
      %v833 = vunpack.c.h.b16 %v176
      %v834 = vunpack.c.l.b16 %v177
      %v835 = vunpack.c.h.b16 %v177
      %v836 = vunpack.c.l.b16 %v178
      %v837 = vunpack.c.h.b16 %v178
      %v838 = vunpack.c.l.b16 %v179
      %v839 = vunpack.c.h.b16 %v179
      %v840 = vunpack.c.l.b16 %v180
      %v841 = vunpack.c.h.b16 %v180
      %v842 = vunpack.c.l.b16 %v181
      %v843 = vunpack.c.h.b16 %v181
      %v844 = vunpack.c.l.b16 %v182
      %v845 = vunpack.c.h.b16 %v182
      %v846 = vunpack.c.l.b16 %v183
      %v847 = vunpack.c.h.b16 %v183
      %v848 = vunpack.c.l.b16 %v184
      %v849 = vunpack.c.h.b16 %v184
      %v850 = vunpack.c.l.b16 %v185
      %v851 = vunpack.c.h.b16 %v185
      %v852 = vunpack.c.l.b16 %v186
      %v853 = vunpack.c.h.b16 %v186
      %v854 = vunpack.c.l.b16 %v187
      %v855 = vunpack.c.h.b16 %v187
      %v856 = vunpack.c.l.b16 %v188
      %v857 = vunpack.c.h.b16 %v188
      %v858 = vunpack.c.l.b16 %v189
      %v859 = vunpack.c.h.b16 %v189
      %v860 = vunpack.c.l.b16 %v190
      %v861 = vunpack.c.h.b16 %v190
      %v862 = vunpack.c.l.b16 %v191
      %v863 = vunpack.c.h.b16 %v191
      %v864 = vunpack.c.l.b16 %v192
      %v865 = vunpack.c.h.b16 %v192
      %v866 = vunpack.c.l.b16 %v193
      %v867 = vunpack.c.h.b16 %v193
      %v868 = vunpack.c.l.b16 %v194
      %v869 = vunpack.c.h.b16 %v194
      %v870 = vunpack.c.l.b16 %v195
      %v871 = vunpack.c.h.b16 %v195
      %v872 = vunpack.c.l.b16 %v196
      %v873 = vunpack.c.h.b16 %v196
      %v874 = vunpack.c.l.b16 %v197
      %v875 = vunpack.c.h.b16 %v197
      %v876 = vunpack.c.l.b16 %v198
      %v877 = vunpack.c.h.b16 %v198
      %v878 = vunpack.c.l.b16 %v199
      %v879 = vunpack.c.h.b16 %v199
      %v880 = vunpack.c.l.b16 %v200
      %v881 = vunpack.c.h.b16 %v200
      %v882 = vunpack.c.l.b16 %v201
      %v883 = vunpack.c.h.b16 %v201
      %v884 = vunpack.c.l.b16 %v202
      %v885 = vunpack.c.h.b16 %v202
      %v886 = vunpack.c.l.b16 %v203
      %v887 = vunpack.c.h.b16 %v203
      %v888 = vunpack.c.l.b16 %v204
      %v889 = vunpack.c.h.b16 %v204
      %v890 = vunpack.c.l.b16 %v205
      %v891 = vunpack.c.h.b16 %v205
      %v892 = vunpack.c.l.b16 %v206
      %v893 = vunpack.c.h.b16 %v206
      %v894 = vunpack.c.l.b16 %v207
      %v895 = vunpack.c.h.b16 %v207
      %v896 = vunpack.c.l.b16 %v208
      %v897 = vunpack.c.h.b16 %v208
      %v898 = vunpack.c.l.b16 %v209
      %v899 = vunpack.c.h.b16 %v209
      %v900 = vunpack.c.l.b16 %v210
      %v901 = vunpack.c.h.b16 %v210
      %v902 = vunpack.c.l.b16 %v211
      %v903 = vunpack.c.h.b16 %v211
      %v904 = vunpack.c.l.b16 %v212
      %v905 = vunpack.c.h.b16 %v212
      %v906 = vunpack.c.l.b16 %v213
      %v907 = vunpack.c.h.b16 %v213
      %v908 = vunpack.c.l.b16 %v214
      %v909 = vunpack.c.h.b16 %v214
      %v910 = vunpack.c.l.b16 %v215
      %v911 = vunpack.c.h.b16 %v215
      %v912 = vunpack.c.l.b16 %v216
      %v913 = vunpack.c.h.b16 %v216
      %v914 = vunpack.c.l.b16 %v217
      %v915 = vunpack.c.h.b16 %v217
      %v916 = vunpack.c.l.b16 %v218
      %v917 = vunpack.c.h.b16 %v218
      %v918 = vunpack.c.l.b16 %v219
      %v919 = vunpack.c.h.b16 %v219
      %v920 = vunpack.c.l.b16 %v220
      %v921 = vunpack.c.h.b16 %v220
      %v922 = vunpack.c.l.b16 %v221
      %v923 = vunpack.c.h.b16 %v221
      %v924 = vunpack.c.l.b16 %v222
      %v925 = vunpack.c.h.b16 %v222
      %v926 = vunpack.c.l.b16 %v223
      %v927 = vunpack.c.h.b16 %v223
      %v928 = vunpack.c.l.b16 %v224
      %v929 = vunpack.c.h.b16 %v224
      %v930 = vunpack.c.l.b16 %v225
      %v931 = vunpack.c.h.b16 %v225
      %v932 = vunpack.c.l.b16 %v226
      %v933 = vunpack.c.h.b16 %v226
      %v934 = vunpack.c.l.b16 %v227
      %v935 = vunpack.c.h.b16 %v227
      %v936 = vunpack.c.l.b16 %v228
      %v937 = vunpack.c.h.b16 %v228
      %v938 = vunpack.c.l.b16 %v229
      %v939 = vunpack.c.h.b16 %v229
      %v940 = vunpack.c.l.b16 %v230
      %v941 = vunpack.c.h.b16 %v230
      %v942 = vunpack.c.l.b16 %v231
      %v943 = vunpack.c.h.b16 %v231
      %v944 = vunpack.c.l.b16 %v232
      %v945 = vunpack.c.h.b16 %v232
      %v946 = vunpack.c.l.b16 %v233
      %v947 = vunpack.c.h.b16 %v233
      %v948 = vunpack.c.l.b16 %v234
      %v949 = vunpack.c.h.b16 %v234
      %v950 = vunpack.c.l.b16 %v235
      %v951 = vunpack.c.h.b16 %v235
      %v952 = vunpack.c.l.b16 %v236
      %v953 = vunpack.c.h.b16 %v236
      %v954 = vpack.c.b16 %v828, %v826
      %v955 = vpack.c.b16 %v829, %v827
      %v956 = vpack.c.b16 %v832, %v830
      %v957 = vpack.c.b16 %v833, %v831
      %v958 = vpack.c.b16 %v836, %v834
      %v959 = vpack.c.b16 %v837, %v835
      %v960 = vpack.c.b16 %v840, %v838
      %v961 = vpack.c.b16 %v841, %v839
      %v962 = vpack.c.b16 %v844, %v842
      %v963 = vpack.c.b16 %v845, %v843
      %v964 = vpack.c.b16 %v848, %v846
      %v965 = vpack.c.b16 %v849, %v847
      %v966 = vpack.c.b16 %v852, %v850
      %v967 = vpack.c.b16 %v853, %v851
      %v968 = vpack.c.b16 %v856, %v854
      %v969 = vpack.c.b16 %v857, %v855
      %v970 = vpack.c.b16 %v860, %v858
      %v971 = vpack.c.b16 %v861, %v859
      %v972 = vpack.c.b16 %v864, %v862
      %v973 = vpack.c.b16 %v865, %v863
      %v974 = vpack.c.b16 %v868, %v866
      %v975 = vpack.c.b16 %v869, %v867
      %v976 = vpack.c.b16 %v872, %v870
      %v977 = vpack.c.b16 %v873, %v871
      %v978 = vpack.c.b16 %v876, %v874
      %v979 = vpack.c.b16 %v877, %v875
      %v980 = vpack.c.b16 %v880, %v878
      %v981 = vpack.c.b16 %v881, %v879
      %v982 = vpack.c.b16 %v884, %v882
      %v983 = vpack.c.b16 %v885, %v883
      %v984 = vpack.c.b16 %v888, %v886
      %v985 = vpack.c.b16 %v889, %v887
      %v986 = vpack.c.b16 %v892, %v890
      %v987 = vpack.c.b16 %v893, %v891
      %v988 = vpack.c.b16 %v896, %v894
      %v989 = vpack.c.b16 %v897, %v895
      %v990 = vpack.c.b16 %v900, %v898
      %v991 = vpack.c.b16 %v901, %v899
      %v992 = vpack.c.b16 %v904, %v902
      %v993 = vpack.c.b16 %v905, %v903
      %v994 = vpack.c.b16 %v908, %v906
      %v995 = vpack.c.b16 %v909, %v907
      %v996 = vpack.c.b16 %v912, %v910
      %v997 = vpack.c.b16 %v913, %v911
      %v998 = vpack.c.b16 %v916, %v914
      %v999 = vpack.c.b16 %v917, %v915
      %v1000 = vpack.c.b16 %v920, %v918
      %v1001 = vpack.c.b16 %v921, %v919
      %v1002 = vpack.c.b16 %v924, %v922
      %v1003 = vpack.c.b16 %v925, %v923
      %v1004 = vpack.c.b16 %v928, %v926
      %v1005 = vpack.c.b16 %v929, %v927
      %v1006 = vpack.c.b16 %v932, %v930
      %v1007 = vpack.c.b16 %v933, %v931
      %v1008 = vpack.c.b16 %v936, %v934
      %v1009 = vpack.c.b16 %v937, %v935
      %v1010 = vpack.c.b16 %v940, %v938
      %v1011 = vpack.c.b16 %v941, %v939
      %v1012 = vpack.c.b16 %v944, %v942
      %v1013 = vpack.c.b16 %v945, %v943
      %v1014 = vpack.c.b16 %v948, %v946
      %v1015 = vpack.c.b16 %v949, %v947
      %v1016 = vpack.c.b16 %v952, %v950
      %v1017 = vpack.c.b16 %v953, %v951
      %1082 = vmatprep.subr.bf16.mxu0 %v955
      %1083 = vmatpush1.bf16.msra.mxu0 %v954
      %1084 = vmatprep.subr.bf16.mxu0 %v957
      %1085 = vmatpush1.bf16.msra.mxu0 %v956
      %1086 = vmatprep.subr.bf16.mxu0 %v959
      %1087 = vmatpush1.bf16.msra.mxu0 %v958
      %1088 = vmatprep.subr.bf16.mxu0 %v961
      %1089 = vmatpush1.bf16.msra.mxu0 %v960
      %1090 = vmatprep.subr.bf16.mxu0 %v963
      %1091 = vmatpush1.bf16.msra.mxu0 %v962
      %1092 = vmatprep.subr.bf16.mxu0 %v965
      %1093 = vmatpush1.bf16.msra.mxu0 %v964
      %1094 = vmatprep.subr.bf16.mxu0 %v967
      %1095 = vmatpush1.bf16.msra.mxu0 %v966
      %1096 = vmatprep.subr.bf16.mxu0 %v969
      %1097 = vmatpush1.bf16.msra.mxu0 %v968
      %1098 = vmatprep.subr.bf16.mxu0 %v971
      %1099 = vmatpush1.bf16.msra.mxu0 %v970
      %1100 = vmatprep.subr.bf16.mxu0 %v973
      %1101 = vmatpush1.bf16.msra.mxu0 %v972
      %1102 = vmatprep.subr.bf16.mxu0 %v975
      %1103 = vmatpush1.bf16.msra.mxu0 %v974
      %1104 = vmatprep.subr.bf16.mxu0 %v977
      %1105 = vmatpush1.bf16.msra.mxu0 %v976
      %1106 = vmatprep.subr.bf16.mxu0 %v979
      %1107 = vmatpush1.bf16.msra.mxu0 %v978
      %1108 = vmatprep.subr.bf16.mxu0 %v981
      %1109 = vmatpush1.bf16.msra.mxu0 %v980
      %1110 = vmatprep.subr.bf16.mxu0 %v983
      %1111 = vmatpush1.bf16.msra.mxu0 %v982
      %1112 = vmatprep.subr.bf16.mxu0 %v985
      %1113 = vmatpush1.bf16.msra.mxu0 %v984
      %1114 = vmatprep.mubr.bf16.mxu0 %v755
      %1115 = vmatmul.mubr.bf16.gmra.mrb[0].mxu0 %v754
      %v1116 = vpop.f32.mrb[0].mxu0
      %v1117 = vadd.f32 %v742, %v1116
      %v1118 = vpop.f32.mrb[0].mxu0
      %v1119 = vadd.f32 %v744, %v1118
      %v1120 = vpop.f32.mrb[0].mxu0
      %v1121 = vpop.f32.mrb[0].mxu0
      %1122 = vdwg.mxu0
      %1123 = vmatprep.subr.bf16.mxu0 %v987
      %1124 = vmatpush1.bf16.msra.mxu0 %v986
      %1125 = vmatprep.subr.bf16.mxu0 %v989
      %1126 = vmatpush1.bf16.msra.mxu0 %v988
      %1127 = vmatprep.subr.bf16.mxu0 %v991
      %1128 = vmatpush1.bf16.msra.mxu0 %v990
      %1129 = vmatprep.subr.bf16.mxu0 %v993
      %1130 = vmatpush1.bf16.msra.mxu0 %v992
      %1131 = vmatprep.subr.bf16.mxu0 %v995
      %1132 = vmatpush1.bf16.msra.mxu0 %v994
      %1133 = vmatprep.subr.bf16.mxu0 %v997
      %1134 = vmatpush1.bf16.msra.mxu0 %v996
      %1135 = vmatprep.subr.bf16.mxu0 %v999
      %1136 = vmatpush1.bf16.msra.mxu0 %v998
      %1137 = vmatprep.subr.bf16.mxu0 %v1001
      %1138 = vmatpush1.bf16.msra.mxu0 %v1000
      %1139 = vmatprep.subr.bf16.mxu0 %v1003
      %1140 = vmatpush1.bf16.msra.mxu0 %v1002
      %1141 = vmatprep.subr.bf16.mxu0 %v1005
      %1142 = vmatpush1.bf16.msra.mxu0 %v1004
      %1143 = vmatprep.subr.bf16.mxu0 %v1007
      %1144 = vmatpush1.bf16.msra.mxu0 %v1006
      %1145 = vmatprep.subr.bf16.mxu0 %v1009
      %1146 = vmatpush1.bf16.msra.mxu0 %v1008
      %1147 = vmatprep.subr.bf16.mxu0 %v1011
      %1148 = vmatpush1.bf16.msra.mxu0 %v1010
      %1149 = vmatprep.subr.bf16.mxu0 %v1013
      %1150 = vmatpush1.bf16.msra.mxu0 %v1012
      %1151 = vmatprep.subr.bf16.mxu0 %v1015
      %1152 = vmatpush1.bf16.msra.mxu0 %v1014
      %1153 = vmatprep.subr.bf16.mxu0 %v1017
      %1154 = vmatpush1.bf16.msra.mxu0 %v1016
      %1155 = vmatprep.mubr.bf16.mxu0 %v757
      %1156 = vmatmul.mubr.bf16.gmra.mrb[0].mxu0 %v756
      %v1157 = vpop.f32.mrb[0].mxu0
      %v1158 = vadd.f32 %v1117, %v1157
      %v1159 = vpop.f32.mrb[0].mxu0
      %v1160 = vadd.f32 %v1119, %v1159
      %v1161 = vpop.f32.mrb[0].mxu0
      %v1162 = vpop.f32.mrb[0].mxu0
      %1163 = vdwg.mxu0
      %v1164 = vld [vmem:[%s165] sm:$0xee]
      %v1165 = vld [vmem:[%s165 + $0x8] sm:$0xee]
      %v1166 = vld [vmem:[%s165 + $0x10] sm:$0x11]
      %v1167 = vld [vmem:[%s165 + $0x18] sm:$0x11]
      %s1168 = scalar_lea.vmem %s1, 1024
      %v1169 = vld [vmem:[%s1168] sm:$0xff]
      %v1170 = vld [vmem:[%s1168 + $0x8] sm:$0xff]
      %v1171 = vld [vmem:[%s1168 + $0x10] sm:$0xff]
      %v1172 = vld [vmem:[%s1168 + $0x18] sm:$0xff]
      %v1173 = vld [vmem:[%s1168 + $0x20] sm:$0xff]
      %v1174 = vld [vmem:[%s1168 + $0x28] sm:$0xff]
      %v1175 = vld [vmem:[%s1168 + $0x30] sm:$0xff]
      %v1176 = vld [vmem:[%s1168 + $0x38] sm:$0xff]
      %v1177 = vld [vmem:[%s1168 + $0x40] sm:$0xff]
      %v1178 = vld [vmem:[%s1168 + $0x48] sm:$0xff]
      %v1179 = vld [vmem:[%s1168 + $0x50] sm:$0xff]
      %v1180 = vld [vmem:[%s1168 + $0x58] sm:$0xff]
      %v1181 = vld [vmem:[%s1168 + $0x60] sm:$0xff]
      %v1182 = vld [vmem:[%s1168 + $0x68] sm:$0xff]
      %v1183 = vld [vmem:[%s1168 + $0x70] sm:$0xff]
      %v1184 = vld [vmem:[%s1168 + $0x78] sm:$0xff]
      %v1185 = vld [vmem:[%s1168 + $0x80] sm:$0xff]
      %v1186 = vld [vmem:[%s1168 + $0x88] sm:$0xff]
      %v1187 = vld [vmem:[%s1168 + $0x90] sm:$0xff]
      %v1188 = vld [vmem:[%s1168 + $0x98] sm:$0xff]
      %v1189 = vld [vmem:[%s1168 + $0xa0] sm:$0xff]
      %v1190 = vld [vmem:[%s1168 + $0xa8] sm:$0xff]
      %v1191 = vld [vmem:[%s1168 + $0xb0] sm:$0xff]
      %v1192 = vld [vmem:[%s1168 + $0xb8] sm:$0xff]
      %v1193 = vld [vmem:[%s1168 + $0xc0] sm:$0xff]
      %v1194 = vld [vmem:[%s1168 + $0xc8] sm:$0xff]
      %v1195 = vld [vmem:[%s1168 + $0xd0] sm:$0xff]
      %v1196 = vld [vmem:[%s1168 + $0xd8] sm:$0xff]
      %v1197 = vld [vmem:[%s1168 + $0xe0] sm:$0xff]
      %v1198 = vld [vmem:[%s1168 + $0xe8] sm:$0xff]
      %v1199 = vld [vmem:[%s1168 + $0xf0] sm:$0xff]
      %v1200 = vld [vmem:[%s1168 + $0xf8] sm:$0xff]
      %v1201 = vld [vmem:[%s1168 + $0x100] sm:$0xff]
      %v1202 = vld [vmem:[%s1168 + $0x108] sm:$0xff]
      %v1203 = vld [vmem:[%s1168 + $0x110] sm:$0xff]
      %v1204 = vld [vmem:[%s1168 + $0x118] sm:$0xff]
      %v1205 = vld [vmem:[%s1168 + $0x120] sm:$0xff]
      %v1206 = vld [vmem:[%s1168 + $0x128] sm:$0xff]
      %v1207 = vld [vmem:[%s1168 + $0x130] sm:$0xff]
      %v1208 = vld [vmem:[%s1168 + $0x138] sm:$0xff]
      %v1209 = vld [vmem:[%s1168 + $0x140] sm:$0xff]
      %v1210 = vld [vmem:[%s1168 + $0x148] sm:$0xff]
      %v1211 = vld [vmem:[%s1168 + $0x150] sm:$0xff]
      %v1212 = vld [vmem:[%s1168 + $0x158] sm:$0xff]
      %v1213 = vld [vmem:[%s1168 + $0x160] sm:$0xff]
      %v1214 = vld [vmem:[%s1168 + $0x168] sm:$0xff]
      %v1215 = vld [vmem:[%s1168 + $0x170] sm:$0xff]
      %v1216 = vld [vmem:[%s1168 + $0x178] sm:$0xff]
      %v1217 = vld [vmem:[%s1168 + $0x180] sm:$0xff]
      %v1218 = vld [vmem:[%s1168 + $0x188] sm:$0xff]
      %v1219 = vld [vmem:[%s1168 + $0x190] sm:$0xff]
      %v1220 = vld [vmem:[%s1168 + $0x198] sm:$0xff]
      %v1221 = vld [vmem:[%s1168 + $0x1a0] sm:$0xff]
      %v1222 = vld [vmem:[%s1168 + $0x1a8] sm:$0xff]
      %v1223 = vld [vmem:[%s1168 + $0x1b0] sm:$0xff]
      %v1224 = vld [vmem:[%s1168 + $0x1b8] sm:$0xff]
      %v1225 = vld [vmem:[%s1168 + $0x1c0] sm:$0xff]
      %v1226 = vld [vmem:[%s1168 + $0x1c8] sm:$0xff]
      %v1227 = vld [vmem:[%s1168 + $0x1d0] sm:$0xff]
      %v1228 = vld [vmem:[%s1168 + $0x1d8] sm:$0xff]
      %v1229 = vld [vmem:[%s1168 + $0x1e0] sm:$0xff]
      %v1230 = vld [vmem:[%s1168 + $0x1e8] sm:$0xff]
      %v1231 = vld [vmem:[%s1168 + $0x1f0] sm:$0xff]
      %v1232 = vld [vmem:[%s1168 + $0x1f8] sm:$0xff]
      %v1237 = vunpack.c.l.b16 %v1164
      %v1238 = vunpack.c.h.b16 %v1164
      %v1239 = vunpack.c.l.b16 %v1165
      %v1240 = vunpack.c.h.b16 %v1165
      %v1241 = vunpack.c.l.b16 %v1166
      %v1242 = vunpack.c.h.b16 %v1166
      %v1243 = vunpack.c.l.b16 %v1167
      %v1244 = vunpack.c.h.b16 %v1167
      %v1245 = vpack.c.b16 %v1241, %v1237
      %v1246 = vpack.c.b16 %v1242, %v1238
      %v1247 = vpack.c.b16 %v1243, %v1239
      %v1248 = vpack.c.b16 %v1244, %v1240
      %v1250 = vshrl.u32 %v1245, 16
      %v1252 = vrot.slane %v1250, 1
      %v1253 = vshll.u32 %v1245, 16
      %v1255 = vrot.slane %v1253, 2
      %v1256 = vor.u32 %v1252, %v1255
      %v1258 = vshrl.u32 %v1246, 16
      %v1260 = vrot.slane %v1258, 1
      %v1261 = vshll.u32 %v1246, 16
      %v1263 = vrot.slane %v1261, 2
      %v1264 = vor.u32 %v1260, %v1263
      %v1266 = vshrl.u32 %v1247, 16
      %v1268 = vrot.slane %v1266, 1
      %v1269 = vshll.u32 %v1247, 16
      %v1271 = vrot.slane %v1269, 2
      %v1272 = vor.u32 %v1268, %v1271
      %v1274 = vshrl.u32 %v1248, 16
      %v1276 = vrot.slane %v1274, 1
      %v1277 = vshll.u32 %v1248, 16
      %v1279 = vrot.slane %v1277, 2
      %v1280 = vor.u32 %v1276, %v1279
      %v1349 = vunpack.c.l.b16 %v1169
      %v1350 = vunpack.c.h.b16 %v1169
      %v1351 = vunpack.c.l.b16 %v1170
      %v1352 = vunpack.c.h.b16 %v1170
      %v1353 = vunpack.c.l.b16 %v1171
      %v1354 = vunpack.c.h.b16 %v1171
      %v1355 = vunpack.c.l.b16 %v1172
      %v1356 = vunpack.c.h.b16 %v1172
      %v1357 = vunpack.c.l.b16 %v1173
      %v1358 = vunpack.c.h.b16 %v1173
      %v1359 = vunpack.c.l.b16 %v1174
      %v1360 = vunpack.c.h.b16 %v1174
      %v1361 = vunpack.c.l.b16 %v1175
      %v1362 = vunpack.c.h.b16 %v1175
      %v1363 = vunpack.c.l.b16 %v1176
      %v1364 = vunpack.c.h.b16 %v1176
      %v1365 = vunpack.c.l.b16 %v1177
      %v1366 = vunpack.c.h.b16 %v1177
      %v1367 = vunpack.c.l.b16 %v1178
      %v1368 = vunpack.c.h.b16 %v1178
      %v1369 = vunpack.c.l.b16 %v1179
      %v1370 = vunpack.c.h.b16 %v1179
      %v1371 = vunpack.c.l.b16 %v1180
      %v1372 = vunpack.c.h.b16 %v1180
      %v1373 = vunpack.c.l.b16 %v1181
      %v1374 = vunpack.c.h.b16 %v1181
      %v1375 = vunpack.c.l.b16 %v1182
      %v1376 = vunpack.c.h.b16 %v1182
      %v1377 = vunpack.c.l.b16 %v1183
      %v1378 = vunpack.c.h.b16 %v1183
      %v1379 = vunpack.c.l.b16 %v1184
      %v1380 = vunpack.c.h.b16 %v1184
      %v1381 = vunpack.c.l.b16 %v1185
      %v1382 = vunpack.c.h.b16 %v1185
      %v1383 = vunpack.c.l.b16 %v1186
      %v1384 = vunpack.c.h.b16 %v1186
      %v1385 = vunpack.c.l.b16 %v1187
      %v1386 = vunpack.c.h.b16 %v1187
      %v1387 = vunpack.c.l.b16 %v1188
      %v1388 = vunpack.c.h.b16 %v1188
      %v1389 = vunpack.c.l.b16 %v1189
      %v1390 = vunpack.c.h.b16 %v1189
      %v1391 = vunpack.c.l.b16 %v1190
      %v1392 = vunpack.c.h.b16 %v1190
      %v1393 = vunpack.c.l.b16 %v1191
      %v1394 = vunpack.c.h.b16 %v1191
      %v1395 = vunpack.c.l.b16 %v1192
      %v1396 = vunpack.c.h.b16 %v1192
      %v1397 = vunpack.c.l.b16 %v1193
      %v1398 = vunpack.c.h.b16 %v1193
      %v1399 = vunpack.c.l.b16 %v1194
      %v1400 = vunpack.c.h.b16 %v1194
      %v1401 = vunpack.c.l.b16 %v1195
      %v1402 = vunpack.c.h.b16 %v1195
      %v1403 = vunpack.c.l.b16 %v1196
      %v1404 = vunpack.c.h.b16 %v1196
      %v1405 = vunpack.c.l.b16 %v1197
      %v1406 = vunpack.c.h.b16 %v1197
      %v1407 = vunpack.c.l.b16 %v1198
      %v1408 = vunpack.c.h.b16 %v1198
      %v1409 = vunpack.c.l.b16 %v1199
      %v1410 = vunpack.c.h.b16 %v1199
      %v1411 = vunpack.c.l.b16 %v1200
      %v1412 = vunpack.c.h.b16 %v1200
      %v1413 = vunpack.c.l.b16 %v1201
      %v1414 = vunpack.c.h.b16 %v1201
      %v1415 = vunpack.c.l.b16 %v1202
      %v1416 = vunpack.c.h.b16 %v1202
      %v1417 = vunpack.c.l.b16 %v1203
      %v1418 = vunpack.c.h.b16 %v1203
      %v1419 = vunpack.c.l.b16 %v1204
      %v1420 = vunpack.c.h.b16 %v1204
      %v1421 = vunpack.c.l.b16 %v1205
      %v1422 = vunpack.c.h.b16 %v1205
      %v1423 = vunpack.c.l.b16 %v1206
      %v1424 = vunpack.c.h.b16 %v1206
      %v1425 = vunpack.c.l.b16 %v1207
      %v1426 = vunpack.c.h.b16 %v1207
      %v1427 = vunpack.c.l.b16 %v1208
      %v1428 = vunpack.c.h.b16 %v1208
      %v1429 = vunpack.c.l.b16 %v1209
      %v1430 = vunpack.c.h.b16 %v1209
      %v1431 = vunpack.c.l.b16 %v1210
      %v1432 = vunpack.c.h.b16 %v1210
      %v1433 = vunpack.c.l.b16 %v1211
      %v1434 = vunpack.c.h.b16 %v1211
      %v1435 = vunpack.c.l.b16 %v1212
      %v1436 = vunpack.c.h.b16 %v1212
      %v1437 = vunpack.c.l.b16 %v1213
      %v1438 = vunpack.c.h.b16 %v1213
      %v1439 = vunpack.c.l.b16 %v1214
      %v1440 = vunpack.c.h.b16 %v1214
      %v1441 = vunpack.c.l.b16 %v1215
      %v1442 = vunpack.c.h.b16 %v1215
      %v1443 = vunpack.c.l.b16 %v1216
      %v1444 = vunpack.c.h.b16 %v1216
      %v1445 = vunpack.c.l.b16 %v1217
      %v1446 = vunpack.c.h.b16 %v1217
      %v1447 = vunpack.c.l.b16 %v1218
      %v1448 = vunpack.c.h.b16 %v1218
      %v1449 = vunpack.c.l.b16 %v1219
      %v1450 = vunpack.c.h.b16 %v1219
      %v1451 = vunpack.c.l.b16 %v1220
      %v1452 = vunpack.c.h.b16 %v1220
      %v1453 = vunpack.c.l.b16 %v1221
      %v1454 = vunpack.c.h.b16 %v1221
      %v1455 = vunpack.c.l.b16 %v1222
      %v1456 = vunpack.c.h.b16 %v1222
      %v1457 = vunpack.c.l.b16 %v1223
      %v1458 = vunpack.c.h.b16 %v1223
      %v1459 = vunpack.c.l.b16 %v1224
      %v1460 = vunpack.c.h.b16 %v1224
      %v1461 = vunpack.c.l.b16 %v1225
      %v1462 = vunpack.c.h.b16 %v1225
      %v1463 = vunpack.c.l.b16 %v1226
      %v1464 = vunpack.c.h.b16 %v1226
      %v1465 = vunpack.c.l.b16 %v1227
      %v1466 = vunpack.c.h.b16 %v1227
      %v1467 = vunpack.c.l.b16 %v1228
      %v1468 = vunpack.c.h.b16 %v1228
      %v1469 = vunpack.c.l.b16 %v1229
      %v1470 = vunpack.c.h.b16 %v1229
      %v1471 = vunpack.c.l.b16 %v1230
      %v1472 = vunpack.c.h.b16 %v1230
      %v1473 = vunpack.c.l.b16 %v1231
      %v1474 = vunpack.c.h.b16 %v1231
      %v1475 = vunpack.c.l.b16 %v1232
      %v1476 = vunpack.c.h.b16 %v1232
      %v1477 = vpack.c.b16 %v1351, %v1349
      %v1478 = vpack.c.b16 %v1352, %v1350
      %v1479 = vpack.c.b16 %v1355, %v1353
      %v1480 = vpack.c.b16 %v1356, %v1354
      %v1481 = vpack.c.b16 %v1359, %v1357
      %v1482 = vpack.c.b16 %v1360, %v1358
      %v1483 = vpack.c.b16 %v1363, %v1361
      %v1484 = vpack.c.b16 %v1364, %v1362
      %v1485 = vpack.c.b16 %v1367, %v1365
      %v1486 = vpack.c.b16 %v1368, %v1366
      %v1487 = vpack.c.b16 %v1371, %v1369
      %v1488 = vpack.c.b16 %v1372, %v1370
      %v1489 = vpack.c.b16 %v1375, %v1373
      %v1490 = vpack.c.b16 %v1376, %v1374
      %v1491 = vpack.c.b16 %v1379, %v1377
      %v1492 = vpack.c.b16 %v1380, %v1378
      %v1493 = vpack.c.b16 %v1383, %v1381
      %v1494 = vpack.c.b16 %v1384, %v1382
      %v1495 = vpack.c.b16 %v1387, %v1385
      %v1496 = vpack.c.b16 %v1388, %v1386
      %v1497 = vpack.c.b16 %v1391, %v1389
      %v1498 = vpack.c.b16 %v1392, %v1390
      %v1499 = vpack.c.b16 %v1395, %v1393
      %v1500 = vpack.c.b16 %v1396, %v1394
      %v1501 = vpack.c.b16 %v1399, %v1397
      %v1502 = vpack.c.b16 %v1400, %v1398
      %v1503 = vpack.c.b16 %v1403, %v1401
      %v1504 = vpack.c.b16 %v1404, %v1402
      %v1505 = vpack.c.b16 %v1407, %v1405
      %v1506 = vpack.c.b16 %v1408, %v1406
      %v1507 = vpack.c.b16 %v1411, %v1409
      %v1508 = vpack.c.b16 %v1412, %v1410
      %v1509 = vpack.c.b16 %v1415, %v1413
      %v1510 = vpack.c.b16 %v1416, %v1414
      %v1511 = vpack.c.b16 %v1419, %v1417
      %v1512 = vpack.c.b16 %v1420, %v1418
      %v1513 = vpack.c.b16 %v1423, %v1421
      %v1514 = vpack.c.b16 %v1424, %v1422
      %v1515 = vpack.c.b16 %v1427, %v1425
      %v1516 = vpack.c.b16 %v1428, %v1426
      %v1517 = vpack.c.b16 %v1431, %v1429
      %v1518 = vpack.c.b16 %v1432, %v1430
      %v1519 = vpack.c.b16 %v1435, %v1433
      %v1520 = vpack.c.b16 %v1436, %v1434
      %v1521 = vpack.c.b16 %v1439, %v1437
      %v1522 = vpack.c.b16 %v1440, %v1438
      %v1523 = vpack.c.b16 %v1443, %v1441
      %v1524 = vpack.c.b16 %v1444, %v1442
      %v1525 = vpack.c.b16 %v1447, %v1445
      %v1526 = vpack.c.b16 %v1448, %v1446
      %v1527 = vpack.c.b16 %v1451, %v1449
      %v1528 = vpack.c.b16 %v1452, %v1450
      %v1529 = vpack.c.b16 %v1455, %v1453
      %v1530 = vpack.c.b16 %v1456, %v1454
      %v1531 = vpack.c.b16 %v1459, %v1457
      %v1532 = vpack.c.b16 %v1460, %v1458
      %v1533 = vpack.c.b16 %v1463, %v1461
      %v1534 = vpack.c.b16 %v1464, %v1462
      %v1535 = vpack.c.b16 %v1467, %v1465
      %v1536 = vpack.c.b16 %v1468, %v1466
      %v1537 = vpack.c.b16 %v1471, %v1469
      %v1538 = vpack.c.b16 %v1472, %v1470
      %v1539 = vpack.c.b16 %v1475, %v1473
      %v1540 = vpack.c.b16 %v1476, %v1474
      %1605 = vmatprep.subr.bf16.mxu0 %v1478
      %1606 = vmatpush1.bf16.msra.mxu0 %v1477
      %1607 = vmatprep.subr.bf16.mxu0 %v1480
      %1608 = vmatpush1.bf16.msra.mxu0 %v1479
      %1609 = vmatprep.subr.bf16.mxu0 %v1482
      %1610 = vmatpush1.bf16.msra.mxu0 %v1481
      %1611 = vmatprep.subr.bf16.mxu0 %v1484
      %1612 = vmatpush1.bf16.msra.mxu0 %v1483
      %1613 = vmatprep.subr.bf16.mxu0 %v1486
      %1614 = vmatpush1.bf16.msra.mxu0 %v1485
      %1615 = vmatprep.subr.bf16.mxu0 %v1488
      %1616 = vmatpush1.bf16.msra.mxu0 %v1487
      %1617 = vmatprep.subr.bf16.mxu0 %v1490
      %1618 = vmatpush1.bf16.msra.mxu0 %v1489
      %1619 = vmatprep.subr.bf16.mxu0 %v1492
      %1620 = vmatpush1.bf16.msra.mxu0 %v1491
      %1621 = vmatprep.subr.bf16.mxu0 %v1494
      %1622 = vmatpush1.bf16.msra.mxu0 %v1493
      %1623 = vmatprep.subr.bf16.mxu0 %v1496
      %1624 = vmatpush1.bf16.msra.mxu0 %v1495
      %1625 = vmatprep.subr.bf16.mxu0 %v1498
      %1626 = vmatpush1.bf16.msra.mxu0 %v1497
      %1627 = vmatprep.subr.bf16.mxu0 %v1500
      %1628 = vmatpush1.bf16.msra.mxu0 %v1499
      %1629 = vmatprep.subr.bf16.mxu0 %v1502
      %1630 = vmatpush1.bf16.msra.mxu0 %v1501
      %1631 = vmatprep.subr.bf16.mxu0 %v1504
      %1632 = vmatpush1.bf16.msra.mxu0 %v1503
      %1633 = vmatprep.subr.bf16.mxu0 %v1506
      %1634 = vmatpush1.bf16.msra.mxu0 %v1505
      %1635 = vmatprep.subr.bf16.mxu0 %v1508
      %1636 = vmatpush1.bf16.msra.mxu0 %v1507
      %1637 = vmatprep.mubr.bf16.mxu0 %v1264
      %1638 = vmatmul.mubr.bf16.gmra.mrb[0].mxu0 %v1256
      %v1639 = vpop.f32.mrb[0].mxu0
      %v1640 = vadd.f32 0.0, %v1639
      %v1641 = vpop.f32.mrb[0].mxu0
      %v1642 = vadd.f32 0.0, %v1641
      %v1643 = vpop.f32.mrb[0].mxu0
      %v1644 = vpop.f32.mrb[0].mxu0
      %1645 = vdwg.mxu0
      %1646 = vmatprep.subr.bf16.mxu0 %v1510
      %1647 = vmatpush1.bf16.msra.mxu0 %v1509
      %1648 = vmatprep.subr.bf16.mxu0 %v1512
      %1649 = vmatpush1.bf16.msra.mxu0 %v1511
      %1650 = vmatprep.subr.bf16.mxu0 %v1514
      %1651 = vmatpush1.bf16.msra.mxu0 %v1513
      %1652 = vmatprep.subr.bf16.mxu0 %v1516
      %1653 = vmatpush1.bf16.msra.mxu0 %v1515
      %1654 = vmatprep.subr.bf16.mxu0 %v1518
      %1655 = vmatpush1.bf16.msra.mxu0 %v1517
      %1656 = vmatprep.subr.bf16.mxu0 %v1520
      %1657 = vmatpush1.bf16.msra.mxu0 %v1519
      %1658 = vmatprep.subr.bf16.mxu0 %v1522
      %1659 = vmatpush1.bf16.msra.mxu0 %v1521
      %1660 = vmatprep.subr.bf16.mxu0 %v1524
      %1661 = vmatpush1.bf16.msra.mxu0 %v1523
      %1662 = vmatprep.subr.bf16.mxu0 %v1526
      %1663 = vmatpush1.bf16.msra.mxu0 %v1525
      %1664 = vmatprep.subr.bf16.mxu0 %v1528
      %1665 = vmatpush1.bf16.msra.mxu0 %v1527
      %1666 = vmatprep.subr.bf16.mxu0 %v1530
      %1667 = vmatpush1.bf16.msra.mxu0 %v1529
      %1668 = vmatprep.subr.bf16.mxu0 %v1532
      %1669 = vmatpush1.bf16.msra.mxu0 %v1531
      %1670 = vmatprep.subr.bf16.mxu0 %v1534
      %1671 = vmatpush1.bf16.msra.mxu0 %v1533
      %1672 = vmatprep.subr.bf16.mxu0 %v1536
      %1673 = vmatpush1.bf16.msra.mxu0 %v1535
      %1674 = vmatprep.subr.bf16.mxu0 %v1538
      %1675 = vmatpush1.bf16.msra.mxu0 %v1537
      %1676 = vmatprep.subr.bf16.mxu0 %v1540
      %1677 = vmatpush1.bf16.msra.mxu0 %v1539
      %1678 = vmatprep.mubr.bf16.mxu0 %v1280
      %1679 = vmatmul.mubr.bf16.gmra.mrb[0].mxu0 %v1272
      %v1680 = vpop.f32.mrb[0].mxu0
      %v1681 = vadd.f32 %v1640, %v1680
      %v1682 = vpop.f32.mrb[0].mxu0
      %v1683 = vadd.f32 %v1642, %v1682
      %v1684 = vpop.f32.mrb[0].mxu0
      %v1685 = vpop.f32.mrb[0].mxu0
      %1686 = vdwg.mxu0
      %v1687 = vadd.f32 %v1158, %v1681
      %v1688 = vadd.f32 %v1160, %v1683
      %v1689 = vld [vmem:[%s165] sm:$0xcc]
      %v1690 = vld [vmem:[%s165 + $0x8] sm:$0xcc]
      %s1691 = scalar_lea.vmem %s1, 1536
      %v1692 = vld [vmem:[%s1691] sm:$0xff]
      %v1693 = vld [vmem:[%s1691 + $0x8] sm:$0xff]
      %v1694 = vld [vmem:[%s1691 + $0x10] sm:$0xff]
      %v1695 = vld [vmem:[%s1691 + $0x18] sm:$0xff]
      %v1696 = vld [vmem:[%s1691 + $0x20] sm:$0xff]
      %v1697 = vld [vmem:[%s1691 + $0x28] sm:$0xff]
      %v1698 = vld [vmem:[%s1691 + $0x30] sm:$0xff]
      %v1699 = vld [vmem:[%s1691 + $0x38] sm:$0xff]
      %v1700 = vld [vmem:[%s1691 + $0x40] sm:$0xff]
      %v1701 = vld [vmem:[%s1691 + $0x48] sm:$0xff]
      %v1702 = vld [vmem:[%s1691 + $0x50] sm:$0xff]
      %v1703 = vld [vmem:[%s1691 + $0x58] sm:$0xff]
      %v1704 = vld [vmem:[%s1691 + $0x60] sm:$0xff]
      %v1705 = vld [vmem:[%s1691 + $0x68] sm:$0xff]
      %v1706 = vld [vmem:[%s1691 + $0x70] sm:$0xff]
      %v1707 = vld [vmem:[%s1691 + $0x78] sm:$0xff]
      %v1708 = vld [vmem:[%s1691 + $0x80] sm:$0xff]
      %v1709 = vld [vmem:[%s1691 + $0x88] sm:$0xff]
      %v1710 = vld [vmem:[%s1691 + $0x90] sm:$0xff]
      %v1711 = vld [vmem:[%s1691 + $0x98] sm:$0xff]
      %v1712 = vld [vmem:[%s1691 + $0xa0] sm:$0xff]
      %v1713 = vld [vmem:[%s1691 + $0xa8] sm:$0xff]
      %v1714 = vld [vmem:[%s1691 + $0xb0] sm:$0xff]
      %v1715 = vld [vmem:[%s1691 + $0xb8] sm:$0xff]
      %v1716 = vld [vmem:[%s1691 + $0xc0] sm:$0xff]
      %v1717 = vld [vmem:[%s1691 + $0xc8] sm:$0xff]
      %v1718 = vld [vmem:[%s1691 + $0xd0] sm:$0xff]
      %v1719 = vld [vmem:[%s1691 + $0xd8] sm:$0xff]
      %v1720 = vld [vmem:[%s1691 + $0xe0] sm:$0xff]
      %v1721 = vld [vmem:[%s1691 + $0xe8] sm:$0xff]
      %v1722 = vld [vmem:[%s1691 + $0xf0] sm:$0xff]
      %v1723 = vld [vmem:[%s1691 + $0xf8] sm:$0xff]
      %v1724 = vld [vmem:[%s1691 + $0x100] sm:$0xff]
      %v1725 = vld [vmem:[%s1691 + $0x108] sm:$0xff]
      %v1726 = vld [vmem:[%s1691 + $0x110] sm:$0xff]
      %v1727 = vld [vmem:[%s1691 + $0x118] sm:$0xff]
      %v1728 = vld [vmem:[%s1691 + $0x120] sm:$0xff]
      %v1729 = vld [vmem:[%s1691 + $0x128] sm:$0xff]
      %v1730 = vld [vmem:[%s1691 + $0x130] sm:$0xff]
      %v1731 = vld [vmem:[%s1691 + $0x138] sm:$0xff]
      %v1732 = vld [vmem:[%s1691 + $0x140] sm:$0xff]
      %v1733 = vld [vmem:[%s1691 + $0x148] sm:$0xff]
      %v1734 = vld [vmem:[%s1691 + $0x150] sm:$0xff]
      %v1735 = vld [vmem:[%s1691 + $0x158] sm:$0xff]
      %v1736 = vld [vmem:[%s1691 + $0x160] sm:$0xff]
      %v1737 = vld [vmem:[%s1691 + $0x168] sm:$0xff]
      %v1738 = vld [vmem:[%s1691 + $0x170] sm:$0xff]
      %v1739 = vld [vmem:[%s1691 + $0x178] sm:$0xff]
      %v1740 = vld [vmem:[%s1691 + $0x180] sm:$0xff]
      %v1741 = vld [vmem:[%s1691 + $0x188] sm:$0xff]
      %v1742 = vld [vmem:[%s1691 + $0x190] sm:$0xff]
      %v1743 = vld [vmem:[%s1691 + $0x198] sm:$0xff]
      %v1744 = vld [vmem:[%s1691 + $0x1a0] sm:$0xff]
      %v1745 = vld [vmem:[%s1691 + $0x1a8] sm:$0xff]
      %v1746 = vld [vmem:[%s1691 + $0x1b0] sm:$0xff]
      %v1747 = vld [vmem:[%s1691 + $0x1b8] sm:$0xff]
      %v1748 = vld [vmem:[%s1691 + $0x1c0] sm:$0xff]
      %v1749 = vld [vmem:[%s1691 + $0x1c8] sm:$0xff]
      %v1750 = vld [vmem:[%s1691 + $0x1d0] sm:$0xff]
      %v1751 = vld [vmem:[%s1691 + $0x1d8] sm:$0xff]
      %v1752 = vld [vmem:[%s1691 + $0x1e0] sm:$0xff]
      %v1753 = vld [vmem:[%s1691 + $0x1e8] sm:$0xff]
      %v1754 = vld [vmem:[%s1691 + $0x1f0] sm:$0xff]
      %v1755 = vld [vmem:[%s1691 + $0x1f8] sm:$0xff]
      %v1758 = vunpack.c.l.b16 %v1689
      %v1759 = vunpack.c.h.b16 %v1689
      %v1760 = vunpack.c.l.b16 %v1690
      %v1761 = vunpack.c.h.b16 %v1690
      %v1762 = vpack.c.b16 %v1241, %v1758
      %v1763 = vpack.c.b16 %v1242, %v1759
      %v1764 = vpack.c.b16 %v1243, %v1760
      %v1765 = vpack.c.b16 %v1244, %v1761
      %v1766 = vrot.slane %v1762, 2
      %v1767 = vrot.slane %v1763, 2
      %v1768 = vrot.slane %v1764, 2
      %v1769 = vrot.slane %v1765, 2
      %v1838 = vunpack.c.l.b16 %v1692
      %v1839 = vunpack.c.h.b16 %v1692
      %v1840 = vunpack.c.l.b16 %v1693
      %v1841 = vunpack.c.h.b16 %v1693
      %v1842 = vunpack.c.l.b16 %v1694
      %v1843 = vunpack.c.h.b16 %v1694
      %v1844 = vunpack.c.l.b16 %v1695
      %v1845 = vunpack.c.h.b16 %v1695
      %v1846 = vunpack.c.l.b16 %v1696
      %v1847 = vunpack.c.h.b16 %v1696
      %v1848 = vunpack.c.l.b16 %v1697
      %v1849 = vunpack.c.h.b16 %v1697
      %v1850 = vunpack.c.l.b16 %v1698
      %v1851 = vunpack.c.h.b16 %v1698
      %v1852 = vunpack.c.l.b16 %v1699
      %v1853 = vunpack.c.h.b16 %v1699
      %v1854 = vunpack.c.l.b16 %v1700
      %v1855 = vunpack.c.h.b16 %v1700
      %v1856 = vunpack.c.l.b16 %v1701
      %v1857 = vunpack.c.h.b16 %v1701
      %v1858 = vunpack.c.l.b16 %v1702
      %v1859 = vunpack.c.h.b16 %v1702
      %v1860 = vunpack.c.l.b16 %v1703
      %v1861 = vunpack.c.h.b16 %v1703
      %v1862 = vunpack.c.l.b16 %v1704
      %v1863 = vunpack.c.h.b16 %v1704
      %v1864 = vunpack.c.l.b16 %v1705
      %v1865 = vunpack.c.h.b16 %v1705
      %v1866 = vunpack.c.l.b16 %v1706
      %v1867 = vunpack.c.h.b16 %v1706
      %v1868 = vunpack.c.l.b16 %v1707
      %v1869 = vunpack.c.h.b16 %v1707
      %v1870 = vunpack.c.l.b16 %v1708
      %v1871 = vunpack.c.h.b16 %v1708
      %v1872 = vunpack.c.l.b16 %v1709
      %v1873 = vunpack.c.h.b16 %v1709
      %v1874 = vunpack.c.l.b16 %v1710
      %v1875 = vunpack.c.h.b16 %v1710
      %v1876 = vunpack.c.l.b16 %v1711
      %v1877 = vunpack.c.h.b16 %v1711
      %v1878 = vunpack.c.l.b16 %v1712
      %v1879 = vunpack.c.h.b16 %v1712
      %v1880 = vunpack.c.l.b16 %v1713
      %v1881 = vunpack.c.h.b16 %v1713
      %v1882 = vunpack.c.l.b16 %v1714
      %v1883 = vunpack.c.h.b16 %v1714
      %v1884 = vunpack.c.l.b16 %v1715
      %v1885 = vunpack.c.h.b16 %v1715
      %v1886 = vunpack.c.l.b16 %v1716
      %v1887 = vunpack.c.h.b16 %v1716
      %v1888 = vunpack.c.l.b16 %v1717
      %v1889 = vunpack.c.h.b16 %v1717
      %v1890 = vunpack.c.l.b16 %v1718
      %v1891 = vunpack.c.h.b16 %v1718
      %v1892 = vunpack.c.l.b16 %v1719
      %v1893 = vunpack.c.h.b16 %v1719
      %v1894 = vunpack.c.l.b16 %v1720
      %v1895 = vunpack.c.h.b16 %v1720
      %v1896 = vunpack.c.l.b16 %v1721
      %v1897 = vunpack.c.h.b16 %v1721
      %v1898 = vunpack.c.l.b16 %v1722
      %v1899 = vunpack.c.h.b16 %v1722
      %v1900 = vunpack.c.l.b16 %v1723
      %v1901 = vunpack.c.h.b16 %v1723
      %v1902 = vunpack.c.l.b16 %v1724
      %v1903 = vunpack.c.h.b16 %v1724
      %v1904 = vunpack.c.l.b16 %v1725
      %v1905 = vunpack.c.h.b16 %v1725
      %v1906 = vunpack.c.l.b16 %v1726
      %v1907 = vunpack.c.h.b16 %v1726
      %v1908 = vunpack.c.l.b16 %v1727
      %v1909 = vunpack.c.h.b16 %v1727
      %v1910 = vunpack.c.l.b16 %v1728
      %v1911 = vunpack.c.h.b16 %v1728
      %v1912 = vunpack.c.l.b16 %v1729
      %v1913 = vunpack.c.h.b16 %v1729
      %v1914 = vunpack.c.l.b16 %v1730
      %v1915 = vunpack.c.h.b16 %v1730
      %v1916 = vunpack.c.l.b16 %v1731
      %v1917 = vunpack.c.h.b16 %v1731
      %v1918 = vunpack.c.l.b16 %v1732
      %v1919 = vunpack.c.h.b16 %v1732
      %v1920 = vunpack.c.l.b16 %v1733
      %v1921 = vunpack.c.h.b16 %v1733
      %v1922 = vunpack.c.l.b16 %v1734
      %v1923 = vunpack.c.h.b16 %v1734
      %v1924 = vunpack.c.l.b16 %v1735
      %v1925 = vunpack.c.h.b16 %v1735
      %v1926 = vunpack.c.l.b16 %v1736
      %v1927 = vunpack.c.h.b16 %v1736
      %v1928 = vunpack.c.l.b16 %v1737
      %v1929 = vunpack.c.h.b16 %v1737
      %v1930 = vunpack.c.l.b16 %v1738
      %v1931 = vunpack.c.h.b16 %v1738
      %v1932 = vunpack.c.l.b16 %v1739
      %v1933 = vunpack.c.h.b16 %v1739
      %v1934 = vunpack.c.l.b16 %v1740
      %v1935 = vunpack.c.h.b16 %v1740
      %v1936 = vunpack.c.l.b16 %v1741
      %v1937 = vunpack.c.h.b16 %v1741
      %v1938 = vunpack.c.l.b16 %v1742
      %v1939 = vunpack.c.h.b16 %v1742
      %v1940 = vunpack.c.l.b16 %v1743
      %v1941 = vunpack.c.h.b16 %v1743
      %v1942 = vunpack.c.l.b16 %v1744
      %v1943 = vunpack.c.h.b16 %v1744
      %v1944 = vunpack.c.l.b16 %v1745
      %v1945 = vunpack.c.h.b16 %v1745
      %v1946 = vunpack.c.l.b16 %v1746
      %v1947 = vunpack.c.h.b16 %v1746
      %v1948 = vunpack.c.l.b16 %v1747
      %v1949 = vunpack.c.h.b16 %v1747
      %v1950 = vunpack.c.l.b16 %v1748
      %v1951 = vunpack.c.h.b16 %v1748
      %v1952 = vunpack.c.l.b16 %v1749
      %v1953 = vunpack.c.h.b16 %v1749
      %v1954 = vunpack.c.l.b16 %v1750
      %v1955 = vunpack.c.h.b16 %v1750
      %v1956 = vunpack.c.l.b16 %v1751
      %v1957 = vunpack.c.h.b16 %v1751
      %v1958 = vunpack.c.l.b16 %v1752
      %v1959 = vunpack.c.h.b16 %v1752
      %v1960 = vunpack.c.l.b16 %v1753
      %v1961 = vunpack.c.h.b16 %v1753
      %v1962 = vunpack.c.l.b16 %v1754
      %v1963 = vunpack.c.h.b16 %v1754
      %v1964 = vunpack.c.l.b16 %v1755
      %v1965 = vunpack.c.h.b16 %v1755
      %v1966 = vpack.c.b16 %v1840, %v1838
      %v1967 = vpack.c.b16 %v1841, %v1839
      %v1968 = vpack.c.b16 %v1844, %v1842
      %v1969 = vpack.c.b16 %v1845, %v1843
      %v1970 = vpack.c.b16 %v1848, %v1846
      %v1971 = vpack.c.b16 %v1849, %v1847
      %v1972 = vpack.c.b16 %v1852, %v1850
      %v1973 = vpack.c.b16 %v1853, %v1851
      %v1974 = vpack.c.b16 %v1856, %v1854
      %v1975 = vpack.c.b16 %v1857, %v1855
      %v1976 = vpack.c.b16 %v1860, %v1858
      %v1977 = vpack.c.b16 %v1861, %v1859
      %v1978 = vpack.c.b16 %v1864, %v1862
      %v1979 = vpack.c.b16 %v1865, %v1863
      %v1980 = vpack.c.b16 %v1868, %v1866
      %v1981 = vpack.c.b16 %v1869, %v1867
      %v1982 = vpack.c.b16 %v1872, %v1870
      %v1983 = vpack.c.b16 %v1873, %v1871
      %v1984 = vpack.c.b16 %v1876, %v1874
      %v1985 = vpack.c.b16 %v1877, %v1875
      %v1986 = vpack.c.b16 %v1880, %v1878
      %v1987 = vpack.c.b16 %v1881, %v1879
      %v1988 = vpack.c.b16 %v1884, %v1882
      %v1989 = vpack.c.b16 %v1885, %v1883
      %v1990 = vpack.c.b16 %v1888, %v1886
      %v1991 = vpack.c.b16 %v1889, %v1887
      %v1992 = vpack.c.b16 %v1892, %v1890
      %v1993 = vpack.c.b16 %v1893, %v1891
      %v1994 = vpack.c.b16 %v1896, %v1894
      %v1995 = vpack.c.b16 %v1897, %v1895
      %v1996 = vpack.c.b16 %v1900, %v1898
      %v1997 = vpack.c.b16 %v1901, %v1899
      %v1998 = vpack.c.b16 %v1904, %v1902
      %v1999 = vpack.c.b16 %v1905, %v1903
      %v2000 = vpack.c.b16 %v1908, %v1906
      %v2001 = vpack.c.b16 %v1909, %v1907
      %v2002 = vpack.c.b16 %v1912, %v1910
      %v2003 = vpack.c.b16 %v1913, %v1911
      %v2004 = vpack.c.b16 %v1916, %v1914
      %v2005 = vpack.c.b16 %v1917, %v1915
      %v2006 = vpack.c.b16 %v1920, %v1918
      %v2007 = vpack.c.b16 %v1921, %v1919
      %v2008 = vpack.c.b16 %v1924, %v1922
      %v2009 = vpack.c.b16 %v1925, %v1923
      %v2010 = vpack.c.b16 %v1928, %v1926
      %v2011 = vpack.c.b16 %v1929, %v1927
      %v2012 = vpack.c.b16 %v1932, %v1930
      %v2013 = vpack.c.b16 %v1933, %v1931
      %v2014 = vpack.c.b16 %v1936, %v1934
      %v2015 = vpack.c.b16 %v1937, %v1935
      %v2016 = vpack.c.b16 %v1940, %v1938
      %v2017 = vpack.c.b16 %v1941, %v1939
      %v2018 = vpack.c.b16 %v1944, %v1942
      %v2019 = vpack.c.b16 %v1945, %v1943
      %v2020 = vpack.c.b16 %v1948, %v1946
      %v2021 = vpack.c.b16 %v1949, %v1947
      %v2022 = vpack.c.b16 %v1952, %v1950
      %v2023 = vpack.c.b16 %v1953, %v1951
      %v2024 = vpack.c.b16 %v1956, %v1954
      %v2025 = vpack.c.b16 %v1957, %v1955
      %v2026 = vpack.c.b16 %v1960, %v1958
      %v2027 = vpack.c.b16 %v1961, %v1959
      %v2028 = vpack.c.b16 %v1964, %v1962
      %v2029 = vpack.c.b16 %v1965, %v1963
      %2094 = vmatprep.subr.bf16.mxu0 %v1967
      %2095 = vmatpush1.bf16.msra.mxu0 %v1966
      %2096 = vmatprep.subr.bf16.mxu0 %v1969
      %2097 = vmatpush1.bf16.msra.mxu0 %v1968
      %2098 = vmatprep.subr.bf16.mxu0 %v1971
      %2099 = vmatpush1.bf16.msra.mxu0 %v1970
      %2100 = vmatprep.subr.bf16.mxu0 %v1973
      %2101 = vmatpush1.bf16.msra.mxu0 %v1972
      %2102 = vmatprep.subr.bf16.mxu0 %v1975
      %2103 = vmatpush1.bf16.msra.mxu0 %v1974
      %2104 = vmatprep.subr.bf16.mxu0 %v1977
      %2105 = vmatpush1.bf16.msra.mxu0 %v1976
      %2106 = vmatprep.subr.bf16.mxu0 %v1979
      %2107 = vmatpush1.bf16.msra.mxu0 %v1978
      %2108 = vmatprep.subr.bf16.mxu0 %v1981
      %2109 = vmatpush1.bf16.msra.mxu0 %v1980
      %2110 = vmatprep.subr.bf16.mxu0 %v1983
      %2111 = vmatpush1.bf16.msra.mxu0 %v1982
      %2112 = vmatprep.subr.bf16.mxu0 %v1985
      %2113 = vmatpush1.bf16.msra.mxu0 %v1984
      %2114 = vmatprep.subr.bf16.mxu0 %v1987
      %2115 = vmatpush1.bf16.msra.mxu0 %v1986
      %2116 = vmatprep.subr.bf16.mxu0 %v1989
      %2117 = vmatpush1.bf16.msra.mxu0 %v1988
      %2118 = vmatprep.subr.bf16.mxu0 %v1991
      %2119 = vmatpush1.bf16.msra.mxu0 %v1990
      %2120 = vmatprep.subr.bf16.mxu0 %v1993
      %2121 = vmatpush1.bf16.msra.mxu0 %v1992
      %2122 = vmatprep.subr.bf16.mxu0 %v1995
      %2123 = vmatpush1.bf16.msra.mxu0 %v1994
      %2124 = vmatprep.subr.bf16.mxu0 %v1997
      %2125 = vmatpush1.bf16.msra.mxu0 %v1996
      %2126 = vmatprep.mubr.bf16.mxu0 %v1767
      %2127 = vmatmul.mubr.bf16.gmra.mrb[0].mxu0 %v1766
      %v2128 = vpop.f32.mrb[0].mxu0
      %v2129 = vadd.f32 0.0, %v2128
      %v2130 = vpop.f32.mrb[0].mxu0
      %v2131 = vadd.f32 0.0, %v2130
      %v2132 = vpop.f32.mrb[0].mxu0
      %v2133 = vpop.f32.mrb[0].mxu0
      %2134 = vdwg.mxu0
      %2135 = vmatprep.subr.bf16.mxu0 %v1999
      %2136 = vmatpush1.bf16.msra.mxu0 %v1998
      %2137 = vmatprep.subr.bf16.mxu0 %v2001
      %2138 = vmatpush1.bf16.msra.mxu0 %v2000
      %2139 = vmatprep.subr.bf16.mxu0 %v2003
      %2140 = vmatpush1.bf16.msra.mxu0 %v2002
      %2141 = vmatprep.subr.bf16.mxu0 %v2005
      %2142 = vmatpush1.bf16.msra.mxu0 %v2004
      %2143 = vmatprep.subr.bf16.mxu0 %v2007
      %2144 = vmatpush1.bf16.msra.mxu0 %v2006
      %2145 = vmatprep.subr.bf16.mxu0 %v2009
      %2146 = vmatpush1.bf16.msra.mxu0 %v2008
      %2147 = vmatprep.subr.bf16.mxu0 %v2011
      %2148 = vmatpush1.bf16.msra.mxu0 %v2010
      %2149 = vmatprep.subr.bf16.mxu0 %v2013
      %2150 = vmatpush1.bf16.msra.mxu0 %v2012
      %2151 = vmatprep.subr.bf16.mxu0 %v2015
      %2152 = vmatpush1.bf16.msra.mxu0 %v2014
      %2153 = vmatprep.subr.bf16.mxu0 %v2017
      %2154 = vmatpush1.bf16.msra.mxu0 %v2016
      %2155 = vmatprep.subr.bf16.mxu0 %v2019
      %2156 = vmatpush1.bf16.msra.mxu0 %v2018
      %2157 = vmatprep.subr.bf16.mxu0 %v2021
      %2158 = vmatpush1.bf16.msra.mxu0 %v2020
      %2159 = vmatprep.subr.bf16.mxu0 %v2023
      %2160 = vmatpush1.bf16.msra.mxu0 %v2022
      %2161 = vmatprep.subr.bf16.mxu0 %v2025
      %2162 = vmatpush1.bf16.msra.mxu0 %v2024
      %2163 = vmatprep.subr.bf16.mxu0 %v2027
      %2164 = vmatpush1.bf16.msra.mxu0 %v2026
      %2165 = vmatprep.subr.bf16.mxu0 %v2029
      %2166 = vmatpush1.bf16.msra.mxu0 %v2028
      %2167 = vmatprep.mubr.bf16.mxu0 %v1769
      %2168 = vmatmul.mubr.bf16.gmra.mrb[0].mxu0 %v1768
      %v2169 = vpop.f32.mrb[0].mxu0
      %v2170 = vadd.f32 %v2129, %v2169
      %v2171 = vpop.f32.mrb[0].mxu0
      %v2172 = vadd.f32 %v2131, %v2171
      %v2173 = vpop.f32.mrb[0].mxu0
      %v2174 = vpop.f32.mrb[0].mxu0
      %2175 = vdwg.mxu0
      %v2176 = vadd.f32 %v1687, %v2170
      %v2177 = vadd.f32 %v1688, %v2172
      %v2178 = vld [vmem:[%s2] sm:$0x3]
      %v2180 = vlaneseq
      %v2181 = vshrl.u32 %v2180, 7
      %v2182 = vsub.s32 0, %v2181
      %v2183 = vrot.slane %v2178, %v2182
      %v2184 = vlaneseq
      %v2185 = vshrl.u32 %v2184, 7
      %v2186 = vsub.s32 1, %v2185
      %v2187 = vrot.slane %v2178, %v2186
      %v2190 = vadd.f32 %v2176, %v2183
      %v2191 = vadd.f32 %v2177, %v2187
      %v2192 = vpack.c.bf16 %v2190, %v2190
      %v2193 = vpack.c.bf16 %v2191, %v2191
      %v2196 = vunpack.c.l.b16 %v2192
      %v2197 = vunpack.c.l.b16 %v2193
      %v2198 = vpack.c.b16 %v2197, %v2196
      %2200 = vst [vmem:[%s170] sm:$0x77] %v2198
      %p2201 = scmp.lt.s32.totalorder %s14, 1
      %s2202 = scalar_select %p2201, %s14, 1
      %s2203 = smul.addr %s2202, 2
      %s2204 = smul.addr %s2203, 4
      %s2205 = scalar_lea.vmem %s3, %s2204
      // Predicated region
      $region33: #{vae_encoder_forward.8} parent=31 // pred_check
        %p2206 = pneg %p100
      $region34: #{vae_encoder_forward.8} parent=31 // pred_check_branch
        %2208 = sbr.rel (%p2206) target = $region36
      $region35: #{vae_encoder_forward.8} parent=31 // pred_region
        _
      $region36: #{vae_encoder_forward.8} parent=31 // pred_fallthru
        _
    $region32: #{vae_encoder_forward.8} parent=5 // pred_fallthru
      _
    %p2209 = scmp.le.s32.totalorder 2, %s9
    // Predicated region
    $region37: #{vae_encoder_forward.8} parent=5 // pred_check
      %p2210 = pneg %p2209
    $region38: #{vae_encoder_forward.8} parent=5 // pred_check_branch
      %2212 = sbr.rel (%p2210) target = $region40
    $region39: #{vae_encoder_forward.8} parent=5 // pred_region
      %s2213 = ssub.s32 %s9, 2
      // Predicated region
      $region41: #{vae_encoder_forward.8} parent=39 // pred_check
        %p2214 = pneg %p106
      $region42: #{vae_encoder_forward.8} parent=39 // pred_check_branch
        %2216 = sbr.rel (%p2214) target = $region44
      $region43: #{vae_encoder_forward.8} parent=39 // pred_region
        %p2217 = scmp.lt.s32.totalorder %s15, 1
        %s2218 = scalar_select %p2217, %s15, 1
        %s2219 = smul.addr %s2218, 2
        %s2220 = smul.addr %s2219, 4
        %s2221 = scalar_lea.vmem %s3, %s2220
      $region44: #{vae_encoder_forward.8} parent=39 // pred_fallthru
        _
    $region40: #{vae_encoder_forward.8} parent=5 // pred_fallthru
      _
  $region6: #{vae_encoder_forward.8} parent=0 // loop_footer
    %s13 = sadd.s32 1, %s9
  $region7: #{vae_encoder_forward.8} parent=0 // loop_footer_branch
    %8 = sbr.rel target = $region3
  $region8: #{vae_encoder_forward.8} parent=0 // loop_exit
    _

</llo_original>
